<compile_context>
chip_gen: v7x
topology: tpu7x:2x2x1
jax: 0.10.0
libtpu: 0.0.40
codegen_flags: <defaults>
</compile_context>

<pallas_src>
import functools
import math

import jax
import jax.numpy as jnp
from jax import lax
from jax.experimental import pallas as pl
from jax.experimental.pallas import tpu as pltpu


def _round_up(x, m):
    return (x + m - 1) // m * m


# ----------------------------- Pallas kernel --------------------------------

def _lstm_stack_kernel(x_ref, wih_ref, whh_ref, b_ref,
                       mean_ref, hn_ref, cn_ref,
                       act_ref, gates_ref,
                       *, unroll, gate_dtype):
    """Fused multi-layer LSTM + mean-over-time for one batch block.

    x_ref:     (T, BB, Pad)        bf16  time-major embedded input (zero-padded)
    wih_ref:   (L, Pad, 4*Pad)     bf16  input->gate weights (transposed, padded)
    whh_ref:   (L, Pad, 4*Pad)     bf16  hidden->gate weights (transposed, padded)
    b_ref:     (L, 1, 4*Pad)       f32   b_ih + b_hh, padded
    mean_ref:  (BB, Pad)           f32   mean over time of last layer's hiddens
    hn_ref:    (L, BB, Pad)        f32   final hidden states
    cn_ref:    (L, BB, Pad)        f32   final cell states
    act_ref:   (T|1, BB, Pad)      bf16  VMEM scratch: inter-layer activations
    gates_ref: (Tc, BB, 4*Pad)     f32   VMEM scratch: per-chunk input projection
    """
    T, BB, Pad = x_ref.shape
    L = wih_ref.shape[0]
    chunk = gates_ref.shape[0]
    inv_t = jnp.float32(1.0 / T)

    for l in range(L):                                    # static layer loop
        wih = wih_ref[l]                                  # (Pad, 4Pad) bf16
        whh = whh_ref[l]                                  # (Pad, 4Pad) bf16
        bias = b_ref[l]                                   # (1, 4Pad)   f32
        is_last = (l == L - 1)

        h = jnp.zeros((BB, Pad), jnp.float32)
        c = jnp.zeros((BB, Pad), jnp.float32)
        s = jnp.zeros((BB, Pad), jnp.float32)             # running sum (last layer)

        for t0 in range(0, T, chunk):                     # static chunk loop
            tc = min(chunk, T - t0)

            # ---- Hoisted input projection for this time chunk (one MXU matmul).
            src = (x_ref if l == 0 else act_ref)[pl.ds(t0, tc)]   # (tc, BB, Pad) bf16
            gi = jnp.dot(src.reshape(tc * BB, Pad), wih,
                         preferred_element_type=jnp.float32) + bias
            gates_ref[pl.ds(0, tc)] = gi.reshape(tc, BB, 4 * Pad)

            # ---- Recurrence: only h @ W_hh + gate math on the serial path.
            def step(ti, carry, _t0=t0, _is_last=is_last):
                h, c, s = carry
                g = gates_ref[ti] + jnp.dot(h.astype(jnp.bfloat16), whh,
                                            preferred_element_type=jnp.float32)
                ga = g.astype(gate_dtype)                 # bf16 EUP on v6e/v7x
                # PyTorch gate order i, f, g, o; each gate is a full 128-lane slab.
                i_g = jax.nn.sigmoid(ga[:, 0 * Pad:1 * Pad]).astype(jnp.float32)
                f_g = jax.nn.sigmoid(ga[:, 1 * Pad:2 * Pad]).astype(jnp.float32)
                g_g = jnp.tanh(ga[:, 2 * Pad:3 * Pad]).astype(jnp.float32)
                o_g = jax.nn.sigmoid(ga[:, 3 * Pad:4 * Pad]).astype(jnp.float32)
                c_new = f_g * c + i_g * g_g
                h_new = o_g * jnp.tanh(c_new)
                if _is_last:
                    s = s + h_new                         # fold mean into the loop
                else:
                    act_ref[_t0 + ti] = h_new.astype(jnp.bfloat16)
                return h_new, c_new, s

            h, c, s = lax.fori_loop(0, tc, step, (h, c, s),
                                    unroll=max(1, min(unroll, tc)))

        hn_ref[l] = h
        cn_ref[l] = c
        if is_last:
            mean_ref[...] = s * inv_t


# ------------------------------ JAX wrapper ----------------------------------

def init_params(key, input_size, hidden_size, num_layers, vocab_size):
    """PyTorch-like init, stored pre-padded / pre-transposed / bf16 for the kernel."""
    pad = max(_round_up(input_size, 128), _round_up(hidden_size, 128))
    keys = jax.random.split(key, 1 + 4 * num_layers)

    params = {}
    # nn.Embedding: N(0, 1)
    params["embedding"] = jax.random.normal(
        keys[0], (vocab_size, input_size), jnp.float32)
    # NOTE: the module's nn.Linear `fc` is defined in __init__ but unused in forward.

    k = 1.0 / math.sqrt(hidden_size)
    H = hidden_size
    wih_l, whh_l, b_l = [], [], []
    for l in range(num_layers):
        din = input_size if l == 0 else hidden_size
        kw = keys[1 + 4 * l: 1 + 4 * (l + 1)]
        w_ih = jax.random.uniform(kw[0], (4 * H, din), jnp.float32, -k, k)
        w_hh = jax.random.uniform(kw[1], (4 * H, H), jnp.float32, -k, k)
        b_ih = jax.random.uniform(kw[2], (4 * H,), jnp.float32, -k, k)
        b_hh = jax.random.uniform(kw[3], (4 * H,), jnp.float32, -k, k)
        bias = b_ih + b_hh

        # Lane-dense layout: gate g occupies lanes [g*pad, g*pad+H).
        # TODO(synk): for H << 128 a packed 4-gates-in-128-lanes layout would cut
        # per-step MXU/EUP work ~4x; kept the 128-lanes-per-gate layout for simplicity.
        wih_p = jnp.zeros((pad, 4 * pad), jnp.float32)
        whh_p = jnp.zeros((pad, 4 * pad), jnp.float32)
        b_p = jnp.zeros((1, 4 * pad), jnp.float32)
        for g in range(4):
            wih_p = wih_p.at[:din, g * pad:g * pad + H].set(
                jnp.transpose(w_ih[g * H:(g + 1) * H, :]))
            whh_p = whh_p.at[:H, g * pad:g * pad + H].set(
                jnp.transpose(w_hh[g * H:(g + 1) * H, :]))
            b_p = b_p.at[0, g * pad:g * pad + H].set(bias[g * H:(g + 1) * H])
        wih_l.append(wih_p)
        whh_l.append(whh_p)
        b_l.append(b_p)

    params["wih"] = jnp.stack(wih_l, axis=0).astype(jnp.bfloat16)  # (L, Pad, 4Pad)
    params["whh"] = jnp.stack(whh_l, axis=0).astype(jnp.bfloat16)  # (L, Pad, 4Pad)
    params["b"] = jnp.stack(b_l, axis=0)                           # (L, 1, 4Pad) f32
    return params


@functools.partial(jax.jit, static_argnames=("hidden_size", "use_bf16_gates"))
def lstm_model_forward(tokens, params, hidden_size, use_bf16_gates=False):
    """Forward of LSTMModel. tokens: (B, S) int32.

    Returns (mean_out (B, H), (hn (L, B, H), cn (L, B, H))) like the PyTorch module.
    """
    B, S = tokens.shape
    D = params["embedding"].shape[1]
    L, Pad, four_pad = params["wih"].shape
    H = hidden_size

    # Batch padding / blocking: 2 batch blocks when batch is big enough so both
    # v7x TensorCores get work; single block otherwise.
    if B <= 8:
        Bpad, nb = 8, 1
    else:
        Bpad, nb = _round_up(B, 16), 2
    BB = Bpad // nb

    chunk = min(S, 128)                 # time chunk for the hoisted projection
    unroll = 8 if S <= 64 else 4        # partial unroll of the recurrence
    act_len = S if L > 1 else 1         # act scratch unused for single-layer LSTM

    # Embedding lookup (gather stays in JAX glue).
    x = jnp.take(params["embedding"], tokens, axis=0)              # (B, S, D)
    # TODO(synk): dropout(p=0.1) treated as identity (eval-mode semantics).
    # TODO(synk): only the default hidden=None (zero-init state) path is implemented.
    x_tm = jnp.transpose(x, (1, 0, 2))                             # (S, B, D)
    x_pad = jnp.zeros((S, Bpad, Pad), jnp.bfloat16)
    x_pad = x_pad.at[:, :B, :D].set(x_tm.astype(jnp.bfloat16))

    # VMEM budget: double-buffered blocked operands + scratch, ~25% headroom.
    bx = S * BB * Pad * 2
    bw = L * Pad * four_pad * 2
    bb = L * four_pad * 4
    bmean = BB * Pad * 4
    bhn = L * BB * Pad * 4
    bact = act_len * BB * Pad * 2
    bgates = chunk * BB * four_pad * 4
    vmem_need = 2 * (bx + 2 * bw + bb + bmean + 2 * bhn) + bact + bgates
    vmem_limit = min(int(vmem_need * 1.25) + (2 << 20), 64 << 20)

    kernel = functools.partial(
        _lstm_stack_kernel,
        unroll=unroll,
        gate_dtype=jnp.bfloat16 if use_bf16_gates else jnp.float32)

    out_shapes = (
        jax.ShapeDtypeStruct((Bpad, Pad), jnp.float32),            # mean over time
        jax.ShapeDtypeStruct((L, Bpad, Pad), jnp.float32),         # hn
        jax.ShapeDtypeStruct((L, Bpad, Pad), jnp.float32),         # cn
    )
    in_specs = [
        pl.BlockSpec((S, BB, Pad), lambda b: (0, b, 0)),           # x (batch-blocked)
        pl.BlockSpec((L, Pad, four_pad), lambda b: (0, 0, 0)),     # wih (resident)
        pl.BlockSpec((L, Pad, four_pad), lambda b: (0, 0, 0)),     # whh (resident)
        pl.BlockSpec((L, 1, four_pad), lambda b: (0, 0, 0)),       # bias (resident)
    ]
    out_specs = (
        pl.BlockSpec((BB, Pad), lambda b: (b, 0)),
        pl.BlockSpec((L, BB, Pad), lambda b: (0, b, 0)),
        pl.BlockSpec((L, BB, Pad), lambda b: (0, b, 0)),
    )
    scratch = [
        pltpu.VMEM((act_len, BB, Pad), jnp.bfloat16),              # inter-layer acts
        pltpu.VMEM((chunk, BB, four_pad), jnp.float32),            # chunked gates
    ]

    mean_pad, hn_pad, cn_pad = pl.pallas_call(
        kernel,
        out_shape=out_shapes,
        grid=(nb,),
        in_specs=in_specs,
        out_specs=out_specs,
        scratch_shapes=scratch,
        compiler_params=pltpu.CompilerParams(
            dimension_semantics=("parallel",),
            vmem_limit_bytes=vmem_limit),
    )(x_pad, params["wih"], params["whh"], params["b"])

    mean_out = mean_pad[:B, :H]
    hn = hn_pad[:, :B, :H]
    cn = cn_pad[:, :B, :H]
    return mean_out, (hn, cn)


# --------------------------- pure-JAX reference -------------------------------

def _reference_forward(tokens, params, hidden_size):
    """Straightforward JAX LSTM using the same (padded, bf16) weights."""
    B, S = tokens.shape
    D = params["embedding"].shape[1]
    L, Pad, _ = params["wih"].shape
    H = hidden_size
    x = jnp.take(params["embedding"], tokens, axis=0).astype(jnp.float32)
    seq = jnp.zeros((B, S, Pad), jnp.float32).at[:, :, :D].set(x)
    wih = params["wih"].astype(jnp.float32)
    whh = params["whh"].astype(jnp.float32)
    bias = params["b"].astype(jnp.float32)
    hs, cs = [], []
    for l in range(L):
        h = jnp.zeros((B, Pad), jnp.float32)
        c = jnp.zeros((B, Pad), jnp.float32)
        outs = []
        for t in range(S):
            g = seq[:, t, :] @ wih[l] + h @ whh[l] + bias[l]
            i = jax.nn.sigmoid(g[:, 0 * Pad:1 * Pad])
            f = jax.nn.sigmoid(g[:, 1 * Pad:2 * Pad])
            gg = jnp.tanh(g[:, 2 * Pad:3 * Pad])
            o = jax.nn.sigmoid(g[:, 3 * Pad:4 * Pad])
            c = f * c + i * gg
            h = o * jnp.tanh(c)
            outs.append(h)
        seq = jnp.stack(outs, axis=1)
        hs.append(h)
        cs.append(c)
    mean = jnp.mean(seq, axis=1)[:, :H]
    hn = jnp.stack(hs)[:, :, :H]
    cn = jnp.stack(cs)[:, :, :H]
    return mean, (hn, cn)


# --------------------------------- driver ------------------------------------

if __name__ == "__main__":
    input_size = 16
    hidden_size = 32
    num_layers = 2
    vocab_size = 50
    batch = 2
    seq = 8

    key = jax.random.PRNGKey(0)
    k_tok, k_par = jax.random.split(key)
    tokens = jax.random.randint(k_tok, (batch, seq), 0, vocab_size, dtype=jnp.int32)
    params = init_params(k_par, input_size, hidden_size, num_layers, vocab_size)

    try:
        kind = jax.devices()[0].device_kind.lower()
    except Exception:
        kind = ""
    use_bf16_gates = ("v6" in kind) or ("v7" in kind)   # bf16 EUP only on v6e/v7x

    mean_out, (hn, cn) = lstm_model_forward(tokens, params, hidden_size,
                                            use_bf16_gates=use_bf16_gates)
    jax.block_until_ready((mean_out, hn, cn))

    assert mean_out.shape == (batch, hidden_size)
    assert hn.shape == (num_layers, batch, hidden_size)
    assert cn.shape == (num_layers, batch, hidden_size)
    assert bool(jnp.all(jnp.isfinite(mean_out)))
    assert bool(jnp.all(jnp.isfinite(hn)))
    assert bool(jnp.all(jnp.isfinite(cn)))

    # Loose numerical sanity check against a pure-JAX reference (bf16 MXU / EUP
    # rounding only source of deviation).
    r_mean, (r_hn, r_cn) = _reference_forward(tokens, params, hidden_size)
    assert float(jnp.max(jnp.abs(mean_out - r_mean))) < 5e-2
    assert float(jnp.max(jnp.abs(hn - r_hn))) < 5e-2
    assert float(jnp.max(jnp.abs(cn - r_cn))) < 5e-2

    print("KERNEL_OK")
</pallas_src>

<mosaic_0001>
module attributes {stable_mosaic.version = 11 : i64} {
  func.func @_lstm_stack_kernel(%arg0: i32, %arg1: memref<8x8x128xbf16, #tpu.memory_space<vmem>>, %arg2: memref<2x128x512xbf16, #tpu.memory_space<vmem>>, %arg3: memref<2x128x512xbf16, #tpu.memory_space<vmem>>, %arg4: memref<2x1x512xf32, #tpu.memory_space<vmem>>, %arg5: memref<8x128xf32, #tpu.memory_space<vmem>>, %arg6: memref<2x8x128xf32, #tpu.memory_space<vmem>>, %arg7: memref<2x8x128xf32, #tpu.memory_space<vmem>>, %arg8: memref<8x8x128xbf16, #tpu.memory_space<vmem>>, %arg9: memref<8x8x512xf32, #tpu.memory_space<vmem>>) attributes {dimension_semantics = [#tpu.dimension_semantics<parallel>], iteration_bounds = array<i64: 1>, scalar_prefetch = 0 : i64, scratch_operands = 2 : i64, tpu.core_type = #tpu.core_type<tc>, window_params = [{transform_indices = @transform_0, window_bounds = array<i64: 8, 8, 128>}, {pipeline_mode = #tpu.pipeline_mode<synchronous>, transform_indices = @transform_1, window_bounds = array<i64: 2, 128, 512>}, {pipeline_mode = #tpu.pipeline_mode<synchronous>, transform_indices = @transform_2, window_bounds = array<i64: 2, 128, 512>}, {pipeline_mode = #tpu.pipeline_mode<synchronous>, transform_indices = @transform_3, window_bounds = array<i64: 2, 1, 512>}, {transform_indices = @transform_4, window_bounds = array<i64: 8, 128>}, {transform_indices = @transform_5, window_bounds = array<i64: 2, 8, 128>}, {transform_indices = @transform_6, window_bounds = array<i64: 2, 8, 128>}]} {
    %c0 = arith.constant 0 : index
    %c0_0 = arith.constant 0 : index
    %c0_1 = arith.constant 0 : index
    %0 = vector.load %arg2[%c0, %c0_0, %c0_1] : memref<2x128x512xbf16, #tpu.memory_space<vmem>>, vector<1x128x512xbf16>
    %1 = vector.shape_cast %0 : vector<1x128x512xbf16> to vector<128x512xbf16>
    %c0_2 = arith.constant 0 : index
    %c0_3 = arith.constant 0 : index
    %c0_4 = arith.constant 0 : index
    %2 = vector.load %arg3[%c0_2, %c0_3, %c0_4] : memref<2x128x512xbf16, #tpu.memory_space<vmem>>, vector<1x128x512xbf16>
    %3 = vector.shape_cast %2 : vector<1x128x512xbf16> to vector<128x512xbf16>
    %c0_5 = arith.constant 0 : index
    %c0_6 = arith.constant 0 : index
    %c0_7 = arith.constant 0 : index
    %4 = vector.load %arg4[%c0_5, %c0_6, %c0_7] : memref<2x1x512xf32, #tpu.memory_space<vmem>>, vector<1x1x512xf32>
    %5 = vector.shape_cast %4 : vector<1x1x512xf32> to vector<1x512xf32>
    %cst = arith.constant 0.000000e+00 : f32
    %6 = vector.broadcast %cst : f32 to vector<8x128xf32>
    %cst_8 = arith.constant 0.000000e+00 : f32
    %7 = vector.broadcast %cst_8 : f32 to vector<8x128xf32>
    %c0_9 = arith.constant 0 : index
    %c0_10 = arith.constant 0 : index
    %c0_11 = arith.constant 0 : index
    %8 = vector.load %arg1[%c0_9, %c0_10, %c0_11] : memref<8x8x128xbf16, #tpu.memory_space<vmem>>, vector<8x8x128xbf16>
    %9 = vector.shape_cast %8 : vector<8x8x128xbf16> to vector<64x128xbf16>
    %cst_12 = arith.constant dense<0.000000e+00> : vector<64x512xf32>
    %10 = tpu.matmul %9, %1, %cst_12 {dimension_numbers = #tpu.dot_dimension_numbers<[1], [0], [0], [1], [0, 0, 1, 1], [], []>} : vector<64x128xbf16>, vector<128x512xbf16>, vector<64x512xf32> -> vector<64x512xf32>
    %11 = vector.broadcast %5 : vector<1x512xf32> to vector<64x512xf32>
    %12 = arith.addf %10, %11 : vector<64x512xf32>
    %13 = vector.shape_cast %12 : vector<64x512xf32> to vector<8x8x512xf32>
    %c0_13 = arith.constant 0 : index
    %c0_14 = arith.constant 0 : index
    %c0_15 = arith.constant 0 : index
    %14 = vector.load %arg9[%c0_13, %c0_14, %c0_15] : memref<8x8x512xf32, #tpu.memory_space<vmem>>, vector<8x8x512xf32>
    tpu.vector_store %arg9[%c0_13, %c0_14, %c0_15], %13 {strides = array<i32>} : memref<8x8x512xf32, #tpu.memory_space<vmem>>, vector<8x8x512xf32>,
    %c0_i32 = arith.constant 0 : i32
    %15 = arith.index_cast %c0_i32 : i32 to index
    %c0_16 = arith.constant 0 : index
    %c0_17 = arith.constant 0 : index
    %16 = vector.load %arg9[%15, %c0_16, %c0_17] : memref<8x8x512xf32, #tpu.memory_space<vmem>>, vector<1x8x512xf32>
    %17 = vector.shape_cast %16 : vector<1x8x512xf32> to vector<8x512xf32>
    %18 = arith.truncf %6 : vector<8x128xf32> to vector<8x128xbf16>
    %cst_18 = arith.constant dense<0.000000e+00> : vector<8x512xf32>
    %19 = tpu.matmul %18, %3, %cst_18 {dimension_numbers = #tpu.dot_dimension_numbers<[1], [0], [0], [1], [0, 0, 1, 1], [], []>} : vector<8x128xbf16>, vector<128x512xbf16>, vector<8x512xf32> -> vector<8x512xf32>
    %20 = arith.addf %17, %19 : vector<8x512xf32>
    %21 = vector.extract_strided_slice %20 {offsets = [0, 0], sizes = [8, 128], strides = [1, 1]} : vector<8x512xf32> to vector<8x128xf32>
    %22 = arith.negf %21 : vector<8x128xf32>
    %23 = math.exp %22 : vector<8x128xf32>
    %cst_19 = arith.constant 1.000000e+00 : f32
    %24 = vector.broadcast %cst_19 : f32 to vector<8x128xf32>
    %25 = arith.addf %24, %23 : vector<8x128xf32>
    %26 = arith.divf %24, %25 : vector<8x128xf32>
    %27 = vector.extract_strided_slice %20 {offsets = [0, 128], sizes = [8, 128], strides = [1, 1]} : vector<8x512xf32> to vector<8x128xf32>
    %28 = arith.negf %27 : vector<8x128xf32>
    %29 = math.exp %28 : vector<8x128xf32>
    %cst_20 = arith.constant 1.000000e+00 : f32
    %30 = vector.broadcast %cst_20 : f32 to vector<8x128xf32>
    %31 = arith.addf %30, %29 : vector<8x128xf32>
    %32 = arith.divf %30, %31 : vector<8x128xf32>
    %33 = vector.extract_strided_slice %20 {offsets = [0, 256], sizes = [8, 128], strides = [1, 1]} : vector<8x512xf32> to vector<8x128xf32>
    %34 = math.tanh %33 : vector<8x128xf32>
    %35 = vector.extract_strided_slice %20 {offsets = [0, 384], sizes = [8, 128], strides = [1, 1]} : vector<8x512xf32> to vector<8x128xf32>
    %36 = arith.negf %35 : vector<8x128xf32>
    %37 = math.exp %36 : vector<8x128xf32>
    %cst_21 = arith.constant 1.000000e+00 : f32
    %38 = vector.broadcast %cst_21 : f32 to vector<8x128xf32>
    %39 = arith.addf %38, %37 : vector<8x128xf32>
    %40 = arith.divf %38, %39 : vector<8x128xf32>
    %41 = arith.mulf %32, %7 : vector<8x128xf32>
    %42 = arith.mulf %26, %34 : vector<8x128xf32>
    %43 = arith.addf %41, %42 : vector<8x128xf32>
    %44 = math.tanh %43 : vector<8x128xf32>
    %45 = arith.mulf %40, %44 : vector<8x128xf32>
    %46 = arith.truncf %45 : vector<8x128xf32> to vector<8x128xbf16>
    %c0_i32_22 = arith.constant 0 : i32
    %47 = arith.addi %c0_i32_22, %c0_i32 : i32
    %48 = arith.index_cast %47 : i32 to index
    %c0_23 = arith.constant 0 : index
    %c0_24 = arith.constant 0 : index
    %49 = vector.load %arg8[%48, %c0_23, %c0_24] : memref<8x8x128xbf16, #tpu.memory_space<vmem>>, vector<1x8x128xbf16>
    %50 = vector.shape_cast %49 : vector<1x8x128xbf16> to vector<8x128xbf16>
    %51 = vector.shape_cast %46 : vector<8x128xbf16> to vector<1x8x128xbf16>
    tpu.vector_store %arg8[%48, %c0_23, %c0_24], %51 {strides = array<i32>} : memref<8x8x128xbf16, #tpu.memory_space<vmem>>, vector<1x8x128xbf16>,
    %c1_i32 = arith.constant 1 : i32
    %52 = arith.index_cast %c1_i32 : i32 to index
    %c0_25 = arith.constant 0 : index
    %c0_26 = arith.constant 0 : index
    %53 = vector.load %arg9[%52, %c0_25, %c0_26] : memref<8x8x512xf32, #tpu.memory_space<vmem>>, vector<1x8x512xf32>
    %54 = vector.shape_cast %53 : vector<1x8x512xf32> to vector<8x512xf32>
    %55 = arith.truncf %45 : vector<8x128xf32> to vector<8x128xbf16>
    %cst_27 = arith.constant dense<0.000000e+00> : vector<8x512xf32>
    %56 = tpu.matmul %55, %3, %cst_27 {dimension_numbers = #tpu.dot_dimension_numbers<[1], [0], [0], [1], [0, 0, 1, 1], [], []>} : vector<8x128xbf16>, vector<128x512xbf16>, vector<8x512xf32> -> vector<8x512xf32>
    %57 = arith.addf %54, %56 : vector<8x512xf32>
    %58 = vector.extract_strided_slice %57 {offsets = [0, 0], sizes = [8, 128], strides = [1, 1]} : vector<8x512xf32> to vector<8x128xf32>
    %59 = arith.negf %58 : vector<8x128xf32>
    %60 = math.exp %59 : vector<8x128xf32>
    %cst_28 = arith.constant 1.000000e+00 : f32
    %61 = vector.broadcast %cst_28 : f32 to vector<8x128xf32>
    %62 = arith.addf %61, %60 : vector<8x128xf32>
    %63 = arith.divf %61, %62 : vector<8x128xf32>
    %64 = vector.extract_strided_slice %57 {offsets = [0, 128], sizes = [8, 128], strides = [1, 1]} : vector<8x512xf32> to vector<8x128xf32>
    %65 = arith.negf %64 : vector<8x128xf32>
    %66 = math.exp %65 : vector<8x128xf32>
    %cst_29 = arith.constant 1.000000e+00 : f32
    %67 = vector.broadcast %cst_29 : f32 to vector<8x128xf32>
    %68 = arith.addf %67, %66 : vector<8x128xf32>
    %69 = arith.divf %67, %68 : vector<8x128xf32>
    %70 = vector.extract_strided_slice %57 {offsets = [0, 256], sizes = [8, 128], strides = [1, 1]} : vector<8x512xf32> to vector<8x128xf32>
    %71 = math.tanh %70 : vector<8x128xf32>
    %72 = vector.extract_strided_slice %57 {offsets = [0, 384], sizes = [8, 128], strides = [1, 1]} : vector<8x512xf32> to vector<8x128xf32>
    %73 = arith.negf %72 : vector<8x128xf32>
    %74 = math.exp %73 : vector<8x128xf32>
    %cst_30 = arith.constant 1.000000e+00 : f32
    %75 = vector.broadcast %cst_30 : f32 to vector<8x128xf32>
    %76 = arith.addf %75, %74 : vector<8x128xf32>
    %77 = arith.divf %75, %76 : vector<8x128xf32>
    %78 = arith.mulf %69, %43 : vector<8x128xf32>
    %79 = arith.mulf %63, %71 : vector<8x128xf32>
    %80 = arith.addf %78, %79 : vector<8x128xf32>
    %81 = math.tanh %80 : vector<8x128xf32>
    %82 = arith.mulf %77, %81 : vector<8x128xf32>
    %83 = arith.truncf %82 : vector<8x128xf32> to vector<8x128xbf16>
    %c0_i32_31 = arith.constant 0 : i32
    %84 = arith.addi %c0_i32_31, %c1_i32 : i32
    %85 = arith.index_cast %84 : i32 to index
    %c0_32 = arith.constant 0 : index
    %c0_33 = arith.constant 0 : index
    %86 = vector.load %arg8[%85, %c0_32, %c0_33] : memref<8x8x128xbf16, #tpu.memory_space<vmem>>, vector<1x8x128xbf16>
    %87 = vector.shape_cast %86 : vector<1x8x128xbf16> to vector<8x128xbf16>
    %88 = vector.shape_cast %83 : vector<8x128xbf16> to vector<1x8x128xbf16>
    tpu.vector_store %arg8[%85, %c0_32, %c0_33], %88 {strides = array<i32>} : memref<8x8x128xbf16, #tpu.memory_space<vmem>>, vector<1x8x128xbf16>,
    %c2_i32 = arith.constant 2 : i32
    %89 = arith.index_cast %c2_i32 : i32 to index
    %c0_34 = arith.constant 0 : index
    %c0_35 = arith.constant 0 : index
    %90 = vector.load %arg9[%89, %c0_34, %c0_35] : memref<8x8x512xf32, #tpu.memory_space<vmem>>, vector<1x8x512xf32>
    %91 = vector.shape_cast %90 : vector<1x8x512xf32> to vector<8x512xf32>
    %92 = arith.truncf %82 : vector<8x128xf32> to vector<8x128xbf16>
    %cst_36 = arith.constant dense<0.000000e+00> : vector<8x512xf32>
    %93 = tpu.matmul %92, %3, %cst_36 {dimension_numbers = #tpu.dot_dimension_numbers<[1], [0], [0], [1], [0, 0, 1, 1], [], []>} : vector<8x128xbf16>, vector<128x512xbf16>, vector<8x512xf32> -> vector<8x512xf32>
    %94 = arith.addf %91, %93 : vector<8x512xf32>
    %95 = vector.extract_strided_slice %94 {offsets = [0, 0], sizes = [8, 128], strides = [1, 1]} : vector<8x512xf32> to vector<8x128xf32>
    %96 = arith.negf %95 : vector<8x128xf32>
    %97 = math.exp %96 : vector<8x128xf32>
    %cst_37 = arith.constant 1.000000e+00 : f32
    %98 = vector.broadcast %cst_37 : f32 to vector<8x128xf32>
    %99 = arith.addf %98, %97 : vector<8x128xf32>
    %100 = arith.divf %98, %99 : vector<8x128xf32>
    %101 = vector.extract_strided_slice %94 {offsets = [0, 128], sizes = [8, 128], strides = [1, 1]} : vector<8x512xf32> to vector<8x128xf32>
    %102 = arith.negf %101 : vector<8x128xf32>
    %103 = math.exp %102 : vector<8x128xf32>
    %cst_38 = arith.constant 1.000000e+00 : f32
    %104 = vector.broadcast %cst_38 : f32 to vector<8x128xf32>
    %105 = arith.addf %104, %103 : vector<8x128xf32>
    %106 = arith.divf %104, %105 : vector<8x128xf32>
    %107 = vector.extract_strided_slice %94 {offsets = [0, 256], sizes = [8, 128], strides = [1, 1]} : vector<8x512xf32> to vector<8x128xf32>
    %108 = math.tanh %107 : vector<8x128xf32>
    %109 = vector.extract_strided_slice %94 {offsets = [0, 384], sizes = [8, 128], strides = [1, 1]} : vector<8x512xf32> to vector<8x128xf32>
    %110 = arith.negf %109 : vector<8x128xf32>
    %111 = math.exp %110 : vector<8x128xf32>
    %cst_39 = arith.constant 1.000000e+00 : f32
    %112 = vector.broadcast %cst_39 : f32 to vector<8x128xf32>
    %113 = arith.addf %112, %111 : vector<8x128xf32>
    %114 = arith.divf %112, %113 : vector<8x128xf32>
    %115 = arith.mulf %106, %80 : vector<8x128xf32>
    %116 = arith.mulf %100, %108 : vector<8x128xf32>
    %117 = arith.addf %115, %116 : vector<8x128xf32>
    %118 = math.tanh %117 : vector<8x128xf32>
    %119 = arith.mulf %114, %118 : vector<8x128xf32>
    %120 = arith.truncf %119 : vector<8x128xf32> to vector<8x128xbf16>
    %c0_i32_40 = arith.constant 0 : i32
    %121 = arith.addi %c0_i32_40, %c2_i32 : i32
    %122 = arith.index_cast %121 : i32 to index
    %c0_41 = arith.constant 0 : index
    %c0_42 = arith.constant 0 : index
    %123 = vector.load %arg8[%122, %c0_41, %c0_42] : memref<8x8x128xbf16, #tpu.memory_space<vmem>>, vector<1x8x128xbf16>
    %124 = vector.shape_cast %123 : vector<1x8x128xbf16> to vector<8x128xbf16>
    %125 = vector.shape_cast %120 : vector<8x128xbf16> to vector<1x8x128xbf16>
    tpu.vector_store %arg8[%122, %c0_41, %c0_42], %125 {strides = array<i32>} : memref<8x8x128xbf16, #tpu.memory_space<vmem>>, vector<1x8x128xbf16>,
    %c3_i32 = arith.constant 3 : i32
    %126 = arith.index_cast %c3_i32 : i32 to index
    %c0_43 = arith.constant 0 : index
    %c0_44 = arith.constant 0 : index
    %127 = vector.load %arg9[%126, %c0_43, %c0_44] : memref<8x8x512xf32, #tpu.memory_space<vmem>>, vector<1x8x512xf32>
    %128 = vector.shape_cast %127 : vector<1x8x512xf32> to vector<8x512xf32>
    %129 = arith.truncf %119 : vector<8x128xf32> to vector<8x128xbf16>
    %cst_45 = arith.constant dense<0.000000e+00> : vector<8x512xf32>
    %130 = tpu.matmul %129, %3, %cst_45 {dimension_numbers = #tpu.dot_dimension_numbers<[1], [0], [0], [1], [0, 0, 1, 1], [], []>} : vector<8x128xbf16>, vector<128x512xbf16>, vector<8x512xf32> -> vector<8x512xf32>
    %131 = arith.addf %128, %130 : vector<8x512xf32>
    %132 = vector.extract_strided_slice %131 {offsets = [0, 0], sizes = [8, 128], strides = [1, 1]} : vector<8x512xf32> to vector<8x128xf32>
    %133 = arith.negf %132 : vector<8x128xf32>
    %134 = math.exp %133 : vector<8x128xf32>
    %cst_46 = arith.constant 1.000000e+00 : f32
    %135 = vector.broadcast %cst_46 : f32 to vector<8x128xf32>
    %136 = arith.addf %135, %134 : vector<8x128xf32>
    %137 = arith.divf %135, %136 : vector<8x128xf32>
    %138 = vector.extract_strided_slice %131 {offsets = [0, 128], sizes = [8, 128], strides = [1, 1]} : vector<8x512xf32> to vector<8x128xf32>
    %139 = arith.negf %138 : vector<8x128xf32>
    %140 = math.exp %139 : vector<8x128xf32>
    %cst_47 = arith.constant 1.000000e+00 : f32
    %141 = vector.broadcast %cst_47 : f32 to vector<8x128xf32>
    %142 = arith.addf %141, %140 : vector<8x128xf32>
    %143 = arith.divf %141, %142 : vector<8x128xf32>
    %144 = vector.extract_strided_slice %131 {offsets = [0, 256], sizes = [8, 128], strides = [1, 1]} : vector<8x512xf32> to vector<8x128xf32>
    %145 = math.tanh %144 : vector<8x128xf32>
    %146 = vector.extract_strided_slice %131 {offsets = [0, 384], sizes = [8, 128], strides = [1, 1]} : vector<8x512xf32> to vector<8x128xf32>
    %147 = arith.negf %146 : vector<8x128xf32>
    %148 = math.exp %147 : vector<8x128xf32>
    %cst_48 = arith.constant 1.000000e+00 : f32
    %149 = vector.broadcast %cst_48 : f32 to vector<8x128xf32>
    %150 = arith.addf %149, %148 : vector<8x128xf32>
    %151 = arith.divf %149, %150 : vector<8x128xf32>
    %152 = arith.mulf %143, %117 : vector<8x128xf32>
    %153 = arith.mulf %137, %145 : vector<8x128xf32>
    %154 = arith.addf %152, %153 : vector<8x128xf32>
    %155 = math.tanh %154 : vector<8x128xf32>
    %156 = arith.mulf %151, %155 : vector<8x128xf32>
    %157 = arith.truncf %156 : vector<8x128xf32> to vector<8x128xbf16>
    %c0_i32_49 = arith.constant 0 : i32
    %158 = arith.addi %c0_i32_49, %c3_i32 : i32
    %159 = arith.index_cast %158 : i32 to index
    %c0_50 = arith.constant 0 : index
    %c0_51 = arith.constant 0 : index
    %160 = vector.load %arg8[%159, %c0_50, %c0_51] : memref<8x8x128xbf16, #tpu.memory_space<vmem>>, vector<1x8x128xbf16>
    %161 = vector.shape_cast %160 : vector<1x8x128xbf16> to vector<8x128xbf16>
    %162 = vector.shape_cast %157 : vector<8x128xbf16> to vector<1x8x128xbf16>
    tpu.vector_store %arg8[%159, %c0_50, %c0_51], %162 {strides = array<i32>} : memref<8x8x128xbf16, #tpu.memory_space<vmem>>, vector<1x8x128xbf16>,
    %c4_i32 = arith.constant 4 : i32
    %163 = arith.index_cast %c4_i32 : i32 to index
    %c0_52 = arith.constant 0 : index
    %c0_53 = arith.constant 0 : index
    %164 = vector.load %arg9[%163, %c0_52, %c0_53] : memref<8x8x512xf32, #tpu.memory_space<vmem>>, vector<1x8x512xf32>
    %165 = vector.shape_cast %164 : vector<1x8x512xf32> to vector<8x512xf32>
    %166 = arith.truncf %156 : vector<8x128xf32> to vector<8x128xbf16>
    %cst_54 = arith.constant dense<0.000000e+00> : vector<8x512xf32>
    %167 = tpu.matmul %166, %3, %cst_54 {dimension_numbers = #tpu.dot_dimension_numbers<[1], [0], [0], [1], [0, 0, 1, 1], [], []>} : vector<8x128xbf16>, vector<128x512xbf16>, vector<8x512xf32> -> vector<8x512xf32>
    %168 = arith.addf %165, %167 : vector<8x512xf32>
    %169 = vector.extract_strided_slice %168 {offsets = [0, 0], sizes = [8, 128], strides = [1, 1]} : vector<8x512xf32> to vector<8x128xf32>
    %170 = arith.negf %169 : vector<8x128xf32>
    %171 = math.exp %170 : vector<8x128xf32>
    %cst_55 = arith.constant 1.000000e+00 : f32
    %172 = vector.broadcast %cst_55 : f32 to vector<8x128xf32>
    %173 = arith.addf %172, %171 : vector<8x128xf32>
    %174 = arith.divf %172, %173 : vector<8x128xf32>
    %175 = vector.extract_strided_slice %168 {offsets = [0, 128], sizes = [8, 128], strides = [1, 1]} : vector<8x512xf32> to vector<8x128xf32>
    %176 = arith.negf %175 : vector<8x128xf32>
    %177 = math.exp %176 : vector<8x128xf32>
    %cst_56 = arith.constant 1.000000e+00 : f32
    %178 = vector.broadcast %cst_56 : f32 to vector<8x128xf32>
    %179 = arith.addf %178, %177 : vector<8x128xf32>
    %180 = arith.divf %178, %179 : vector<8x128xf32>
    %181 = vector.extract_strided_slice %168 {offsets = [0, 256], sizes = [8, 128], strides = [1, 1]} : vector<8x512xf32> to vector<8x128xf32>
    %182 = math.tanh %181 : vector<8x128xf32>
    %183 = vector.extract_strided_slice %168 {offsets = [0, 384], sizes = [8, 128], strides = [1, 1]} : vector<8x512xf32> to vector<8x128xf32>
    %184 = arith.negf %183 : vector<8x128xf32>
    %185 = math.exp %184 : vector<8x128xf32>
    %cst_57 = arith.constant 1.000000e+00 : f32
    %186 = vector.broadcast %cst_57 : f32 to vector<8x128xf32>
    %187 = arith.addf %186, %185 : vector<8x128xf32>
    %188 = arith.divf %186, %187 : vector<8x128xf32>
    %189 = arith.mulf %180, %154 : vector<8x128xf32>
    %190 = arith.mulf %174, %182 : vector<8x128xf32>
    %191 = arith.addf %189, %190 : vector<8x128xf32>
    %192 = math.tanh %191 : vector<8x128xf32>
    %193 = arith.mulf %188, %192 : vector<8x128xf32>
    %194 = arith.truncf %193 : vector<8x128xf32> to vector<8x128xbf16>
    %c0_i32_58 = arith.constant 0 : i32
    %195 = arith.addi %c0_i32_58, %c4_i32 : i32
    %196 = arith.index_cast %195 : i32 to index
    %c0_59 = arith.constant 0 : index
    %c0_60 = arith.constant 0 : index
    %197 = vector.load %arg8[%196, %c0_59, %c0_60] : memref<8x8x128xbf16, #tpu.memory_space<vmem>>, vector<1x8x128xbf16>
    %198 = vector.shape_cast %197 : vector<1x8x128xbf16> to vector<8x128xbf16>
    %199 = vector.shape_cast %194 : vector<8x128xbf16> to vector<1x8x128xbf16>
    tpu.vector_store %arg8[%196, %c0_59, %c0_60], %199 {strides = array<i32>} : memref<8x8x128xbf16, #tpu.memory_space<vmem>>, vector<1x8x128xbf16>,
    %c5_i32 = arith.constant 5 : i32
    %200 = arith.index_cast %c5_i32 : i32 to index
    %c0_61 = arith.constant 0 : index
    %c0_62 = arith.constant 0 : index
    %201 = vector.load %arg9[%200, %c0_61, %c0_62] : memref<8x8x512xf32, #tpu.memory_space<vmem>>, vector<1x8x512xf32>
    %202 = vector.shape_cast %201 : vector<1x8x512xf32> to vector<8x512xf32>
    %203 = arith.truncf %193 : vector<8x128xf32> to vector<8x128xbf16>
    %cst_63 = arith.constant dense<0.000000e+00> : vector<8x512xf32>
    %204 = tpu.matmul %203, %3, %cst_63 {dimension_numbers = #tpu.dot_dimension_numbers<[1], [0], [0], [1], [0, 0, 1, 1], [], []>} : vector<8x128xbf16>, vector<128x512xbf16>, vector<8x512xf32> -> vector<8x512xf32>
    %205 = arith.addf %202, %204 : vector<8x512xf32>
    %206 = vector.extract_strided_slice %205 {offsets = [0, 0], sizes = [8, 128], strides = [1, 1]} : vector<8x512xf32> to vector<8x128xf32>
    %207 = arith.negf %206 : vector<8x128xf32>
    %208 = math.exp %207 : vector<8x128xf32>
    %cst_64 = arith.constant 1.000000e+00 : f32
    %209 = vector.broadcast %cst_64 : f32 to vector<8x128xf32>
    %210 = arith.addf %209, %208 : vector<8x128xf32>
    %211 = arith.divf %209, %210 : vector<8x128xf32>
    %212 = vector.extract_strided_slice %205 {offsets = [0, 128], sizes = [8, 128], strides = [1, 1]} : vector<8x512xf32> to vector<8x128xf32>
    %213 = arith.negf %212 : vector<8x128xf32>
    %214 = math.exp %213 : vector<8x128xf32>
    %cst_65 = arith.constant 1.000000e+00 : f32
    %215 = vector.broadcast %cst_65 : f32 to vector<8x128xf32>
    %216 = arith.addf %215, %214 : vector<8x128xf32>
    %217 = arith.divf %215, %216 : vector<8x128xf32>
    %218 = vector.extract_strided_slice %205 {offsets = [0, 256], sizes = [8, 128], strides = [1, 1]} : vector<8x512xf32> to vector<8x128xf32>
    %219 = math.tanh %218 : vector<8x128xf32>
    %220 = vector.extract_strided_slice %205 {offsets = [0, 384], sizes = [8, 128], strides = [1, 1]} : vector<8x512xf32> to vector<8x128xf32>
    %221 = arith.negf %220 : vector<8x128xf32>
    %222 = math.exp %221 : vector<8x128xf32>
    %cst_66 = arith.constant 1.000000e+00 : f32
    %223 = vector.broadcast %cst_66 : f32 to vector<8x128xf32>
    %224 = arith.addf %223, %222 : vector<8x128xf32>
    %225 = arith.divf %223, %224 : vector<8x128xf32>
    %226 = arith.mulf %217, %191 : vector<8x128xf32>
    %227 = arith.mulf %211, %219 : vector<8x128xf32>
    %228 = arith.addf %226, %227 : vector<8x128xf32>
    %229 = math.tanh %228 : vector<8x128xf32>
    %230 = arith.mulf %225, %229 : vector<8x128xf32>
    %231 = arith.truncf %230 : vector<8x128xf32> to vector<8x128xbf16>
    %c0_i32_67 = arith.constant 0 : i32
    %232 = arith.addi %c0_i32_67, %c5_i32 : i32
    %233 = arith.index_cast %232 : i32 to index
    %c0_68 = arith.constant 0 : index
    %c0_69 = arith.constant 0 : index
    %234 = vector.load %arg8[%233, %c0_68, %c0_69] : memref<8x8x128xbf16, #tpu.memory_space<vmem>>, vector<1x8x128xbf16>
    %235 = vector.shape_cast %234 : vector<1x8x128xbf16> to vector<8x128xbf16>
    %236 = vector.shape_cast %231 : vector<8x128xbf16> to vector<1x8x128xbf16>
    tpu.vector_store %arg8[%233, %c0_68, %c0_69], %236 {strides = array<i32>} : memref<8x8x128xbf16, #tpu.memory_space<vmem>>, vector<1x8x128xbf16>,
    %c6_i32 = arith.constant 6 : i32
    %237 = arith.index_cast %c6_i32 : i32 to index
    %c0_70 = arith.constant 0 : index
    %c0_71 = arith.constant 0 : index
    %238 = vector.load %arg9[%237, %c0_70, %c0_71] : memref<8x8x512xf32, #tpu.memory_space<vmem>>, vector<1x8x512xf32>
    %239 = vector.shape_cast %238 : vector<1x8x512xf32> to vector<8x512xf32>
    %240 = arith.truncf %230 : vector<8x128xf32> to vector<8x128xbf16>
    %cst_72 = arith.constant dense<0.000000e+00> : vector<8x512xf32>
    %241 = tpu.matmul %240, %3, %cst_72 {dimension_numbers = #tpu.dot_dimension_numbers<[1], [0], [0], [1], [0, 0, 1, 1], [], []>} : vector<8x128xbf16>, vector<128x512xbf16>, vector<8x512xf32> -> vector<8x512xf32>
    %242 = arith.addf %239, %241 : vector<8x512xf32>
    %243 = vector.extract_strided_slice %242 {offsets = [0, 0], sizes = [8, 128], strides = [1, 1]} : vector<8x512xf32> to vector<8x128xf32>
    %244 = arith.negf %243 : vector<8x128xf32>
    %245 = math.exp %244 : vector<8x128xf32>
    %cst_73 = arith.constant 1.000000e+00 : f32
    %246 = vector.broadcast %cst_73 : f32 to vector<8x128xf32>
    %247 = arith.addf %246, %245 : vector<8x128xf32>
    %248 = arith.divf %246, %247 : vector<8x128xf32>
    %249 = vector.extract_strided_slice %242 {offsets = [0, 128], sizes = [8, 128], strides = [1, 1]} : vector<8x512xf32> to vector<8x128xf32>
    %250 = arith.negf %249 : vector<8x128xf32>
    %251 = math.exp %250 : vector<8x128xf32>
    %cst_74 = arith.constant 1.000000e+00 : f32
    %252 = vector.broadcast %cst_74 : f32 to vector<8x128xf32>
    %253 = arith.addf %252, %251 : vector<8x128xf32>
    %254 = arith.divf %252, %253 : vector<8x128xf32>
    %255 = vector.extract_strided_slice %242 {offsets = [0, 256], sizes = [8, 128], strides = [1, 1]} : vector<8x512xf32> to vector<8x128xf32>
    %256 = math.tanh %255 : vector<8x128xf32>
    %257 = vector.extract_strided_slice %242 {offsets = [0, 384], sizes = [8, 128], strides = [1, 1]} : vector<8x512xf32> to vector<8x128xf32>
    %258 = arith.negf %257 : vector<8x128xf32>
    %259 = math.exp %258 : vector<8x128xf32>
    %cst_75 = arith.constant 1.000000e+00 : f32
    %260 = vector.broadcast %cst_75 : f32 to vector<8x128xf32>
    %261 = arith.addf %260, %259 : vector<8x128xf32>
    %262 = arith.divf %260, %261 : vector<8x128xf32>
    %263 = arith.mulf %254, %228 : vector<8x128xf32>
    %264 = arith.mulf %248, %256 : vector<8x128xf32>
    %265 = arith.addf %263, %264 : vector<8x128xf32>
    %266 = math.tanh %265 : vector<8x128xf32>
    %267 = arith.mulf %262, %266 : vector<8x128xf32>
    %268 = arith.truncf %267 : vector<8x128xf32> to vector<8x128xbf16>
    %c0_i32_76 = arith.constant 0 : i32
    %269 = arith.addi %c0_i32_76, %c6_i32 : i32
    %270 = arith.index_cast %269 : i32 to index
    %c0_77 = arith.constant 0 : index
    %c0_78 = arith.constant 0 : index
    %271 = vector.load %arg8[%270, %c0_77, %c0_78] : memref<8x8x128xbf16, #tpu.memory_space<vmem>>, vector<1x8x128xbf16>
    %272 = vector.shape_cast %271 : vector<1x8x128xbf16> to vector<8x128xbf16>
    %273 = vector.shape_cast %268 : vector<8x128xbf16> to vector<1x8x128xbf16>
    tpu.vector_store %arg8[%270, %c0_77, %c0_78], %273 {strides = array<i32>} : memref<8x8x128xbf16, #tpu.memory_space<vmem>>, vector<1x8x128xbf16>,
    %c7_i32 = arith.constant 7 : i32
    %274 = arith.index_cast %c7_i32 : i32 to index
    %c0_79 = arith.constant 0 : index
    %c0_80 = arith.constant 0 : index
    %275 = vector.load %arg9[%274, %c0_79, %c0_80] : memref<8x8x512xf32, #tpu.memory_space<vmem>>, vector<1x8x512xf32>
    %276 = vector.shape_cast %275 : vector<1x8x512xf32> to vector<8x512xf32>
    %277 = arith.truncf %267 : vector<8x128xf32> to vector<8x128xbf16>
    %cst_81 = arith.constant dense<0.000000e+00> : vector<8x512xf32>
    %278 = tpu.matmul %277, %3, %cst_81 {dimension_numbers = #tpu.dot_dimension_numbers<[1], [0], [0], [1], [0, 0, 1, 1], [], []>} : vector<8x128xbf16>, vector<128x512xbf16>, vector<8x512xf32> -> vector<8x512xf32>
    %279 = arith.addf %276, %278 : vector<8x512xf32>
    %280 = vector.extract_strided_slice %279 {offsets = [0, 0], sizes = [8, 128], strides = [1, 1]} : vector<8x512xf32> to vector<8x128xf32>
    %281 = arith.negf %280 : vector<8x128xf32>
    %282 = math.exp %281 : vector<8x128xf32>
    %cst_82 = arith.constant 1.000000e+00 : f32
    %283 = vector.broadcast %cst_82 : f32 to vector<8x128xf32>
    %284 = arith.addf %283, %282 : vector<8x128xf32>
    %285 = arith.divf %283, %284 : vector<8x128xf32>
    %286 = vector.extract_strided_slice %279 {offsets = [0, 128], sizes = [8, 128], strides = [1, 1]} : vector<8x512xf32> to vector<8x128xf32>
    %287 = arith.negf %286 : vector<8x128xf32>
    %288 = math.exp %287 : vector<8x128xf32>
    %cst_83 = arith.constant 1.000000e+00 : f32
    %289 = vector.broadcast %cst_83 : f32 to vector<8x128xf32>
    %290 = arith.addf %289, %288 : vector<8x128xf32>
    %291 = arith.divf %289, %290 : vector<8x128xf32>
    %292 = vector.extract_strided_slice %279 {offsets = [0, 256], sizes = [8, 128], strides = [1, 1]} : vector<8x512xf32> to vector<8x128xf32>
    %293 = math.tanh %292 : vector<8x128xf32>
    %294 = vector.extract_strided_slice %279 {offsets = [0, 384], sizes = [8, 128], strides = [1, 1]} : vector<8x512xf32> to vector<8x128xf32>
    %295 = arith.negf %294 : vector<8x128xf32>
    %296 = math.exp %295 : vector<8x128xf32>
    %cst_84 = arith.constant 1.000000e+00 : f32
    %297 = vector.broadcast %cst_84 : f32 to vector<8x128xf32>
    %298 = arith.addf %297, %296 : vector<8x128xf32>
    %299 = arith.divf %297, %298 : vector<8x128xf32>
    %300 = arith.mulf %291, %265 : vector<8x128xf32>
    %301 = arith.mulf %285, %293 : vector<8x128xf32>
    %302 = arith.addf %300, %301 : vector<8x128xf32>
    %303 = math.tanh %302 : vector<8x128xf32>
    %304 = arith.mulf %299, %303 : vector<8x128xf32>
    %305 = arith.truncf %304 : vector<8x128xf32> to vector<8x128xbf16>
    %c0_i32_85 = arith.constant 0 : i32
    %306 = arith.addi %c0_i32_85, %c7_i32 : i32
    %307 = arith.index_cast %306 : i32 to index
    %c0_86 = arith.constant 0 : index
    %c0_87 = arith.constant 0 : index
    %308 = vector.load %arg8[%307, %c0_86, %c0_87] : memref<8x8x128xbf16, #tpu.memory_space<vmem>>, vector<1x8x128xbf16>
    %309 = vector.shape_cast %308 : vector<1x8x128xbf16> to vector<8x128xbf16>
    %310 = vector.shape_cast %305 : vector<8x128xbf16> to vector<1x8x128xbf16>
    tpu.vector_store %arg8[%307, %c0_86, %c0_87], %310 {strides = array<i32>} : memref<8x8x128xbf16, #tpu.memory_space<vmem>>, vector<1x8x128xbf16>,
    %c8_i32 = arith.constant 8 : i32
    %c0_88 = arith.constant 0 : index
    %c0_89 = arith.constant 0 : index
    %c0_90 = arith.constant 0 : index
    %311 = vector.load %arg6[%c0_88, %c0_89, %c0_90] : memref<2x8x128xf32, #tpu.memory_space<vmem>>, vector<1x8x128xf32>
    %312 = vector.shape_cast %311 : vector<1x8x128xf32> to vector<8x128xf32>
    %313 = vector.shape_cast %304 : vector<8x128xf32> to vector<1x8x128xf32>
    tpu.vector_store %arg6[%c0_88, %c0_89, %c0_90], %313 {strides = array<i32>} : memref<2x8x128xf32, #tpu.memory_space<vmem>>, vector<1x8x128xf32>,
    %c0_91 = arith.constant 0 : index
    %c0_92 = arith.constant 0 : index
    %c0_93 = arith.constant 0 : index
    %314 = vector.load %arg7[%c0_91, %c0_92, %c0_93] : memref<2x8x128xf32, #tpu.memory_space<vmem>>, vector<1x8x128xf32>
    %315 = vector.shape_cast %314 : vector<1x8x128xf32> to vector<8x128xf32>
    %316 = vector.shape_cast %302 : vector<8x128xf32> to vector<1x8x128xf32>
    tpu.vector_store %arg7[%c0_91, %c0_92, %c0_93], %316 {strides = array<i32>} : memref<2x8x128xf32, #tpu.memory_space<vmem>>, vector<1x8x128xf32>,
    %c1 = arith.constant 1 : index
    %c0_94 = arith.constant 0 : index
    %c0_95 = arith.constant 0 : index
    %317 = vector.load %arg2[%c1, %c0_94, %c0_95] : memref<2x128x512xbf16, #tpu.memory_space<vmem>>, vector<1x128x512xbf16>
    %318 = vector.shape_cast %317 : vector<1x128x512xbf16> to vector<128x512xbf16>
    %c1_96 = arith.constant 1 : index
    %c0_97 = arith.constant 0 : index
    %c0_98 = arith.constant 0 : index
    %319 = vector.load %arg3[%c1_96, %c0_97, %c0_98] : memref<2x128x512xbf16, #tpu.memory_space<vmem>>, vector<1x128x512xbf16>
    %320 = vector.shape_cast %319 : vector<1x128x512xbf16> to vector<128x512xbf16>
    %c1_99 = arith.constant 1 : index
    %c0_100 = arith.constant 0 : index
    %c0_101 = arith.constant 0 : index
    %321 = vector.load %arg4[%c1_99, %c0_100, %c0_101] : memref<2x1x512xf32, #tpu.memory_space<vmem>>, vector<1x1x512xf32>
    %322 = vector.shape_cast %321 : vector<1x1x512xf32> to vector<1x512xf32>
    %cst_102 = arith.constant 0.000000e+00 : f32
    %323 = vector.broadcast %cst_102 : f32 to vector<8x128xf32>
    %cst_103 = arith.constant 0.000000e+00 : f32
    %324 = vector.broadcast %cst_103 : f32 to vector<8x128xf32>
    %cst_104 = arith.constant 0.000000e+00 : f32
    %325 = vector.broadcast %cst_104 : f32 to vector<8x128xf32>
    %c0_105 = arith.constant 0 : index
    %c0_106 = arith.constant 0 : index
    %c0_107 = arith.constant 0 : index
    %326 = vector.load %arg8[%c0_105, %c0_106, %c0_107] : memref<8x8x128xbf16, #tpu.memory_space<vmem>>, vector<8x8x128xbf16>
    %327 = vector.shape_cast %326 : vector<8x8x128xbf16> to vector<64x128xbf16>
    %cst_108 = arith.constant dense<0.000000e+00> : vector<64x512xf32>
    %328 = tpu.matmul %327, %318, %cst_108 {dimension_numbers = #tpu.dot_dimension_numbers<[1], [0], [0], [1], [0, 0, 1, 1], [], []>} : vector<64x128xbf16>, vector<128x512xbf16>, vector<64x512xf32> -> vector<64x512xf32>
    %329 = vector.broadcast %322 : vector<1x512xf32> to vector<64x512xf32>
    %330 = arith.addf %328, %329 : vector<64x512xf32>
    %331 = vector.shape_cast %330 : vector<64x512xf32> to vector<8x8x512xf32>
    %c0_109 = arith.constant 0 : index
    %c0_110 = arith.constant 0 : index
    %c0_111 = arith.constant 0 : index
    %332 = vector.load %arg9[%c0_109, %c0_110, %c0_111] : memref<8x8x512xf32, #tpu.memory_space<vmem>>, vector<8x8x512xf32>
    tpu.vector_store %arg9[%c0_109, %c0_110, %c0_111], %331 {strides = array<i32>} : memref<8x8x512xf32, #tpu.memory_space<vmem>>, vector<8x8x512xf32>,
    %c0_i32_112 = arith.constant 0 : i32
    %333 = arith.index_cast %c0_i32_112 : i32 to index
    %c0_113 = arith.constant 0 : index
    %c0_114 = arith.constant 0 : index
    %334 = vector.load %arg9[%333, %c0_113, %c0_114] : memref<8x8x512xf32, #tpu.memory_space<vmem>>, vector<1x8x512xf32>
    %335 = vector.shape_cast %334 : vector<1x8x512xf32> to vector<8x512xf32>
    %336 = arith.truncf %323 : vector<8x128xf32> to vector<8x128xbf16>
    %cst_115 = arith.constant dense<0.000000e+00> : vector<8x512xf32>
    %337 = tpu.matmul %336, %320, %cst_115 {dimension_numbers = #tpu.dot_dimension_numbers<[1], [0], [0], [1], [0, 0, 1, 1], [], []>} : vector<8x128xbf16>, vector<128x512xbf16>, vector<8x512xf32> -> vector<8x512xf32>
    %338 = arith.addf %335, %337 : vector<8x512xf32>
    %339 = vector.extract_strided_slice %338 {offsets = [0, 0], sizes = [8, 128], strides = [1, 1]} : vector<8x512xf32> to vector<8x128xf32>
    %340 = arith.negf %339 : vector<8x128xf32>
    %341 = math.exp %340 : vector<8x128xf32>
    %cst_116 = arith.constant 1.000000e+00 : f32
    %342 = vector.broadcast %cst_116 : f32 to vector<8x128xf32>
    %343 = arith.addf %342, %341 : vector<8x128xf32>
    %344 = arith.divf %342, %343 : vector<8x128xf32>
    %345 = vector.extract_strided_slice %338 {offsets = [0, 128], sizes = [8, 128], strides = [1, 1]} : vector<8x512xf32> to vector<8x128xf32>
    %346 = arith.negf %345 : vector<8x128xf32>
    %347 = math.exp %346 : vector<8x128xf32>
    %cst_117 = arith.constant 1.000000e+00 : f32
    %348 = vector.broadcast %cst_117 : f32 to vector<8x128xf32>
    %349 = arith.addf %348, %347 : vector<8x128xf32>
    %350 = arith.divf %348, %349 : vector<8x128xf32>
    %351 = vector.extract_strided_slice %338 {offsets = [0, 256], sizes = [8, 128], strides = [1, 1]} : vector<8x512xf32> to vector<8x128xf32>
    %352 = math.tanh %351 : vector<8x128xf32>
    %353 = vector.extract_strided_slice %338 {offsets = [0, 384], sizes = [8, 128], strides = [1, 1]} : vector<8x512xf32> to vector<8x128xf32>
    %354 = arith.negf %353 : vector<8x128xf32>
    %355 = math.exp %354 : vector<8x128xf32>
    %cst_118 = arith.constant 1.000000e+00 : f32
    %356 = vector.broadcast %cst_118 : f32 to vector<8x128xf32>
    %357 = arith.addf %356, %355 : vector<8x128xf32>
    %358 = arith.divf %356, %357 : vector<8x128xf32>
    %359 = arith.mulf %350, %324 : vector<8x128xf32>
    %360 = arith.mulf %344, %352 : vector<8x128xf32>
    %361 = arith.addf %359, %360 : vector<8x128xf32>
    %362 = math.tanh %361 : vector<8x128xf32>
    %363 = arith.mulf %358, %362 : vector<8x128xf32>
    %364 = arith.addf %325, %363 : vector<8x128xf32>
    %c1_i32_119 = arith.constant 1 : i32
    %365 = arith.index_cast %c1_i32_119 : i32 to index
    %c0_120 = arith.constant 0 : index
    %c0_121 = arith.constant 0 : index
    %366 = vector.load %arg9[%365, %c0_120, %c0_121] : memref<8x8x512xf32, #tpu.memory_space<vmem>>, vector<1x8x512xf32>
    %367 = vector.shape_cast %366 : vector<1x8x512xf32> to vector<8x512xf32>
    %368 = arith.truncf %363 : vector<8x128xf32> to vector<8x128xbf16>
    %cst_122 = arith.constant dense<0.000000e+00> : vector<8x512xf32>
    %369 = tpu.matmul %368, %320, %cst_122 {dimension_numbers = #tpu.dot_dimension_numbers<[1], [0], [0], [1], [0, 0, 1, 1], [], []>} : vector<8x128xbf16>, vector<128x512xbf16>, vector<8x512xf32> -> vector<8x512xf32>
    %370 = arith.addf %367, %369 : vector<8x512xf32>
    %371 = vector.extract_strided_slice %370 {offsets = [0, 0], sizes = [8, 128], strides = [1, 1]} : vector<8x512xf32> to vector<8x128xf32>
    %372 = arith.negf %371 : vector<8x128xf32>
    %373 = math.exp %372 : vector<8x128xf32>
    %cst_123 = arith.constant 1.000000e+00 : f32
    %374 = vector.broadcast %cst_123 : f32 to vector<8x128xf32>
    %375 = arith.addf %374, %373 : vector<8x128xf32>
    %376 = arith.divf %374, %375 : vector<8x128xf32>
    %377 = vector.extract_strided_slice %370 {offsets = [0, 128], sizes = [8, 128], strides = [1, 1]} : vector<8x512xf32> to vector<8x128xf32>
    %378 = arith.negf %377 : vector<8x128xf32>
    %379 = math.exp %378 : vector<8x128xf32>
    %cst_124 = arith.constant 1.000000e+00 : f32
    %380 = vector.broadcast %cst_124 : f32 to vector<8x128xf32>
    %381 = arith.addf %380, %379 : vector<8x128xf32>
    %382 = arith.divf %380, %381 : vector<8x128xf32>
    %383 = vector.extract_strided_slice %370 {offsets = [0, 256], sizes = [8, 128], strides = [1, 1]} : vector<8x512xf32> to vector<8x128xf32>
    %384 = math.tanh %383 : vector<8x128xf32>
    %385 = vector.extract_strided_slice %370 {offsets = [0, 384], sizes = [8, 128], strides = [1, 1]} : vector<8x512xf32> to vector<8x128xf32>
    %386 = arith.negf %385 : vector<8x128xf32>
    %387 = math.exp %386 : vector<8x128xf32>
    %cst_125 = arith.constant 1.000000e+00 : f32
    %388 = vector.broadcast %cst_125 : f32 to vector<8x128xf32>
    %389 = arith.addf %388, %387 : vector<8x128xf32>
    %390 = arith.divf %388, %389 : vector<8x128xf32>
    %391 = arith.mulf %382, %361 : vector<8x128xf32>
    %392 = arith.mulf %376, %384 : vector<8x128xf32>
    %393 = arith.addf %391, %392 : vector<8x128xf32>
    %394 = math.tanh %393 : vector<8x128xf32>
    %395 = arith.mulf %390, %394 : vector<8x128xf32>
    %396 = arith.addf %364, %395 : vector<8x128xf32>
    %c2_i32_126 = arith.constant 2 : i32
    %397 = arith.index_cast %c2_i32_126 : i32 to index
    %c0_127 = arith.constant 0 : index
    %c0_128 = arith.constant 0 : index
    %398 = vector.load %arg9[%397, %c0_127, %c0_128] : memref<8x8x512xf32, #tpu.memory_space<vmem>>, vector<1x8x512xf32>
    %399 = vector.shape_cast %398 : vector<1x8x512xf32> to vector<8x512xf32>
    %400 = arith.truncf %395 : vector<8x128xf32> to vector<8x128xbf16>
    %cst_129 = arith.constant dense<0.000000e+00> : vector<8x512xf32>
    %401 = tpu.matmul %400, %320, %cst_129 {dimension_numbers = #tpu.dot_dimension_numbers<[1], [0], [0], [1], [0, 0, 1, 1], [], []>} : vector<8x128xbf16>, vector<128x512xbf16>, vector<8x512xf32> -> vector<8x512xf32>
    %402 = arith.addf %399, %401 : vector<8x512xf32>
    %403 = vector.extract_strided_slice %402 {offsets = [0, 0], sizes = [8, 128], strides = [1, 1]} : vector<8x512xf32> to vector<8x128xf32>
    %404 = arith.negf %403 : vector<8x128xf32>
    %405 = math.exp %404 : vector<8x128xf32>
    %cst_130 = arith.constant 1.000000e+00 : f32
    %406 = vector.broadcast %cst_130 : f32 to vector<8x128xf32>
    %407 = arith.addf %406, %405 : vector<8x128xf32>
    %408 = arith.divf %406, %407 : vector<8x128xf32>
    %409 = vector.extract_strided_slice %402 {offsets = [0, 128], sizes = [8, 128], strides = [1, 1]} : vector<8x512xf32> to vector<8x128xf32>
    %410 = arith.negf %409 : vector<8x128xf32>
    %411 = math.exp %410 : vector<8x128xf32>
    %cst_131 = arith.constant 1.000000e+00 : f32
    %412 = vector.broadcast %cst_131 : f32 to vector<8x128xf32>
    %413 = arith.addf %412, %411 : vector<8x128xf32>
    %414 = arith.divf %412, %413 : vector<8x128xf32>
    %415 = vector.extract_strided_slice %402 {offsets = [0, 256], sizes = [8, 128], strides = [1, 1]} : vector<8x512xf32> to vector<8x128xf32>
    %416 = math.tanh %415 : vector<8x128xf32>
    %417 = vector.extract_strided_slice %402 {offsets = [0, 384], sizes = [8, 128], strides = [1, 1]} : vector<8x512xf32> to vector<8x128xf32>
    %418 = arith.negf %417 : vector<8x128xf32>
    %419 = math.exp %418 : vector<8x128xf32>
    %cst_132 = arith.constant 1.000000e+00 : f32
    %420 = vector.broadcast %cst_132 : f32 to vector<8x128xf32>
    %421 = arith.addf %420, %419 : vector<8x128xf32>
    %422 = arith.divf %420, %421 : vector<8x128xf32>
    %423 = arith.mulf %414, %393 : vector<8x128xf32>
    %424 = arith.mulf %408, %416 : vector<8x128xf32>
    %425 = arith.addf %423, %424 : vector<8x128xf32>
    %426 = math.tanh %425 : vector<8x128xf32>
    %427 = arith.mulf %422, %426 : vector<8x128xf32>
    %428 = arith.addf %396, %427 : vector<8x128xf32>
    %c3_i32_133 = arith.constant 3 : i32
    %429 = arith.index_cast %c3_i32_133 : i32 to index
    %c0_134 = arith.constant 0 : index
    %c0_135 = arith.constant 0 : index
    %430 = vector.load %arg9[%429, %c0_134, %c0_135] : memref<8x8x512xf32, #tpu.memory_space<vmem>>, vector<1x8x512xf32>
    %431 = vector.shape_cast %430 : vector<1x8x512xf32> to vector<8x512xf32>
    %432 = arith.truncf %427 : vector<8x128xf32> to vector<8x128xbf16>
    %cst_136 = arith.constant dense<0.000000e+00> : vector<8x512xf32>
    %433 = tpu.matmul %432, %320, %cst_136 {dimension_numbers = #tpu.dot_dimension_numbers<[1], [0], [0], [1], [0, 0, 1, 1], [], []>} : vector<8x128xbf16>, vector<128x512xbf16>, vector<8x512xf32> -> vector<8x512xf32>
    %434 = arith.addf %431, %433 : vector<8x512xf32>
    %435 = vector.extract_strided_slice %434 {offsets = [0, 0], sizes = [8, 128], strides = [1, 1]} : vector<8x512xf32> to vector<8x128xf32>
    %436 = arith.negf %435 : vector<8x128xf32>
    %437 = math.exp %436 : vector<8x128xf32>
    %cst_137 = arith.constant 1.000000e+00 : f32
    %438 = vector.broadcast %cst_137 : f32 to vector<8x128xf32>
    %439 = arith.addf %438, %437 : vector<8x128xf32>
    %440 = arith.divf %438, %439 : vector<8x128xf32>
    %441 = vector.extract_strided_slice %434 {offsets = [0, 128], sizes = [8, 128], strides = [1, 1]} : vector<8x512xf32> to vector<8x128xf32>
    %442 = arith.negf %441 : vector<8x128xf32>
    %443 = math.exp %442 : vector<8x128xf32>
    %cst_138 = arith.constant 1.000000e+00 : f32
    %444 = vector.broadcast %cst_138 : f32 to vector<8x128xf32>
    %445 = arith.addf %444, %443 : vector<8x128xf32>
    %446 = arith.divf %444, %445 : vector<8x128xf32>
    %447 = vector.extract_strided_slice %434 {offsets = [0, 256], sizes = [8, 128], strides = [1, 1]} : vector<8x512xf32> to vector<8x128xf32>
    %448 = math.tanh %447 : vector<8x128xf32>
    %449 = vector.extract_strided_slice %434 {offsets = [0, 384], sizes = [8, 128], strides = [1, 1]} : vector<8x512xf32> to vector<8x128xf32>
    %450 = arith.negf %449 : vector<8x128xf32>
    %451 = math.exp %450 : vector<8x128xf32>
    %cst_139 = arith.constant 1.000000e+00 : f32
    %452 = vector.broadcast %cst_139 : f32 to vector<8x128xf32>
    %453 = arith.addf %452, %451 : vector<8x128xf32>
    %454 = arith.divf %452, %453 : vector<8x128xf32>
    %455 = arith.mulf %446, %425 : vector<8x128xf32>
    %456 = arith.mulf %440, %448 : vector<8x128xf32>
    %457 = arith.addf %455, %456 : vector<8x128xf32>
    %458 = math.tanh %457 : vector<8x128xf32>
    %459 = arith.mulf %454, %458 : vector<8x128xf32>
    %460 = arith.addf %428, %459 : vector<8x128xf32>
    %c4_i32_140 = arith.constant 4 : i32
    %461 = arith.index_cast %c4_i32_140 : i32 to index
    %c0_141 = arith.constant 0 : index
    %c0_142 = arith.constant 0 : index
    %462 = vector.load %arg9[%461, %c0_141, %c0_142] : memref<8x8x512xf32, #tpu.memory_space<vmem>>, vector<1x8x512xf32>
    %463 = vector.shape_cast %462 : vector<1x8x512xf32> to vector<8x512xf32>
    %464 = arith.truncf %459 : vector<8x128xf32> to vector<8x128xbf16>
    %cst_143 = arith.constant dense<0.000000e+00> : vector<8x512xf32>
    %465 = tpu.matmul %464, %320, %cst_143 {dimension_numbers = #tpu.dot_dimension_numbers<[1], [0], [0], [1], [0, 0, 1, 1], [], []>} : vector<8x128xbf16>, vector<128x512xbf16>, vector<8x512xf32> -> vector<8x512xf32>
    %466 = arith.addf %463, %465 : vector<8x512xf32>
    %467 = vector.extract_strided_slice %466 {offsets = [0, 0], sizes = [8, 128], strides = [1, 1]} : vector<8x512xf32> to vector<8x128xf32>
    %468 = arith.negf %467 : vector<8x128xf32>
    %469 = math.exp %468 : vector<8x128xf32>
    %cst_144 = arith.constant 1.000000e+00 : f32
    %470 = vector.broadcast %cst_144 : f32 to vector<8x128xf32>
    %471 = arith.addf %470, %469 : vector<8x128xf32>
    %472 = arith.divf %470, %471 : vector<8x128xf32>
    %473 = vector.extract_strided_slice %466 {offsets = [0, 128], sizes = [8, 128], strides = [1, 1]} : vector<8x512xf32> to vector<8x128xf32>
    %474 = arith.negf %473 : vector<8x128xf32>
    %475 = math.exp %474 : vector<8x128xf32>
    %cst_145 = arith.constant 1.000000e+00 : f32
    %476 = vector.broadcast %cst_145 : f32 to vector<8x128xf32>
    %477 = arith.addf %476, %475 : vector<8x128xf32>
    %478 = arith.divf %476, %477 : vector<8x128xf32>
    %479 = vector.extract_strided_slice %466 {offsets = [0, 256], sizes = [8, 128], strides = [1, 1]} : vector<8x512xf32> to vector<8x128xf32>
    %480 = math.tanh %479 : vector<8x128xf32>
    %481 = vector.extract_strided_slice %466 {offsets = [0, 384], sizes = [8, 128], strides = [1, 1]} : vector<8x512xf32> to vector<8x128xf32>
    %482 = arith.negf %481 : vector<8x128xf32>
    %483 = math.exp %482 : vector<8x128xf32>
    %cst_146 = arith.constant 1.000000e+00 : f32
    %484 = vector.broadcast %cst_146 : f32 to vector<8x128xf32>
    %485 = arith.addf %484, %483 : vector<8x128xf32>
    %486 = arith.divf %484, %485 : vector<8x128xf32>
    %487 = arith.mulf %478, %457 : vector<8x128xf32>
    %488 = arith.mulf %472, %480 : vector<8x128xf32>
    %489 = arith.addf %487, %488 : vector<8x128xf32>
    %490 = math.tanh %489 : vector<8x128xf32>
    %491 = arith.mulf %486, %490 : vector<8x128xf32>
    %492 = arith.addf %460, %491 : vector<8x128xf32>
    %c5_i32_147 = arith.constant 5 : i32
    %493 = arith.index_cast %c5_i32_147 : i32 to index
    %c0_148 = arith.constant 0 : index
    %c0_149 = arith.constant 0 : index
    %494 = vector.load %arg9[%493, %c0_148, %c0_149] : memref<8x8x512xf32, #tpu.memory_space<vmem>>, vector<1x8x512xf32>
    %495 = vector.shape_cast %494 : vector<1x8x512xf32> to vector<8x512xf32>
    %496 = arith.truncf %491 : vector<8x128xf32> to vector<8x128xbf16>
    %cst_150 = arith.constant dense<0.000000e+00> : vector<8x512xf32>
    %497 = tpu.matmul %496, %320, %cst_150 {dimension_numbers = #tpu.dot_dimension_numbers<[1], [0], [0], [1], [0, 0, 1, 1], [], []>} : vector<8x128xbf16>, vector<128x512xbf16>, vector<8x512xf32> -> vector<8x512xf32>
    %498 = arith.addf %495, %497 : vector<8x512xf32>
    %499 = vector.extract_strided_slice %498 {offsets = [0, 0], sizes = [8, 128], strides = [1, 1]} : vector<8x512xf32> to vector<8x128xf32>
    %500 = arith.negf %499 : vector<8x128xf32>
    %501 = math.exp %500 : vector<8x128xf32>
    %cst_151 = arith.constant 1.000000e+00 : f32
    %502 = vector.broadcast %cst_151 : f32 to vector<8x128xf32>
    %503 = arith.addf %502, %501 : vector<8x128xf32>
    %504 = arith.divf %502, %503 : vector<8x128xf32>
    %505 = vector.extract_strided_slice %498 {offsets = [0, 128], sizes = [8, 128], strides = [1, 1]} : vector<8x512xf32> to vector<8x128xf32>
    %506 = arith.negf %505 : vector<8x128xf32>
    %507 = math.exp %506 : vector<8x128xf32>
    %cst_152 = arith.constant 1.000000e+00 : f32
    %508 = vector.broadcast %cst_152 : f32 to vector<8x128xf32>
    %509 = arith.addf %508, %507 : vector<8x128xf32>
    %510 = arith.divf %508, %509 : vector<8x128xf32>
    %511 = vector.extract_strided_slice %498 {offsets = [0, 256], sizes = [8, 128], strides = [1, 1]} : vector<8x512xf32> to vector<8x128xf32>
    %512 = math.tanh %511 : vector<8x128xf32>
    %513 = vector.extract_strided_slice %498 {offsets = [0, 384], sizes = [8, 128], strides = [1, 1]} : vector<8x512xf32> to vector<8x128xf32>
    %514 = arith.negf %513 : vector<8x128xf32>
    %515 = math.exp %514 : vector<8x128xf32>
    %cst_153 = arith.constant 1.000000e+00 : f32
    %516 = vector.broadcast %cst_153 : f32 to vector<8x128xf32>
    %517 = arith.addf %516, %515 : vector<8x128xf32>
    %518 = arith.divf %516, %517 : vector<8x128xf32>
    %519 = arith.mulf %510, %489 : vector<8x128xf32>
    %520 = arith.mulf %504, %512 : vector<8x128xf32>
    %521 = arith.addf %519, %520 : vector<8x128xf32>
    %522 = math.tanh %521 : vector<8x128xf32>
    %523 = arith.mulf %518, %522 : vector<8x128xf32>
    %524 = arith.addf %492, %523 : vector<8x128xf32>
    %c6_i32_154 = arith.constant 6 : i32
    %525 = arith.index_cast %c6_i32_154 : i32 to index
    %c0_155 = arith.constant 0 : index
    %c0_156 = arith.constant 0 : index
    %526 = vector.load %arg9[%525, %c0_155, %c0_156] : memref<8x8x512xf32, #tpu.memory_space<vmem>>, vector<1x8x512xf32>
    %527 = vector.shape_cast %526 : vector<1x8x512xf32> to vector<8x512xf32>
    %528 = arith.truncf %523 : vector<8x128xf32> to vector<8x128xbf16>
    %cst_157 = arith.constant dense<0.000000e+00> : vector<8x512xf32>
    %529 = tpu.matmul %528, %320, %cst_157 {dimension_numbers = #tpu.dot_dimension_numbers<[1], [0], [0], [1], [0, 0, 1, 1], [], []>} : vector<8x128xbf16>, vector<128x512xbf16>, vector<8x512xf32> -> vector<8x512xf32>
    %530 = arith.addf %527, %529 : vector<8x512xf32>
    %531 = vector.extract_strided_slice %530 {offsets = [0, 0], sizes = [8, 128], strides = [1, 1]} : vector<8x512xf32> to vector<8x128xf32>
    %532 = arith.negf %531 : vector<8x128xf32>
    %533 = math.exp %532 : vector<8x128xf32>
    %cst_158 = arith.constant 1.000000e+00 : f32
    %534 = vector.broadcast %cst_158 : f32 to vector<8x128xf32>
    %535 = arith.addf %534, %533 : vector<8x128xf32>
    %536 = arith.divf %534, %535 : vector<8x128xf32>
    %537 = vector.extract_strided_slice %530 {offsets = [0, 128], sizes = [8, 128], strides = [1, 1]} : vector<8x512xf32> to vector<8x128xf32>
    %538 = arith.negf %537 : vector<8x128xf32>
    %539 = math.exp %538 : vector<8x128xf32>
    %cst_159 = arith.constant 1.000000e+00 : f32
    %540 = vector.broadcast %cst_159 : f32 to vector<8x128xf32>
    %541 = arith.addf %540, %539 : vector<8x128xf32>
    %542 = arith.divf %540, %541 : vector<8x128xf32>
    %543 = vector.extract_strided_slice %530 {offsets = [0, 256], sizes = [8, 128], strides = [1, 1]} : vector<8x512xf32> to vector<8x128xf32>
    %544 = math.tanh %543 : vector<8x128xf32>
    %545 = vector.extract_strided_slice %530 {offsets = [0, 384], sizes = [8, 128], strides = [1, 1]} : vector<8x512xf32> to vector<8x128xf32>
    %546 = arith.negf %545 : vector<8x128xf32>
    %547 = math.exp %546 : vector<8x128xf32>
    %cst_160 = arith.constant 1.000000e+00 : f32
    %548 = vector.broadcast %cst_160 : f32 to vector<8x128xf32>
    %549 = arith.addf %548, %547 : vector<8x128xf32>
    %550 = arith.divf %548, %549 : vector<8x128xf32>
    %551 = arith.mulf %542, %521 : vector<8x128xf32>
    %552 = arith.mulf %536, %544 : vector<8x128xf32>
    %553 = arith.addf %551, %552 : vector<8x128xf32>
    %554 = math.tanh %553 : vector<8x128xf32>
    %555 = arith.mulf %550, %554 : vector<8x128xf32>
    %556 = arith.addf %524, %555 : vector<8x128xf32>
    %c7_i32_161 = arith.constant 7 : i32
    %557 = arith.index_cast %c7_i32_161 : i32 to index
    %c0_162 = arith.constant 0 : index
    %c0_163 = arith.constant 0 : index
    %558 = vector.load %arg9[%557, %c0_162, %c0_163] : memref<8x8x512xf32, #tpu.memory_space<vmem>>, vector<1x8x512xf32>
    %559 = vector.shape_cast %558 : vector<1x8x512xf32> to vector<8x512xf32>
    %560 = arith.truncf %555 : vector<8x128xf32> to vector<8x128xbf16>
    %cst_164 = arith.constant dense<0.000000e+00> : vector<8x512xf32>
    %561 = tpu.matmul %560, %320, %cst_164 {dimension_numbers = #tpu.dot_dimension_numbers<[1], [0], [0], [1], [0, 0, 1, 1], [], []>} : vector<8x128xbf16>, vector<128x512xbf16>, vector<8x512xf32> -> vector<8x512xf32>
    %562 = arith.addf %559, %561 : vector<8x512xf32>
    %563 = vector.extract_strided_slice %562 {offsets = [0, 0], sizes = [8, 128], strides = [1, 1]} : vector<8x512xf32> to vector<8x128xf32>
    %564 = arith.negf %563 : vector<8x128xf32>
    %565 = math.exp %564 : vector<8x128xf32>
    %cst_165 = arith.constant 1.000000e+00 : f32
    %566 = vector.broadcast %cst_165 : f32 to vector<8x128xf32>
    %567 = arith.addf %566, %565 : vector<8x128xf32>
    %568 = arith.divf %566, %567 : vector<8x128xf32>
    %569 = vector.extract_strided_slice %562 {offsets = [0, 128], sizes = [8, 128], strides = [1, 1]} : vector<8x512xf32> to vector<8x128xf32>
    %570 = arith.negf %569 : vector<8x128xf32>
    %571 = math.exp %570 : vector<8x128xf32>
    %cst_166 = arith.constant 1.000000e+00 : f32
    %572 = vector.broadcast %cst_166 : f32 to vector<8x128xf32>
    %573 = arith.addf %572, %571 : vector<8x128xf32>
    %574 = arith.divf %572, %573 : vector<8x128xf32>
    %575 = vector.extract_strided_slice %562 {offsets = [0, 256], sizes = [8, 128], strides = [1, 1]} : vector<8x512xf32> to vector<8x128xf32>
    %576 = math.tanh %575 : vector<8x128xf32>
    %577 = vector.extract_strided_slice %562 {offsets = [0, 384], sizes = [8, 128], strides = [1, 1]} : vector<8x512xf32> to vector<8x128xf32>
    %578 = arith.negf %577 : vector<8x128xf32>
    %579 = math.exp %578 : vector<8x128xf32>
    %cst_167 = arith.constant 1.000000e+00 : f32
    %580 = vector.broadcast %cst_167 : f32 to vector<8x128xf32>
    %581 = arith.addf %580, %579 : vector<8x128xf32>
    %582 = arith.divf %580, %581 : vector<8x128xf32>
    %583 = arith.mulf %574, %553 : vector<8x128xf32>
    %584 = arith.mulf %568, %576 : vector<8x128xf32>
    %585 = arith.addf %583, %584 : vector<8x128xf32>
    %586 = math.tanh %585 : vector<8x128xf32>
    %587 = arith.mulf %582, %586 : vector<8x128xf32>
    %588 = arith.addf %556, %587 : vector<8x128xf32>
    %c8_i32_168 = arith.constant 8 : i32
    %c1_169 = arith.constant 1 : index
    %c0_170 = arith.constant 0 : index
    %c0_171 = arith.constant 0 : index
    %589 = vector.load %arg6[%c1_169, %c0_170, %c0_171] : memref<2x8x128xf32, #tpu.memory_space<vmem>>, vector<1x8x128xf32>
    %590 = vector.shape_cast %589 : vector<1x8x128xf32> to vector<8x128xf32>
    %591 = vector.shape_cast %587 : vector<8x128xf32> to vector<1x8x128xf32>
    tpu.vector_store %arg6[%c1_169, %c0_170, %c0_171], %591 {strides = array<i32>} : memref<2x8x128xf32, #tpu.memory_space<vmem>>, vector<1x8x128xf32>,
    %c1_172 = arith.constant 1 : index
    %c0_173 = arith.constant 0 : index
    %c0_174 = arith.constant 0 : index
    %592 = vector.load %arg7[%c1_172, %c0_173, %c0_174] : memref<2x8x128xf32, #tpu.memory_space<vmem>>, vector<1x8x128xf32>
    %593 = vector.shape_cast %592 : vector<1x8x128xf32> to vector<8x128xf32>
    %594 = vector.shape_cast %585 : vector<8x128xf32> to vector<1x8x128xf32>
    tpu.vector_store %arg7[%c1_172, %c0_173, %c0_174], %594 {strides = array<i32>} : memref<2x8x128xf32, #tpu.memory_space<vmem>>, vector<1x8x128xf32>,
    %cst_175 = arith.constant 1.250000e-01 : f32
    %595 = vector.broadcast %cst_175 : f32 to vector<8x128xf32>
    %596 = arith.mulf %588, %595 : vector<8x128xf32>
    %c0_176 = arith.constant 0 : index
    %c0_177 = arith.constant 0 : index
    %597 = vector.load %arg5[%c0_176, %c0_177] : memref<8x128xf32, #tpu.memory_space<vmem>>, vector<8x128xf32>
    tpu.vector_store %arg5[%c0_176, %c0_177], %596 {strides = array<i32>} : memref<8x128xf32, #tpu.memory_space<vmem>>, vector<8x128xf32>,
    return
  }
  func.func @transform_0(%arg0: i32) -> (i32, i32, i32) {
    %c0_i32 = arith.constant 0 : i32
    %c0_i32_0 = arith.constant 0 : i32
    %c0_i32_1 = arith.constant 0 : i32
    return %c0_i32, %arg0, %c0_i32_0 : i32, i32, i32
  }
  func.func @transform_1(%arg0: i32) -> (i32, i32, i32) {
    %c0_i32 = arith.constant 0 : i32
    %c0_i32_0 = arith.constant 0 : i32
    %c0_i32_1 = arith.constant 0 : i32
    %c0_i32_2 = arith.constant 0 : i32
    return %c0_i32, %c0_i32_0, %c0_i32_1 : i32, i32, i32
  }
  func.func @transform_2(%arg0: i32) -> (i32, i32, i32) {
    %c0_i32 = arith.constant 0 : i32
    %c0_i32_0 = arith.constant 0 : i32
    %c0_i32_1 = arith.constant 0 : i32
    %c0_i32_2 = arith.constant 0 : i32
    return %c0_i32, %c0_i32_0, %c0_i32_1 : i32, i32, i32
  }
  func.func @transform_3(%arg0: i32) -> (i32, i32, i32) {
    %c0_i32 = arith.constant 0 : i32
    %c0_i32_0 = arith.constant 0 : i32
    %c0_i32_1 = arith.constant 0 : i32
    %c0_i32_2 = arith.constant 0 : i32
    return %c0_i32, %c0_i32_0, %c0_i32_1 : i32, i32, i32
  }
  func.func @transform_4(%arg0: i32) -> (i32, i32) {
    %c0_i32 = arith.constant 0 : i32
    %c0_i32_0 = arith.constant 0 : i32
    return %arg0, %c0_i32 : i32, i32
  }
  func.func @transform_5(%arg0: i32) -> (i32, i32, i32) {
    %c0_i32 = arith.constant 0 : i32
    %c0_i32_0 = arith.constant 0 : i32
    %c0_i32_1 = arith.constant 0 : i32
    return %c0_i32, %arg0, %c0_i32_0 : i32, i32, i32
  }
  func.func @transform_6(%arg0: i32) -> (i32, i32, i32) {
    %c0_i32 = arith.constant 0 : i32
    %c0_i32_0 = arith.constant 0 : i32
    %c0_i32_1 = arith.constant 0 : i32
    return %c0_i32, %arg0, %c0_i32_0 : i32, i32, i32
  }
}

</mosaic_0001>

<llo_original>
// kernel: lstm_model_forward.1
$region0: #{lstm_model_forward.1}
  #allocation0 [shape = 'u32[]', space=smem, size = 0x4, offset = 0x4, fixed_abs, tag = 'smem constant byte address 0x4 - core index']
  #allocation1 [shape = 'u32[144,128]{1,0:T(1,128)}', space=vmem, size = 0x12000, scoped, tag = 'internal scratch']
  #allocation2 [shape = 'bf16[8,8,128]{2,1,0:T(8,128)(2,1)}', space=vmem, size = 0x4000, scoped, tag = 'scratch operand']
  #allocation3 [shape = 'f32[8,8,512]{2,1,0:T(8,128)}', space=vmem, size = 0x20000, scoped, tag = 'scratch operand']
  %s0 = inlined_call_operand.vmem [shape: bf16[8,8,128], index: 0, kind: input, shape index: {}]
  %s1 = inlined_call_operand.hbm [shape: bf16[2,128,512], index: 1, kind: input, shape index: {}]
  %s2 = inlined_call_operand.hbm [shape: bf16[2,128,512], index: 2, kind: input, shape index: {}]
  %s3 = inlined_call_operand.vmem [shape: f32[2,1,512], index: 3, kind: input, shape index: {}]
  %s4 = inlined_call_operand.vmem [shape: f32[8,128], index: 4, kind: output, shape index: {0}]
  %s5 = inlined_call_operand.vmem [shape: f32[2,8,128], index: 5, kind: output, shape index: {1}]
  %s6 = inlined_call_operand.vmem [shape: f32[2,8,128], index: 6, kind: output, shape index: {2}]
  %7 = xla_tuple %s4, %s5, %s6
  %s8 = sld [smem:[#allocation0]]
  $region50: #{lstm_model_forward.1} parent=0
    _
  %s10 = ssub.s32 1, %s8
  %s11 = scalar_select 0, %s10, %s8
  $region1: #{lstm_model_forward.1} parent=0
    #allocation4 [shape = 'u8[262144]{0}', space=vmem, size = 0x40000, scoped, tag = 'input window, operand 1, single buffered']
    #allocation5 [shape = 's32[1]{0}', space=sflag, size = 0x4, scoped, tag = 'scoped memory for lstm_model_forward.1']
    #allocation6 [shape = 'u8[262144]{0}', space=vmem, size = 0x40000, scoped, tag = 'input window, operand 2, single buffered']
    #allocation7 [shape = 's32[1]{0}', space=sflag, size = 0x4, scoped, tag = 'scoped memory for lstm_model_forward.1']
    %12 = vsyncpa [#allocation5], 0
    %13 = vsyncpa [#allocation7], 0
    // Predicated region
    $region2: #{lstm_model_forward.1} parent=1 // pred_check
      _
    $region3: #{lstm_model_forward.1} parent=1 // pred_check_branch
      %15 = sbr.rel (0) target = $region5
    $region4: #{lstm_model_forward.1} parent=1 // pred_region
      _
    $region5: #{lstm_model_forward.1} parent=1 // pred_fallthru
      _
    // Predicated region
    $region6: #{lstm_model_forward.1} parent=1 // pred_check
      _
    $region7: #{lstm_model_forward.1} parent=1 // pred_check_branch
      %17 = sbr.rel (0) target = $region9
    $region8: #{lstm_model_forward.1} parent=1 // pred_region
      %s19 = ssub.s32 8192, 8192
      %20 = vsyncadd [#allocation5], %s19
      %s21 = sshll.u32 [#allocation4], 4
      %s22 = int_to_ptr.vmem [resolvable:$true] %s21
      %27 = dma.hbm_to_vmem [thread:$0]  %s1, 8192, %s22, [#allocation5], 256, 256, 16
    $region9: #{lstm_model_forward.1} parent=1 // pred_fallthru
      _
    // Predicated region
    $region10: #{lstm_model_forward.1} parent=1 // pred_check
      _
    $region11: #{lstm_model_forward.1} parent=1 // pred_check_branch
      %29 = sbr.rel (0) target = $region13
    $region12: #{lstm_model_forward.1} parent=1 // pred_region
      %s31 = ssub.s32 8192, 8192
      %32 = vsyncadd [#allocation7], %s31
      %s33 = sshll.u32 [#allocation6], 4
      %s34 = int_to_ptr.vmem [resolvable:$true] %s33
      %39 = dma.hbm_to_vmem [thread:$0]  %s2, 8192, %s34, [#allocation7], 256, 256, 16
    $region13: #{lstm_model_forward.1} parent=1 // pred_fallthru
      _
    // Predicated region
    $region14: #{lstm_model_forward.1} parent=1 // pred_check
      _
    $region15: #{lstm_model_forward.1} parent=1 // pred_check_branch
      %41 = sbr.rel (0) target = $region17
    $region16: #{lstm_model_forward.1} parent=1 // pred_region
      _
    $region17: #{lstm_model_forward.1} parent=1 // pred_fallthru
      _
    // Predicated region
    $region18: #{lstm_model_forward.1} parent=1 // pred_check
      _
    $region19: #{lstm_model_forward.1} parent=1 // pred_check_branch
      %43 = sbr.rel (0) target = $region21
    $region20: #{lstm_model_forward.1} parent=1 // pred_region
      %44 = dma.done [#allocation5], 8192
    $region21: #{lstm_model_forward.1} parent=1 // pred_fallthru
      _
    // Predicated region
    $region22: #{lstm_model_forward.1} parent=1 // pred_check
      _
    $region23: #{lstm_model_forward.1} parent=1 // pred_check_branch
      %46 = sbr.rel (0) target = $region25
    $region24: #{lstm_model_forward.1} parent=1 // pred_region
      %47 = dma.done [#allocation7], 8192
    $region25: #{lstm_model_forward.1} parent=1 // pred_fallthru
      _
    %v49 = vld [vmem:[#allocation4] sm:$0xff]
    %v50 = vld [vmem:[#allocation4 + $0x8] sm:$0xff]
    %v51 = vld [vmem:[#allocation4 + $0x10] sm:$0xff]
    %v52 = vld [vmem:[#allocation4 + $0x18] sm:$0xff]
    %v53 = vld [vmem:[#allocation4 + $0x20] sm:$0xff]
    %v54 = vld [vmem:[#allocation4 + $0x28] sm:$0xff]
    %v55 = vld [vmem:[#allocation4 + $0x30] sm:$0xff]
    %v56 = vld [vmem:[#allocation4 + $0x38] sm:$0xff]
    %v57 = vld [vmem:[#allocation4 + $0x40] sm:$0xff]
    %v58 = vld [vmem:[#allocation4 + $0x48] sm:$0xff]
    %v59 = vld [vmem:[#allocation4 + $0x50] sm:$0xff]
    %v60 = vld [vmem:[#allocation4 + $0x58] sm:$0xff]
    %v61 = vld [vmem:[#allocation4 + $0x60] sm:$0xff]
    %v62 = vld [vmem:[#allocation4 + $0x68] sm:$0xff]
    %v63 = vld [vmem:[#allocation4 + $0x70] sm:$0xff]
    %v64 = vld [vmem:[#allocation4 + $0x78] sm:$0xff]
    %v65 = vld [vmem:[#allocation4 + $0x80] sm:$0xff]
    %v66 = vld [vmem:[#allocation4 + $0x88] sm:$0xff]
    %v67 = vld [vmem:[#allocation4 + $0x90] sm:$0xff]
    %v68 = vld [vmem:[#allocation4 + $0x98] sm:$0xff]
    %v69 = vld [vmem:[#allocation4 + $0xa0] sm:$0xff]
    %v70 = vld [vmem:[#allocation4 + $0xa8] sm:$0xff]
    %v71 = vld [vmem:[#allocation4 + $0xb0] sm:$0xff]
    %v72 = vld [vmem:[#allocation4 + $0xb8] sm:$0xff]
    %v73 = vld [vmem:[#allocation4 + $0xc0] sm:$0xff]
    %v74 = vld [vmem:[#allocation4 + $0xc8] sm:$0xff]
    %v75 = vld [vmem:[#allocation4 + $0xd0] sm:$0xff]
    %v76 = vld [vmem:[#allocation4 + $0xd8] sm:$0xff]
    %v77 = vld [vmem:[#allocation4 + $0xe0] sm:$0xff]
    %v78 = vld [vmem:[#allocation4 + $0xe8] sm:$0xff]
    %v79 = vld [vmem:[#allocation4 + $0xf0] sm:$0xff]
    %v80 = vld [vmem:[#allocation4 + $0xf8] sm:$0xff]
    %v81 = vld [vmem:[#allocation6] sm:$0xff]
    %v82 = vld [vmem:[#allocation6 + $0x8] sm:$0xff]
    %v83 = vld [vmem:[#allocation6 + $0x10] sm:$0xff]
    %v84 = vld [vmem:[#allocation6 + $0x18] sm:$0xff]
    %v85 = vld [vmem:[#allocation6 + $0x20] sm:$0xff]
    %v86 = vld [vmem:[#allocation6 + $0x28] sm:$0xff]
    %v87 = vld [vmem:[#allocation6 + $0x30] sm:$0xff]
    %v88 = vld [vmem:[#allocation6 + $0x38] sm:$0xff]
    %v89 = vld [vmem:[#allocation6 + $0x40] sm:$0xff]
    %v90 = vld [vmem:[#allocation6 + $0x48] sm:$0xff]
    %v91 = vld [vmem:[#allocation6 + $0x50] sm:$0xff]
    %v92 = vld [vmem:[#allocation6 + $0x58] sm:$0xff]
    %v93 = vld [vmem:[#allocation6 + $0x60] sm:$0xff]
    %v94 = vld [vmem:[#allocation6 + $0x68] sm:$0xff]
    %v95 = vld [vmem:[#allocation6 + $0x70] sm:$0xff]
    %v96 = vld [vmem:[#allocation6 + $0x78] sm:$0xff]
    %v97 = vld [vmem:[#allocation6 + $0x80] sm:$0xff]
    %v98 = vld [vmem:[#allocation6 + $0x88] sm:$0xff]
    %v99 = vld [vmem:[#allocation6 + $0x90] sm:$0xff]
    %v100 = vld [vmem:[#allocation6 + $0x98] sm:$0xff]
    %v101 = vld [vmem:[#allocation6 + $0xa0] sm:$0xff]
    %v102 = vld [vmem:[#allocation6 + $0xa8] sm:$0xff]
    %v103 = vld [vmem:[#allocation6 + $0xb0] sm:$0xff]
    %v104 = vld [vmem:[#allocation6 + $0xb8] sm:$0xff]
    %v105 = vld [vmem:[#allocation6 + $0xc0] sm:$0xff]
    %v106 = vld [vmem:[#allocation6 + $0xc8] sm:$0xff]
    %v107 = vld [vmem:[#allocation6 + $0xd0] sm:$0xff]
    %v108 = vld [vmem:[#allocation6 + $0xd8] sm:$0xff]
    %v109 = vld [vmem:[#allocation6 + $0xe0] sm:$0xff]
    %v110 = vld [vmem:[#allocation6 + $0xe8] sm:$0xff]
    %v111 = vld [vmem:[#allocation6 + $0xf0] sm:$0xff]
    %v112 = vld [vmem:[#allocation6 + $0xf8] sm:$0xff]
    %v113 = vld [vmem:[%s3] sm:$0xf]
    %v114 = vld [vmem:[%s0] sm:$0xf]
    %v115 = vld [vmem:[%s0 + $0x4] sm:$0xf]
    %v116 = vld [vmem:[%s0 + $0x8] sm:$0xf]
    %v117 = vld [vmem:[%s0 + $0xc] sm:$0xf]
    %v118 = vld [vmem:[%s0 + $0x10] sm:$0xf]
    %v119 = vld [vmem:[%s0 + $0x14] sm:$0xf]
    %v120 = vld [vmem:[%s0 + $0x18] sm:$0xf]
    %v121 = vld [vmem:[%s0 + $0x1c] sm:$0xf]
    %v123 = vlaneseq
    %v124 = vshrl.u32 %v123, 7
    %v125 = vsub.s32 0, %v124
    %v126 = vrot.slane %v113, %v125
    %v127 = vlaneseq
    %v128 = vshrl.u32 %v127, 7
    %v129 = vsub.s32 1, %v128
    %v130 = vrot.slane %v113, %v129
    %v131 = vlaneseq
    %v132 = vshrl.u32 %v131, 7
    %v133 = vsub.s32 2, %v132
    %v134 = vrot.slane %v113, %v133
    %v135 = vlaneseq
    %v136 = vshrl.u32 %v135, 7
    %v137 = vsub.s32 3, %v136
    %v138 = vrot.slane %v113, %v137
    %v151 = vunpack.c.l.b16 %v114
    %v152 = vunpack.c.l.b16 %v115
    %v153 = vunpack.c.l.b16 %v116
    %v154 = vunpack.c.l.b16 %v117
    %v155 = vunpack.c.l.b16 %v118
    %v156 = vunpack.c.l.b16 %v119
    %v157 = vunpack.c.l.b16 %v120
    %v158 = vunpack.c.l.b16 %v121
    %v159 = vpack.c.b16 %v152, %v151
    %v160 = vpack.c.b16 %v154, %v153
    %v161 = vpack.c.b16 %v156, %v155
    %v162 = vpack.c.b16 %v158, %v157
    %v199 = vunpack.c.l.b16 %v49
    %v200 = vunpack.c.h.b16 %v49
    %v201 = vunpack.c.l.b16 %v50
    %v202 = vunpack.c.h.b16 %v50
    %v203 = vunpack.c.l.b16 %v51
    %v204 = vunpack.c.h.b16 %v51
    %v205 = vunpack.c.l.b16 %v52
    %v206 = vunpack.c.h.b16 %v52
    %v207 = vunpack.c.l.b16 %v53
    %v208 = vunpack.c.h.b16 %v53
    %v209 = vunpack.c.l.b16 %v54
    %v210 = vunpack.c.h.b16 %v54
    %v211 = vunpack.c.l.b16 %v55
    %v212 = vunpack.c.h.b16 %v55
    %v213 = vunpack.c.l.b16 %v56
    %v214 = vunpack.c.h.b16 %v56
    %v215 = vunpack.c.l.b16 %v57
    %v216 = vunpack.c.h.b16 %v57
    %v217 = vunpack.c.l.b16 %v58
    %v218 = vunpack.c.h.b16 %v58
    %v219 = vunpack.c.l.b16 %v59
    %v220 = vunpack.c.h.b16 %v59
    %v221 = vunpack.c.l.b16 %v60
    %v222 = vunpack.c.h.b16 %v60
    %v223 = vunpack.c.l.b16 %v61
    %v224 = vunpack.c.h.b16 %v61
    %v225 = vunpack.c.l.b16 %v62
    %v226 = vunpack.c.h.b16 %v62
    %v227 = vunpack.c.l.b16 %v63
    %v228 = vunpack.c.h.b16 %v63
    %v229 = vunpack.c.l.b16 %v64
    %v230 = vunpack.c.h.b16 %v64
    %v231 = vunpack.c.l.b16 %v65
    %v232 = vunpack.c.h.b16 %v65
    %v233 = vunpack.c.l.b16 %v66
    %v234 = vunpack.c.h.b16 %v66
    %v235 = vunpack.c.l.b16 %v67
    %v236 = vunpack.c.h.b16 %v67
    %v237 = vunpack.c.l.b16 %v68
    %v238 = vunpack.c.h.b16 %v68
    %v239 = vunpack.c.l.b16 %v69
    %v240 = vunpack.c.h.b16 %v69
    %v241 = vunpack.c.l.b16 %v70
    %v242 = vunpack.c.h.b16 %v70
    %v243 = vunpack.c.l.b16 %v71
    %v244 = vunpack.c.h.b16 %v71
    %v245 = vunpack.c.l.b16 %v72
    %v246 = vunpack.c.h.b16 %v72
    %v247 = vunpack.c.l.b16 %v73
    %v248 = vunpack.c.h.b16 %v73
    %v249 = vunpack.c.l.b16 %v74
    %v250 = vunpack.c.h.b16 %v74
    %v251 = vunpack.c.l.b16 %v75
    %v252 = vunpack.c.h.b16 %v75
    %v253 = vunpack.c.l.b16 %v76
    %v254 = vunpack.c.h.b16 %v76
    %v255 = vunpack.c.l.b16 %v77
    %v256 = vunpack.c.h.b16 %v77
    %v257 = vunpack.c.l.b16 %v78
    %v258 = vunpack.c.h.b16 %v78
    %v259 = vunpack.c.l.b16 %v79
    %v260 = vunpack.c.h.b16 %v79
    %v261 = vunpack.c.l.b16 %v80
    %v262 = vunpack.c.h.b16 %v80
    %v263 = vpack.c.b16 %v203, %v199
    %v264 = vpack.c.b16 %v204, %v200
    %v265 = vpack.c.b16 %v205, %v201
    %v266 = vpack.c.b16 %v206, %v202
    %v267 = vpack.c.b16 %v211, %v207
    %v268 = vpack.c.b16 %v212, %v208
    %v269 = vpack.c.b16 %v213, %v209
    %v270 = vpack.c.b16 %v214, %v210
    %v271 = vpack.c.b16 %v219, %v215
    %v272 = vpack.c.b16 %v220, %v216
    %v273 = vpack.c.b16 %v221, %v217
    %v274 = vpack.c.b16 %v222, %v218
    %v275 = vpack.c.b16 %v227, %v223
    %v276 = vpack.c.b16 %v228, %v224
    %v277 = vpack.c.b16 %v229, %v225
    %v278 = vpack.c.b16 %v230, %v226
    %v279 = vpack.c.b16 %v235, %v231
    %v280 = vpack.c.b16 %v236, %v232
    %v281 = vpack.c.b16 %v237, %v233
    %v282 = vpack.c.b16 %v238, %v234
    %v283 = vpack.c.b16 %v243, %v239
    %v284 = vpack.c.b16 %v244, %v240
    %v285 = vpack.c.b16 %v245, %v241
    %v286 = vpack.c.b16 %v246, %v242
    %v287 = vpack.c.b16 %v251, %v247
    %v288 = vpack.c.b16 %v252, %v248
    %v289 = vpack.c.b16 %v253, %v249
    %v290 = vpack.c.b16 %v254, %v250
    %v291 = vpack.c.b16 %v259, %v255
    %v292 = vpack.c.b16 %v260, %v256
    %v293 = vpack.c.b16 %v261, %v257
    %v294 = vpack.c.b16 %v262, %v258
    %327 = vmatprep.subr.bf16.mxu0 %v264
    %328 = vmatpush1.bf16.msra.mxu0 %v263
    %329 = vmatprep.subr.bf16.mxu0 %v268
    %330 = vmatpush1.bf16.msra.mxu0 %v267
    %331 = vmatprep.subr.bf16.mxu0 %v272
    %332 = vmatpush1.bf16.msra.mxu0 %v271
    %333 = vmatprep.subr.bf16.mxu0 %v276
    %334 = vmatpush1.bf16.msra.mxu0 %v275
    %335 = vmatprep.subr.bf16.mxu0 %v280
    %336 = vmatpush1.bf16.msra.mxu0 %v279
    %337 = vmatprep.subr.bf16.mxu0 %v284
    %338 = vmatpush1.bf16.msra.mxu0 %v283
    %339 = vmatprep.subr.bf16.mxu0 %v288
    %340 = vmatpush1.bf16.msra.mxu0 %v287
    %341 = vmatprep.subr.bf16.mxu0 %v292
    %342 = vmatpush1.bf16.msra.mxu0 %v291
    %343 = vmatprep.subr.bf16.mxu0 0
    %344 = vmatpush1.bf16.msra.mxu0 0
    %345 = vmatprep.subr.bf16.mxu0 0
    %346 = vmatpush1.bf16.msra.mxu0 0
    %347 = vmatprep.subr.bf16.mxu0 0
    %348 = vmatpush1.bf16.msra.mxu0 0
    %349 = vmatprep.subr.bf16.mxu0 0
    %350 = vmatpush1.bf16.msra.mxu0 0
    %351 = vmatprep.subr.bf16.mxu0 0
    %352 = vmatpush1.bf16.msra.mxu0 0
    %353 = vmatprep.subr.bf16.mxu0 0
    %354 = vmatpush1.bf16.msra.mxu0 0
    %355 = vmatprep.subr.bf16.mxu0 0
    %356 = vmatpush1.bf16.msra.mxu0 0
    %357 = vmatprep.subr.bf16.mxu0 0
    %358 = vmatpush1.bf16.msra.mxu0 0
    %359 = vmatprep.mubr.bf16.mxu0 0
    %360 = vmatmul.mubr.bf16.gmra.mrb[0].mxu0 %v159
    %v361 = vpop.f32.mrb[0].mxu0
    %v362 = vadd.f32 %v126, %v361
    %v363 = vpop.f32.mrb[0].mxu0
    %v364 = vadd.f32 %v130, %v363
    %v365 = vpop.f32.mrb[0].mxu0
    %v366 = vadd.f32 %v126, %v365
    %v367 = vpop.f32.mrb[0].mxu0
    %v368 = vadd.f32 %v130, %v367
    %369 = vmatprep.mubr.bf16.mxu0 0
    %370 = vmatmul.mubr.bf16.gmra.mrb[0].mxu0 %v160
    %v371 = vpop.f32.mrb[0].mxu0
    %v372 = vadd.f32 %v126, %v371
    %v373 = vpop.f32.mrb[0].mxu0
    %v374 = vadd.f32 %v130, %v373
    %v375 = vpop.f32.mrb[0].mxu0
    %v376 = vadd.f32 %v126, %v375
    %v377 = vpop.f32.mrb[0].mxu0
    %v378 = vadd.f32 %v130, %v377
    %379 = vmatprep.mubr.bf16.mxu0 0
    %380 = vmatmul.mubr.bf16.gmra.mrb[0].mxu0 %v161
    %v381 = vpop.f32.mrb[0].mxu0
    %v382 = vadd.f32 %v126, %v381
    %v383 = vpop.f32.mrb[0].mxu0
    %v384 = vadd.f32 %v130, %v383
    %v385 = vpop.f32.mrb[0].mxu0
    %v386 = vadd.f32 %v126, %v385
    %v387 = vpop.f32.mrb[0].mxu0
    %v388 = vadd.f32 %v130, %v387
    %389 = vmatprep.mubr.bf16.mxu0 0
    %390 = vmatmul.mubr.bf16.gmra.mrb[0].mxu0 %v162
    %v391 = vpop.f32.mrb[0].mxu0
    %v392 = vadd.f32 %v126, %v391
    %v393 = vpop.f32.mrb[0].mxu0
    %v394 = vadd.f32 %v130, %v393
    %v395 = vpop.f32.mrb[0].mxu0
    %v396 = vadd.f32 %v126, %v395
    %v397 = vpop.f32.mrb[0].mxu0
    %v398 = vadd.f32 %v130, %v397
    %399 = vdwg.mxu0
    %400 = vmatprep.subr.bf16.mxu0 %v266
    %401 = vmatpush1.bf16.msra.mxu0 %v265
    %402 = vmatprep.subr.bf16.mxu0 %v270
    %403 = vmatpush1.bf16.msra.mxu0 %v269
    %404 = vmatprep.subr.bf16.mxu0 %v274
    %405 = vmatpush1.bf16.msra.mxu0 %v273
    %406 = vmatprep.subr.bf16.mxu0 %v278
    %407 = vmatpush1.bf16.msra.mxu0 %v277
    %408 = vmatprep.subr.bf16.mxu0 %v282
    %409 = vmatpush1.bf16.msra.mxu0 %v281
    %410 = vmatprep.subr.bf16.mxu0 %v286
    %411 = vmatpush1.bf16.msra.mxu0 %v285
    %412 = vmatprep.subr.bf16.mxu0 %v290
    %413 = vmatpush1.bf16.msra.mxu0 %v289
    %414 = vmatprep.subr.bf16.mxu0 %v294
    %415 = vmatpush1.bf16.msra.mxu0 %v293
    %416 = vmatprep.subr.bf16.mxu0 0
    %417 = vmatpush1.bf16.msra.mxu0 0
    %418 = vmatprep.subr.bf16.mxu0 0
    %419 = vmatpush1.bf16.msra.mxu0 0
    %420 = vmatprep.subr.bf16.mxu0 0
    %421 = vmatpush1.bf16.msra.mxu0 0
    %422 = vmatprep.subr.bf16.mxu0 0
    %423 = vmatpush1.bf16.msra.mxu0 0
    %424 = vmatprep.subr.bf16.mxu0 0
    %425 = vmatpush1.bf16.msra.mxu0 0
    %426 = vmatprep.subr.bf16.mxu0 0
    %427 = vmatpush1.bf16.msra.mxu0 0
    %428 = vmatprep.subr.bf16.mxu0 0
    %429 = vmatpush1.bf16.msra.mxu0 0
    %430 = vmatprep.subr.bf16.mxu0 0
    %431 = vmatpush1.bf16.msra.mxu0 0
    %432 = vmatprep.mubr.bf16.mxu0 0
    %433 = vmatmul.mubr.bf16.gmra.mrb[0].mxu0 %v159
    %v434 = vpop.f32.mrb[0].mxu0
    %v435 = vadd.f32 %v134, %v434
    %v436 = vpop.f32.mrb[0].mxu0
    %v437 = vadd.f32 %v138, %v436
    %v438 = vpop.f32.mrb[0].mxu0
    %v439 = vadd.f32 %v134, %v438
    %v440 = vpop.f32.mrb[0].mxu0
    %v441 = vadd.f32 %v138, %v440
    %442 = vmatprep.mubr.bf16.mxu0 0
    %443 = vmatmul.mubr.bf16.gmra.mrb[0].mxu0 %v160
    %v444 = vpop.f32.mrb[0].mxu0
    %v445 = vadd.f32 %v134, %v444
    %v446 = vpop.f32.mrb[0].mxu0
    %v447 = vadd.f32 %v138, %v446
    %v448 = vpop.f32.mrb[0].mxu0
    %v449 = vadd.f32 %v134, %v448
    %v450 = vpop.f32.mrb[0].mxu0
    %v451 = vadd.f32 %v138, %v450
    %452 = vmatprep.mubr.bf16.mxu0 0
    %453 = vmatmul.mubr.bf16.gmra.mrb[0].mxu0 %v161
    %v454 = vpop.f32.mrb[0].mxu0
    %v455 = vadd.f32 %v134, %v454
    %v456 = vpop.f32.mrb[0].mxu0
    %v457 = vadd.f32 %v138, %v456
    %v458 = vpop.f32.mrb[0].mxu0
    %v459 = vadd.f32 %v134, %v458
    %v460 = vpop.f32.mrb[0].mxu0
    %v461 = vadd.f32 %v138, %v460
    %462 = vmatprep.mubr.bf16.mxu0 0
    %463 = vmatmul.mubr.bf16.gmra.mrb[0].mxu0 %v162
    %v464 = vpop.f32.mrb[0].mxu0
    %v465 = vadd.f32 %v134, %v464
    %v466 = vpop.f32.mrb[0].mxu0
    %v467 = vadd.f32 %v138, %v466
    %v468 = vpop.f32.mrb[0].mxu0
    %v469 = vadd.f32 %v134, %v468
    %v470 = vpop.f32.mrb[0].mxu0
    %v471 = vadd.f32 %v138, %v470
    %472 = vdwg.mxu0
    %473 = vst [vmem:[#allocation3] sm:$0xff] %v362
    %474 = vst [vmem:[#allocation3 + $0x8] sm:$0xff] %v364
    %475 = vst [vmem:[#allocation3 + $0x10] sm:$0xff] %v435
    %476 = vst [vmem:[#allocation3 + $0x18] sm:$0xff] %v437
    %477 = vst [vmem:[#allocation3 + $0x20] sm:$0xff] %v366
    %478 = vst [vmem:[#allocation3 + $0x28] sm:$0xff] %v368
    %479 = vst [vmem:[#allocation3 + $0x30] sm:$0xff] %v439
    %480 = vst [vmem:[#allocation3 + $0x38] sm:$0xff] %v441
    %481 = vst [vmem:[#allocation3 + $0x40] sm:$0xff] %v372
    %482 = vst [vmem:[#allocation3 + $0x48] sm:$0xff] %v374
    %483 = vst [vmem:[#allocation3 + $0x50] sm:$0xff] %v445
    %484 = vst [vmem:[#allocation3 + $0x58] sm:$0xff] %v447
    %485 = vst [vmem:[#allocation3 + $0x60] sm:$0xff] %v376
    %486 = vst [vmem:[#allocation3 + $0x68] sm:$0xff] %v378
    %487 = vst [vmem:[#allocation3 + $0x70] sm:$0xff] %v449
    %488 = vst [vmem:[#allocation3 + $0x78] sm:$0xff] %v451
    %489 = vst [vmem:[#allocation3 + $0x80] sm:$0xff] %v382
    %490 = vst [vmem:[#allocation3 + $0x88] sm:$0xff] %v384
    %491 = vst [vmem:[#allocation3 + $0x90] sm:$0xff] %v455
    %492 = vst [vmem:[#allocation3 + $0x98] sm:$0xff] %v457
    %493 = vst [vmem:[#allocation3 + $0xa0] sm:$0xff] %v386
    %494 = vst [vmem:[#allocation3 + $0xa8] sm:$0xff] %v388
    %495 = vst [vmem:[#allocation3 + $0xb0] sm:$0xff] %v459
    %496 = vst [vmem:[#allocation3 + $0xb8] sm:$0xff] %v461
    %497 = vst [vmem:[#allocation3 + $0xc0] sm:$0xff] %v392
    %498 = vst [vmem:[#allocation3 + $0xc8] sm:$0xff] %v394
    %499 = vst [vmem:[#allocation3 + $0xd0] sm:$0xff] %v465
    %500 = vst [vmem:[#allocation3 + $0xd8] sm:$0xff] %v467
    %501 = vst [vmem:[#allocation3 + $0xe0] sm:$0xff] %v396
    %502 = vst [vmem:[#allocation3 + $0xe8] sm:$0xff] %v398
    %503 = vst [vmem:[#allocation3 + $0xf0] sm:$0xff] %v469
    %504 = vst [vmem:[#allocation3 + $0xf8] sm:$0xff] %v471
    %v505 = vld [vmem:[#allocation3] sm:$0xff]
    %v506 = vld [vmem:[#allocation3 + $0x8] sm:$0xff]
    %v507 = vld [vmem:[#allocation3 + $0x10] sm:$0xff]
    %v508 = vld [vmem:[#allocation3 + $0x18] sm:$0xff]
    %v541 = vunpack.c.l.b16 %v81
    %v542 = vunpack.c.h.b16 %v81
    %v543 = vunpack.c.l.b16 %v82
    %v544 = vunpack.c.h.b16 %v82
    %v545 = vunpack.c.l.b16 %v83
    %v546 = vunpack.c.h.b16 %v83
    %v547 = vunpack.c.l.b16 %v84
    %v548 = vunpack.c.h.b16 %v84
    %v549 = vunpack.c.l.b16 %v85
    %v550 = vunpack.c.h.b16 %v85
    %v551 = vunpack.c.l.b16 %v86
    %v552 = vunpack.c.h.b16 %v86
    %v553 = vunpack.c.l.b16 %v87
    %v554 = vunpack.c.h.b16 %v87
    %v555 = vunpack.c.l.b16 %v88
    %v556 = vunpack.c.h.b16 %v88
    %v557 = vunpack.c.l.b16 %v89
    %v558 = vunpack.c.h.b16 %v89
    %v559 = vunpack.c.l.b16 %v90
    %v560 = vunpack.c.h.b16 %v90
    %v561 = vunpack.c.l.b16 %v91
    %v562 = vunpack.c.h.b16 %v91
    %v563 = vunpack.c.l.b16 %v92
    %v564 = vunpack.c.h.b16 %v92
    %v565 = vunpack.c.l.b16 %v93
    %v566 = vunpack.c.h.b16 %v93
    %v567 = vunpack.c.l.b16 %v94
    %v568 = vunpack.c.h.b16 %v94
    %v569 = vunpack.c.l.b16 %v95
    %v570 = vunpack.c.h.b16 %v95
    %v571 = vunpack.c.l.b16 %v96
    %v572 = vunpack.c.h.b16 %v96
    %v573 = vunpack.c.l.b16 %v97
    %v574 = vunpack.c.h.b16 %v97
    %v575 = vunpack.c.l.b16 %v98
    %v576 = vunpack.c.h.b16 %v98
    %v577 = vunpack.c.l.b16 %v99
    %v578 = vunpack.c.h.b16 %v99
    %v579 = vunpack.c.l.b16 %v100
    %v580 = vunpack.c.h.b16 %v100
    %v581 = vunpack.c.l.b16 %v101
    %v582 = vunpack.c.h.b16 %v101
    %v583 = vunpack.c.l.b16 %v102
    %v584 = vunpack.c.h.b16 %v102
    %v585 = vunpack.c.l.b16 %v103
    %v586 = vunpack.c.h.b16 %v103
    %v587 = vunpack.c.l.b16 %v104
    %v588 = vunpack.c.h.b16 %v104
    %v589 = vunpack.c.l.b16 %v105
    %v590 = vunpack.c.h.b16 %v105
    %v591 = vunpack.c.l.b16 %v106
    %v592 = vunpack.c.h.b16 %v106
    %v593 = vunpack.c.l.b16 %v107
    %v594 = vunpack.c.h.b16 %v107
    %v595 = vunpack.c.l.b16 %v108
    %v596 = vunpack.c.h.b16 %v108
    %v597 = vunpack.c.l.b16 %v109
    %v598 = vunpack.c.h.b16 %v109
    %v599 = vunpack.c.l.b16 %v110
    %v600 = vunpack.c.h.b16 %v110
    %v601 = vunpack.c.l.b16 %v111
    %v602 = vunpack.c.h.b16 %v111
    %v603 = vunpack.c.l.b16 %v112
    %v604 = vunpack.c.h.b16 %v112
    %v605 = vpack.c.b16 %v545, %v541
    %v606 = vpack.c.b16 %v546, %v542
    %v607 = vpack.c.b16 %v547, %v543
    %v608 = vpack.c.b16 %v548, %v544
    %v609 = vpack.c.b16 %v553, %v549
    %v610 = vpack.c.b16 %v554, %v550
    %v611 = vpack.c.b16 %v555, %v551
    %v612 = vpack.c.b16 %v556, %v552
    %v613 = vpack.c.b16 %v561, %v557
    %v614 = vpack.c.b16 %v562, %v558
    %v615 = vpack.c.b16 %v563, %v559
    %v616 = vpack.c.b16 %v564, %v560
    %v617 = vpack.c.b16 %v569, %v565
    %v618 = vpack.c.b16 %v570, %v566
    %v619 = vpack.c.b16 %v571, %v567
    %v620 = vpack.c.b16 %v572, %v568
    %v621 = vpack.c.b16 %v577, %v573
    %v622 = vpack.c.b16 %v578, %v574
    %v623 = vpack.c.b16 %v579, %v575
    %v624 = vpack.c.b16 %v580, %v576
    %v625 = vpack.c.b16 %v585, %v581
    %v626 = vpack.c.b16 %v586, %v582
    %v627 = vpack.c.b16 %v587, %v583
    %v628 = vpack.c.b16 %v588, %v584
    %v629 = vpack.c.b16 %v593, %v589
    %v630 = vpack.c.b16 %v594, %v590
    %v631 = vpack.c.b16 %v595, %v591
    %v632 = vpack.c.b16 %v596, %v592
    %v633 = vpack.c.b16 %v601, %v597
    %v634 = vpack.c.b16 %v602, %v598
    %v635 = vpack.c.b16 %v603, %v599
    %v636 = vpack.c.b16 %v604, %v600
    %669 = vmatprep.subr.bf16.mxu0 %v606
    %670 = vmatpush1.bf16.msra.mxu0 %v605
    %671 = vmatprep.subr.bf16.mxu0 %v610
    %672 = vmatpush1.bf16.msra.mxu0 %v609
    %673 = vmatprep.subr.bf16.mxu0 %v614
    %674 = vmatpush1.bf16.msra.mxu0 %v613
    %675 = vmatprep.subr.bf16.mxu0 %v618
    %676 = vmatpush1.bf16.msra.mxu0 %v617
    %677 = vmatprep.subr.bf16.mxu0 %v622
    %678 = vmatpush1.bf16.msra.mxu0 %v621
    %679 = vmatprep.subr.bf16.mxu0 %v626
    %680 = vmatpush1.bf16.msra.mxu0 %v625
    %681 = vmatprep.subr.bf16.mxu0 %v630
    %682 = vmatpush1.bf16.msra.mxu0 %v629
    %683 = vmatprep.subr.bf16.mxu0 %v634
    %684 = vmatpush1.bf16.msra.mxu0 %v633
    %685 = vmatprep.subr.bf16.mxu0 0
    %686 = vmatpush1.bf16.msra.mxu0 0
    %687 = vmatprep.subr.bf16.mxu0 0
    %688 = vmatpush1.bf16.msra.mxu0 0
    %689 = vmatprep.subr.bf16.mxu0 0
    %690 = vmatpush1.bf16.msra.mxu0 0
    %691 = vmatprep.subr.bf16.mxu0 0
    %692 = vmatpush1.bf16.msra.mxu0 0
    %693 = vmatprep.subr.bf16.mxu0 0
    %694 = vmatpush1.bf16.msra.mxu0 0
    %695 = vmatprep.subr.bf16.mxu0 0
    %696 = vmatpush1.bf16.msra.mxu0 0
    %697 = vmatprep.subr.bf16.mxu0 0
    %698 = vmatpush1.bf16.msra.mxu0 0
    %699 = vmatprep.subr.bf16.mxu0 0
    %700 = vmatpush1.bf16.msra.mxu0 0
    %701 = vmatprep.mubr.bf16.mxu0 0
    %702 = vmatmul.mubr.bf16.gmra.mrb[0].mxu0 0
    %v703 = vpop.f32.mrb[0].mxu0
    %v704 = vadd.f32 0.0, %v703
    %v705 = vpop.f32.mrb[0].mxu0
    %v706 = vadd.f32 0.0, %v705
    %v707 = vpop.f32.mrb[0].mxu0
    %v708 = vpop.f32.mrb[0].mxu0
    %709 = vdwg.mxu0
    %710 = vmatprep.subr.bf16.mxu0 %v608
    %711 = vmatpush1.bf16.msra.mxu0 %v607
    %712 = vmatprep.subr.bf16.mxu0 %v612
    %713 = vmatpush1.bf16.msra.mxu0 %v611
    %714 = vmatprep.subr.bf16.mxu0 %v616
    %715 = vmatpush1.bf16.msra.mxu0 %v615
    %716 = vmatprep.subr.bf16.mxu0 %v620
    %717 = vmatpush1.bf16.msra.mxu0 %v619
    %718 = vmatprep.subr.bf16.mxu0 %v624
    %719 = vmatpush1.bf16.msra.mxu0 %v623
    %720 = vmatprep.subr.bf16.mxu0 %v628
    %721 = vmatpush1.bf16.msra.mxu0 %v627
    %722 = vmatprep.subr.bf16.mxu0 %v632
    %723 = vmatpush1.bf16.msra.mxu0 %v631
    %724 = vmatprep.subr.bf16.mxu0 %v636
    %725 = vmatpush1.bf16.msra.mxu0 %v635
    %726 = vmatprep.subr.bf16.mxu0 0
    %727 = vmatpush1.bf16.msra.mxu0 0
    %728 = vmatprep.subr.bf16.mxu0 0
    %729 = vmatpush1.bf16.msra.mxu0 0
    %730 = vmatprep.subr.bf16.mxu0 0
    %731 = vmatpush1.bf16.msra.mxu0 0
    %732 = vmatprep.subr.bf16.mxu0 0
    %733 = vmatpush1.bf16.msra.mxu0 0
    %734 = vmatprep.subr.bf16.mxu0 0
    %735 = vmatpush1.bf16.msra.mxu0 0
    %736 = vmatprep.subr.bf16.mxu0 0
    %737 = vmatpush1.bf16.msra.mxu0 0
    %738 = vmatprep.subr.bf16.mxu0 0
    %739 = vmatpush1.bf16.msra.mxu0 0
    %740 = vmatprep.subr.bf16.mxu0 0
    %741 = vmatpush1.bf16.msra.mxu0 0
    %742 = vmatprep.mubr.bf16.mxu0 0
    %743 = vmatmul.mubr.bf16.gmra.mrb[0].mxu0 0
    %v744 = vpop.f32.mrb[0].mxu0
    %v745 = vadd.f32 0.0, %v744
    %v746 = vpop.f32.mrb[0].mxu0
    %v747 = vadd.f32 0.0, %v746
    %v748 = vpop.f32.mrb[0].mxu0
    %v749 = vpop.f32.mrb[0].mxu0
    %750 = vdwg.mxu0
    %v751 = vadd.f32 %v505, %v704
    %v752 = vadd.f32 %v506, %v706
    %v753 = vadd.f32 %v507, %v745
    %v754 = vadd.f32 %v508, %v747
    %v755 = vxor.u32 %v751, 2147483648
    %v756 = vmul.f32 %v755, 1.442695
    %v757 = vpow.pop %v756
    %v758 = vadd.f32 %v757, 1.0
    %v759 = vrcp.pop %v758
    %v760 = vmul.f32 1.0, %v759
    %v761 = vxor.u32 %v752, 2147483648
    %v762 = vmul.f32 %v761, 1.442695
    %v763 = vpow.pop %v762
    %v764 = vadd.f32 %v763, 1.0
    %v765 = vrcp.pop %v764
    %v766 = vmul.f32 1.0, %v765
    %v767 = vtanh.pop %v753
    %v768 = vxor.u32 %v754, 2147483648
    %v769 = vmul.f32 %v768, 1.442695
    %v770 = vpow.pop %v769
    %v771 = vadd.f32 %v770, 1.0
    %v772 = vrcp.pop %v771
    %v773 = vmul.f32 1.0, %v772
    %v774 = vmul.f32 %v766, 0.0
    %v775 = vmul.f32 %v760, %v767
    %v776 = vadd.f32 %v774, %v775
    %v777 = vtanh.pop %v776
    %v778 = vmul.f32 %v773, %v777
    %v779 = vpack.c.bf16 %v778, %v778
    %780 = vst [vmem:[#allocation2] sm:$0xf] %v779
    %s781 = scalar_lea.vmem [#allocation3], 32
    %v782 = vld [vmem:[%s781] sm:$0xff]
    %v783 = vld [vmem:[%s781 + $0x8] sm:$0xff]
    %v784 = vld [vmem:[%s781 + $0x10] sm:$0xff]
    %v785 = vld [vmem:[%s781 + $0x18] sm:$0xff]
    %786 = vmatprep.subr.bf16.mxu0 %v606
    %787 = vmatpush1.bf16.msra.mxu0 %v605
    %788 = vmatprep.subr.bf16.mxu0 %v610
    %789 = vmatpush1.bf16.msra.mxu0 %v609
    %790 = vmatprep.subr.bf16.mxu0 %v614
    %791 = vmatpush1.bf16.msra.mxu0 %v613
    %792 = vmatprep.subr.bf16.mxu0 %v618
    %793 = vmatpush1.bf16.msra.mxu0 %v617
    %794 = vmatprep.subr.bf16.mxu0 %v622
    %795 = vmatpush1.bf16.msra.mxu0 %v621
    %796 = vmatprep.subr.bf16.mxu0 %v626
    %797 = vmatpush1.bf16.msra.mxu0 %v625
    %798 = vmatprep.subr.bf16.mxu0 %v630
    %799 = vmatpush1.bf16.msra.mxu0 %v629
    %800 = vmatprep.subr.bf16.mxu0 %v634
    %801 = vmatpush1.bf16.msra.mxu0 %v633
    %802 = vmatprep.subr.bf16.mxu0 0
    %803 = vmatpush1.bf16.msra.mxu0 0
    %804 = vmatprep.subr.bf16.mxu0 0
    %805 = vmatpush1.bf16.msra.mxu0 0
    %806 = vmatprep.subr.bf16.mxu0 0
    %807 = vmatpush1.bf16.msra.mxu0 0
    %808 = vmatprep.subr.bf16.mxu0 0
    %809 = vmatpush1.bf16.msra.mxu0 0
    %810 = vmatprep.subr.bf16.mxu0 0
    %811 = vmatpush1.bf16.msra.mxu0 0
    %812 = vmatprep.subr.bf16.mxu0 0
    %813 = vmatpush1.bf16.msra.mxu0 0
    %814 = vmatprep.subr.bf16.mxu0 0
    %815 = vmatpush1.bf16.msra.mxu0 0
    %816 = vmatprep.subr.bf16.mxu0 0
    %817 = vmatpush1.bf16.msra.mxu0 0
    %818 = vmatprep.mubr.bf16.mxu0 0
    %819 = vmatmul.mubr.bf16.gmra.mrb[0].mxu0 %v779
    %v820 = vpop.f32.mrb[0].mxu0
    %v821 = vadd.f32 0.0, %v820
    %v822 = vpop.f32.mrb[0].mxu0
    %v823 = vadd.f32 0.0, %v822
    %v824 = vpop.f32.mrb[0].mxu0
    %v825 = vpop.f32.mrb[0].mxu0
    %826 = vdwg.mxu0
    %827 = vmatprep.subr.bf16.mxu0 %v608
    %828 = vmatpush1.bf16.msra.mxu0 %v607
    %829 = vmatprep.subr.bf16.mxu0 %v612
    %830 = vmatpush1.bf16.msra.mxu0 %v611
    %831 = vmatprep.subr.bf16.mxu0 %v616
    %832 = vmatpush1.bf16.msra.mxu0 %v615
    %833 = vmatprep.subr.bf16.mxu0 %v620
    %834 = vmatpush1.bf16.msra.mxu0 %v619
    %835 = vmatprep.subr.bf16.mxu0 %v624
    %836 = vmatpush1.bf16.msra.mxu0 %v623
    %837 = vmatprep.subr.bf16.mxu0 %v628
    %838 = vmatpush1.bf16.msra.mxu0 %v627
    %839 = vmatprep.subr.bf16.mxu0 %v632
    %840 = vmatpush1.bf16.msra.mxu0 %v631
    %841 = vmatprep.subr.bf16.mxu0 %v636
    %842 = vmatpush1.bf16.msra.mxu0 %v635
    %843 = vmatprep.subr.bf16.mxu0 0
    %844 = vmatpush1.bf16.msra.mxu0 0
    %845 = vmatprep.subr.bf16.mxu0 0
    %846 = vmatpush1.bf16.msra.mxu0 0
    %847 = vmatprep.subr.bf16.mxu0 0
    %848 = vmatpush1.bf16.msra.mxu0 0
    %849 = vmatprep.subr.bf16.mxu0 0
    %850 = vmatpush1.bf16.msra.mxu0 0
    %851 = vmatprep.subr.bf16.mxu0 0
    %852 = vmatpush1.bf16.msra.mxu0 0
    %853 = vmatprep.subr.bf16.mxu0 0
    %854 = vmatpush1.bf16.msra.mxu0 0
    %855 = vmatprep.subr.bf16.mxu0 0
    %856 = vmatpush1.bf16.msra.mxu0 0
    %857 = vmatprep.subr.bf16.mxu0 0
    %858 = vmatpush1.bf16.msra.mxu0 0
    %859 = vmatprep.mubr.bf16.mxu0 0
    %860 = vmatmul.mubr.bf16.gmra.mrb[0].mxu0 %v779
    %v861 = vpop.f32.mrb[0].mxu0
    %v862 = vadd.f32 0.0, %v861
    %v863 = vpop.f32.mrb[0].mxu0
    %v864 = vadd.f32 0.0, %v863
    %v865 = vpop.f32.mrb[0].mxu0
    %v866 = vpop.f32.mrb[0].mxu0
    %867 = vdwg.mxu0
    %v868 = vadd.f32 %v782, %v821
    %v869 = vadd.f32 %v783, %v823
    %v870 = vadd.f32 %v784, %v862
    %v871 = vadd.f32 %v785, %v864
    %v872 = vxor.u32 %v868, 2147483648
    %v873 = vmul.f32 %v872, 1.442695
    %v874 = vpow.pop %v873
    %v875 = vadd.f32 %v874, 1.0
    %v876 = vrcp.pop %v875
    %v877 = vmul.f32 1.0, %v876
    %v878 = vxor.u32 %v869, 2147483648
    %v879 = vmul.f32 %v878, 1.442695
    %v880 = vpow.pop %v879
    %v881 = vadd.f32 %v880, 1.0
    %v882 = vrcp.pop %v881
    %v883 = vmul.f32 1.0, %v882
    %v884 = vtanh.pop %v870
    %v885 = vxor.u32 %v871, 2147483648
    %v886 = vmul.f32 %v885, 1.442695
    %v887 = vpow.pop %v886
    %v888 = vadd.f32 %v887, 1.0
    %v889 = vrcp.pop %v888
    %v890 = vmul.f32 1.0, %v889
    %v891 = vmul.f32 %v883, %v776
    %v892 = vmul.f32 %v877, %v884
    %v893 = vadd.f32 %v891, %v892
    %v894 = vtanh.pop %v893
    %v895 = vmul.f32 %v890, %v894
    %v896 = vpack.c.bf16 %v895, %v895
    %s897 = scalar_lea.vmem [#allocation2], 4
    %898 = vst [vmem:[%s897] sm:$0xf] %v896
    %s899 = scalar_lea.vmem [#allocation3], 64
    %v900 = vld [vmem:[%s899] sm:$0xff]
    %v901 = vld [vmem:[%s899 + $0x8] sm:$0xff]
    %v902 = vld [vmem:[%s899 + $0x10] sm:$0xff]
    %v903 = vld [vmem:[%s899 + $0x18] sm:$0xff]
    %904 = vmatprep.subr.bf16.mxu0 %v606
    %905 = vmatpush1.bf16.msra.mxu0 %v605
    %906 = vmatprep.subr.bf16.mxu0 %v610
    %907 = vmatpush1.bf16.msra.mxu0 %v609
    %908 = vmatprep.subr.bf16.mxu0 %v614
    %909 = vmatpush1.bf16.msra.mxu0 %v613
    %910 = vmatprep.subr.bf16.mxu0 %v618
    %911 = vmatpush1.bf16.msra.mxu0 %v617
    %912 = vmatprep.subr.bf16.mxu0 %v622
    %913 = vmatpush1.bf16.msra.mxu0 %v621
    %914 = vmatprep.subr.bf16.mxu0 %v626
    %915 = vmatpush1.bf16.msra.mxu0 %v625
    %916 = vmatprep.subr.bf16.mxu0 %v630
    %917 = vmatpush1.bf16.msra.mxu0 %v629
    %918 = vmatprep.subr.bf16.mxu0 %v634
    %919 = vmatpush1.bf16.msra.mxu0 %v633
    %920 = vmatprep.subr.bf16.mxu0 0
    %921 = vmatpush1.bf16.msra.mxu0 0
    %922 = vmatprep.subr.bf16.mxu0 0
    %923 = vmatpush1.bf16.msra.mxu0 0
    %924 = vmatprep.subr.bf16.mxu0 0
    %925 = vmatpush1.bf16.msra.mxu0 0
    %926 = vmatprep.subr.bf16.mxu0 0
    %927 = vmatpush1.bf16.msra.mxu0 0
    %928 = vmatprep.subr.bf16.mxu0 0
    %929 = vmatpush1.bf16.msra.mxu0 0
    %930 = vmatprep.subr.bf16.mxu0 0
    %931 = vmatpush1.bf16.msra.mxu0 0
    %932 = vmatprep.subr.bf16.mxu0 0
    %933 = vmatpush1.bf16.msra.mxu0 0
    %934 = vmatprep.subr.bf16.mxu0 0
    %935 = vmatpush1.bf16.msra.mxu0 0
    %936 = vmatprep.mubr.bf16.mxu0 0
    %937 = vmatmul.mubr.bf16.gmra.mrb[0].mxu0 %v896
    %v938 = vpop.f32.mrb[0].mxu0
    %v939 = vadd.f32 0.0, %v938
    %v940 = vpop.f32.mrb[0].mxu0
    %v941 = vadd.f32 0.0, %v940
    %v942 = vpop.f32.mrb[0].mxu0
    %v943 = vpop.f32.mrb[0].mxu0
    %944 = vdwg.mxu0
    %945 = vmatprep.subr.bf16.mxu0 %v608
    %946 = vmatpush1.bf16.msra.mxu0 %v607
    %947 = vmatprep.subr.bf16.mxu0 %v612
    %948 = vmatpush1.bf16.msra.mxu0 %v611
    %949 = vmatprep.subr.bf16.mxu0 %v616
    %950 = vmatpush1.bf16.msra.mxu0 %v615
    %951 = vmatprep.subr.bf16.mxu0 %v620
    %952 = vmatpush1.bf16.msra.mxu0 %v619
    %953 = vmatprep.subr.bf16.mxu0 %v624
    %954 = vmatpush1.bf16.msra.mxu0 %v623
    %955 = vmatprep.subr.bf16.mxu0 %v628
    %956 = vmatpush1.bf16.msra.mxu0 %v627
    %957 = vmatprep.subr.bf16.mxu0 %v632
    %958 = vmatpush1.bf16.msra.mxu0 %v631
    %959 = vmatprep.subr.bf16.mxu0 %v636
    %960 = vmatpush1.bf16.msra.mxu0 %v635
    %961 = vmatprep.subr.bf16.mxu0 0
    %962 = vmatpush1.bf16.msra.mxu0 0
    %963 = vmatprep.subr.bf16.mxu0 0
    %964 = vmatpush1.bf16.msra.mxu0 0
    %965 = vmatprep.subr.bf16.mxu0 0
    %966 = vmatpush1.bf16.msra.mxu0 0
    %967 = vmatprep.subr.bf16.mxu0 0
    %968 = vmatpush1.bf16.msra.mxu0 0
    %969 = vmatprep.subr.bf16.mxu0 0
    %970 = vmatpush1.bf16.msra.mxu0 0
    %971 = vmatprep.subr.bf16.mxu0 0
    %972 = vmatpush1.bf16.msra.mxu0 0
    %973 = vmatprep.subr.bf16.mxu0 0
    %974 = vmatpush1.bf16.msra.mxu0 0
    %975 = vmatprep.subr.bf16.mxu0 0
    %976 = vmatpush1.bf16.msra.mxu0 0
    %977 = vmatprep.mubr.bf16.mxu0 0
    %978 = vmatmul.mubr.bf16.gmra.mrb[0].mxu0 %v896
    %v979 = vpop.f32.mrb[0].mxu0
    %v980 = vadd.f32 0.0, %v979
    %v981 = vpop.f32.mrb[0].mxu0
    %v982 = vadd.f32 0.0, %v981
    %v983 = vpop.f32.mrb[0].mxu0
    %v984 = vpop.f32.mrb[0].mxu0
    %985 = vdwg.mxu0
    %v986 = vadd.f32 %v900, %v939
    %v987 = vadd.f32 %v901, %v941
    %v988 = vadd.f32 %v902, %v980
    %v989 = vadd.f32 %v903, %v982
    %v990 = vxor.u32 %v986, 2147483648
    %v991 = vmul.f32 %v990, 1.442695
    %v992 = vpow.pop %v991
    %v993 = vadd.f32 %v992, 1.0
    %v994 = vrcp.pop %v993
    %v995 = vmul.f32 1.0, %v994
    %v996 = vxor.u32 %v987, 2147483648
    %v997 = vmul.f32 %v996, 1.442695
    %v998 = vpow.pop %v997
    %v999 = vadd.f32 %v998, 1.0
    %v1000 = vrcp.pop %v999
    %v1001 = vmul.f32 1.0, %v1000
    %v1002 = vtanh.pop %v988
    %v1003 = vxor.u32 %v989, 2147483648
    %v1004 = vmul.f32 %v1003, 1.442695
    %v1005 = vpow.pop %v1004
    %v1006 = vadd.f32 %v1005, 1.0
    %v1007 = vrcp.pop %v1006
    %v1008 = vmul.f32 1.0, %v1007
    %v1009 = vmul.f32 %v1001, %v893
    %v1010 = vmul.f32 %v995, %v1002
    %v1011 = vadd.f32 %v1009, %v1010
    %v1012 = vtanh.pop %v1011
    %v1013 = vmul.f32 %v1008, %v1012
    %v1014 = vpack.c.bf16 %v1013, %v1013
    %s1015 = scalar_lea.vmem [#allocation2], 8
    %1016 = vst [vmem:[%s1015] sm:$0xf] %v1014
    %s1017 = scalar_lea.vmem [#allocation3], 96
    %v1018 = vld [vmem:[%s1017] sm:$0xff]
    %v1019 = vld [vmem:[%s1017 + $0x8] sm:$0xff]
    %v1020 = vld [vmem:[%s1017 + $0x10] sm:$0xff]
    %v1021 = vld [vmem:[%s1017 + $0x18] sm:$0xff]
    %1022 = vmatprep.subr.bf16.mxu0 %v606
    %1023 = vmatpush1.bf16.msra.mxu0 %v605
    %1024 = vmatprep.subr.bf16.mxu0 %v610
    %1025 = vmatpush1.bf16.msra.mxu0 %v609
    %1026 = vmatprep.subr.bf16.mxu0 %v614
    %1027 = vmatpush1.bf16.msra.mxu0 %v613
    %1028 = vmatprep.subr.bf16.mxu0 %v618
    %1029 = vmatpush1.bf16.msra.mxu0 %v617
    %1030 = vmatprep.subr.bf16.mxu0 %v622
    %1031 = vmatpush1.bf16.msra.mxu0 %v621
    %1032 = vmatprep.subr.bf16.mxu0 %v626
    %1033 = vmatpush1.bf16.msra.mxu0 %v625
    %1034 = vmatprep.subr.bf16.mxu0 %v630
    %1035 = vmatpush1.bf16.msra.mxu0 %v629
    %1036 = vmatprep.subr.bf16.mxu0 %v634
    %1037 = vmatpush1.bf16.msra.mxu0 %v633
    %1038 = vmatprep.subr.bf16.mxu0 0
    %1039 = vmatpush1.bf16.msra.mxu0 0
    %1040 = vmatprep.subr.bf16.mxu0 0
    %1041 = vmatpush1.bf16.msra.mxu0 0
    %1042 = vmatprep.subr.bf16.mxu0 0
    %1043 = vmatpush1.bf16.msra.mxu0 0
    %1044 = vmatprep.subr.bf16.mxu0 0
    %1045 = vmatpush1.bf16.msra.mxu0 0
    %1046 = vmatprep.subr.bf16.mxu0 0
    %1047 = vmatpush1.bf16.msra.mxu0 0
    %1048 = vmatprep.subr.bf16.mxu0 0
    %1049 = vmatpush1.bf16.msra.mxu0 0
    %1050 = vmatprep.subr.bf16.mxu0 0
    %1051 = vmatpush1.bf16.msra.mxu0 0
    %1052 = vmatprep.subr.bf16.mxu0 0
    %1053 = vmatpush1.bf16.msra.mxu0 0
    %1054 = vmatprep.mubr.bf16.mxu0 0
    %1055 = vmatmul.mubr.bf16.gmra.mrb[0].mxu0 %v1014
    %v1056 = vpop.f32.mrb[0].mxu0
    %v1057 = vadd.f32 0.0, %v1056
    %v1058 = vpop.f32.mrb[0].mxu0
    %v1059 = vadd.f32 0.0, %v1058
    %v1060 = vpop.f32.mrb[0].mxu0
    %v1061 = vpop.f32.mrb[0].mxu0
    %1062 = vdwg.mxu0
    %1063 = vmatprep.subr.bf16.mxu0 %v608
    %1064 = vmatpush1.bf16.msra.mxu0 %v607
    %1065 = vmatprep.subr.bf16.mxu0 %v612
    %1066 = vmatpush1.bf16.msra.mxu0 %v611
    %1067 = vmatprep.subr.bf16.mxu0 %v616
    %1068 = vmatpush1.bf16.msra.mxu0 %v615
    %1069 = vmatprep.subr.bf16.mxu0 %v620
    %1070 = vmatpush1.bf16.msra.mxu0 %v619
    %1071 = vmatprep.subr.bf16.mxu0 %v624
    %1072 = vmatpush1.bf16.msra.mxu0 %v623
    %1073 = vmatprep.subr.bf16.mxu0 %v628
    %1074 = vmatpush1.bf16.msra.mxu0 %v627
    %1075 = vmatprep.subr.bf16.mxu0 %v632
    %1076 = vmatpush1.bf16.msra.mxu0 %v631
    %1077 = vmatprep.subr.bf16.mxu0 %v636
    %1078 = vmatpush1.bf16.msra.mxu0 %v635
    %1079 = vmatprep.subr.bf16.mxu0 0
    %1080 = vmatpush1.bf16.msra.mxu0 0
    %1081 = vmatprep.subr.bf16.mxu0 0
    %1082 = vmatpush1.bf16.msra.mxu0 0
    %1083 = vmatprep.subr.bf16.mxu0 0
    %1084 = vmatpush1.bf16.msra.mxu0 0
    %1085 = vmatprep.subr.bf16.mxu0 0
    %1086 = vmatpush1.bf16.msra.mxu0 0
    %1087 = vmatprep.subr.bf16.mxu0 0
    %1088 = vmatpush1.bf16.msra.mxu0 0
    %1089 = vmatprep.subr.bf16.mxu0 0
    %1090 = vmatpush1.bf16.msra.mxu0 0
    %1091 = vmatprep.subr.bf16.mxu0 0
    %1092 = vmatpush1.bf16.msra.mxu0 0
    %1093 = vmatprep.subr.bf16.mxu0 0
    %1094 = vmatpush1.bf16.msra.mxu0 0
    %1095 = vmatprep.mubr.bf16.mxu0 0
    %1096 = vmatmul.mubr.bf16.gmra.mrb[0].mxu0 %v1014
    %v1097 = vpop.f32.mrb[0].mxu0
    %v1098 = vadd.f32 0.0, %v1097
    %v1099 = vpop.f32.mrb[0].mxu0
    %v1100 = vadd.f32 0.0, %v1099
    %v1101 = vpop.f32.mrb[0].mxu0
    %v1102 = vpop.f32.mrb[0].mxu0
    %1103 = vdwg.mxu0
    %v1104 = vadd.f32 %v1018, %v1057
    %v1105 = vadd.f32 %v1019, %v1059
    %v1106 = vadd.f32 %v1020, %v1098
    %v1107 = vadd.f32 %v1021, %v1100
    %v1108 = vxor.u32 %v1104, 2147483648
    %v1109 = vmul.f32 %v1108, 1.442695
    %v1110 = vpow.pop %v1109
    %v1111 = vadd.f32 %v1110, 1.0
    %v1112 = vrcp.pop %v1111
    %v1113 = vmul.f32 1.0, %v1112
    %v1114 = vxor.u32 %v1105, 2147483648
    %v1115 = vmul.f32 %v1114, 1.442695
    %v1116 = vpow.pop %v1115
    %v1117 = vadd.f32 %v1116, 1.0
    %v1118 = vrcp.pop %v1117
    %v1119 = vmul.f32 1.0, %v1118
    %v1120 = vtanh.pop %v1106
    %v1121 = vxor.u32 %v1107, 2147483648
    %v1122 = vmul.f32 %v1121, 1.442695
    %v1123 = vpow.pop %v1122
    %v1124 = vadd.f32 %v1123, 1.0
    %v1125 = vrcp.pop %v1124
    %v1126 = vmul.f32 1.0, %v1125
    %v1127 = vmul.f32 %v1119, %v1011
    %v1128 = vmul.f32 %v1113, %v1120
    %v1129 = vadd.f32 %v1127, %v1128
    %v1130 = vtanh.pop %v1129
    %v1131 = vmul.f32 %v1126, %v1130
    %v1132 = vpack.c.bf16 %v1131, %v1131
    %s1133 = scalar_lea.vmem [#allocation2], 12
    %1134 = vst [vmem:[%s1133] sm:$0xf] %v1132
    %s1135 = scalar_lea.vmem [#allocation3], 128
    %v1136 = vld [vmem:[%s1135] sm:$0xff]
    %v1137 = vld [vmem:[%s1135 + $0x8] sm:$0xff]
    %v1138 = vld [vmem:[%s1135 + $0x10] sm:$0xff]
    %v1139 = vld [vmem:[%s1135 + $0x18] sm:$0xff]
    %1140 = vmatprep.subr.bf16.mxu0 %v606
    %1141 = vmatpush1.bf16.msra.mxu0 %v605
    %1142 = vmatprep.subr.bf16.mxu0 %v610
    %1143 = vmatpush1.bf16.msra.mxu0 %v609
    %1144 = vmatprep.subr.bf16.mxu0 %v614
    %1145 = vmatpush1.bf16.msra.mxu0 %v613
    %1146 = vmatprep.subr.bf16.mxu0 %v618
    %1147 = vmatpush1.bf16.msra.mxu0 %v617
    %1148 = vmatprep.subr.bf16.mxu0 %v622
    %1149 = vmatpush1.bf16.msra.mxu0 %v621
    %1150 = vmatprep.subr.bf16.mxu0 %v626
    %1151 = vmatpush1.bf16.msra.mxu0 %v625
    %1152 = vmatprep.subr.bf16.mxu0 %v630
    %1153 = vmatpush1.bf16.msra.mxu0 %v629
    %1154 = vmatprep.subr.bf16.mxu0 %v634
    %1155 = vmatpush1.bf16.msra.mxu0 %v633
    %1156 = vmatprep.subr.bf16.mxu0 0
    %1157 = vmatpush1.bf16.msra.mxu0 0
    %1158 = vmatprep.subr.bf16.mxu0 0
    %1159 = vmatpush1.bf16.msra.mxu0 0
    %1160 = vmatprep.subr.bf16.mxu0 0
    %1161 = vmatpush1.bf16.msra.mxu0 0
    %1162 = vmatprep.subr.bf16.mxu0 0
    %1163 = vmatpush1.bf16.msra.mxu0 0
    %1164 = vmatprep.subr.bf16.mxu0 0
    %1165 = vmatpush1.bf16.msra.mxu0 0
    %1166 = vmatprep.subr.bf16.mxu0 0
    %1167 = vmatpush1.bf16.msra.mxu0 0
    %1168 = vmatprep.subr.bf16.mxu0 0
    %1169 = vmatpush1.bf16.msra.mxu0 0
    %1170 = vmatprep.subr.bf16.mxu0 0
    %1171 = vmatpush1.bf16.msra.mxu0 0
    %1172 = vmatprep.mubr.bf16.mxu0 0
    %1173 = vmatmul.mubr.bf16.gmra.mrb[0].mxu0 %v1132
    %v1174 = vpop.f32.mrb[0].mxu0
    %v1175 = vadd.f32 0.0, %v1174
    %v1176 = vpop.f32.mrb[0].mxu0
    %v1177 = vadd.f32 0.0, %v1176
    %v1178 = vpop.f32.mrb[0].mxu0
    %v1179 = vpop.f32.mrb[0].mxu0
    %1180 = vdwg.mxu0
    %1181 = vmatprep.subr.bf16.mxu0 %v608
    %1182 = vmatpush1.bf16.msra.mxu0 %v607
    %1183 = vmatprep.subr.bf16.mxu0 %v612
    %1184 = vmatpush1.bf16.msra.mxu0 %v611
    %1185 = vmatprep.subr.bf16.mxu0 %v616
    %1186 = vmatpush1.bf16.msra.mxu0 %v615
    %1187 = vmatprep.subr.bf16.mxu0 %v620
    %1188 = vmatpush1.bf16.msra.mxu0 %v619
    %1189 = vmatprep.subr.bf16.mxu0 %v624
    %1190 = vmatpush1.bf16.msra.mxu0 %v623
    %1191 = vmatprep.subr.bf16.mxu0 %v628
    %1192 = vmatpush1.bf16.msra.mxu0 %v627
    %1193 = vmatprep.subr.bf16.mxu0 %v632
    %1194 = vmatpush1.bf16.msra.mxu0 %v631
    %1195 = vmatprep.subr.bf16.mxu0 %v636
    %1196 = vmatpush1.bf16.msra.mxu0 %v635
    %1197 = vmatprep.subr.bf16.mxu0 0
    %1198 = vmatpush1.bf16.msra.mxu0 0
    %1199 = vmatprep.subr.bf16.mxu0 0
    %1200 = vmatpush1.bf16.msra.mxu0 0
    %1201 = vmatprep.subr.bf16.mxu0 0
    %1202 = vmatpush1.bf16.msra.mxu0 0
    %1203 = vmatprep.subr.bf16.mxu0 0
    %1204 = vmatpush1.bf16.msra.mxu0 0
    %1205 = vmatprep.subr.bf16.mxu0 0
    %1206 = vmatpush1.bf16.msra.mxu0 0
    %1207 = vmatprep.subr.bf16.mxu0 0
    %1208 = vmatpush1.bf16.msra.mxu0 0
    %1209 = vmatprep.subr.bf16.mxu0 0
    %1210 = vmatpush1.bf16.msra.mxu0 0
    %1211 = vmatprep.subr.bf16.mxu0 0
    %1212 = vmatpush1.bf16.msra.mxu0 0
    %1213 = vmatprep.mubr.bf16.mxu0 0
    %1214 = vmatmul.mubr.bf16.gmra.mrb[0].mxu0 %v1132
    %v1215 = vpop.f32.mrb[0].mxu0
    %v1216 = vadd.f32 0.0, %v1215
    %v1217 = vpop.f32.mrb[0].mxu0
    %v1218 = vadd.f32 0.0, %v1217
    %v1219 = vpop.f32.mrb[0].mxu0
    %v1220 = vpop.f32.mrb[0].mxu0
    %1221 = vdwg.mxu0
    %v1222 = vadd.f32 %v1136, %v1175
    %v1223 = vadd.f32 %v1137, %v1177
    %v1224 = vadd.f32 %v1138, %v1216
    %v1225 = vadd.f32 %v1139, %v1218
    %v1226 = vxor.u32 %v1222, 2147483648
    %v1227 = vmul.f32 %v1226, 1.442695
    %v1228 = vpow.pop %v1227
    %v1229 = vadd.f32 %v1228, 1.0
    %v1230 = vrcp.pop %v1229
    %v1231 = vmul.f32 1.0, %v1230
    %v1232 = vxor.u32 %v1223, 2147483648
    %v1233 = vmul.f32 %v1232, 1.442695
    %v1234 = vpow.pop %v1233
    %v1235 = vadd.f32 %v1234, 1.0
    %v1236 = vrcp.pop %v1235
    %v1237 = vmul.f32 1.0, %v1236
    %v1238 = vtanh.pop %v1224
    %v1239 = vxor.u32 %v1225, 2147483648
    %v1240 = vmul.f32 %v1239, 1.442695
    %v1241 = vpow.pop %v1240
    %v1242 = vadd.f32 %v1241, 1.0
    %v1243 = vrcp.pop %v1242
    %v1244 = vmul.f32 1.0, %v1243
    %v1245 = vmul.f32 %v1237, %v1129
    %v1246 = vmul.f32 %v1231, %v1238
    %v1247 = vadd.f32 %v1245, %v1246
    %v1248 = vtanh.pop %v1247
    %v1249 = vmul.f32 %v1244, %v1248
    %v1250 = vpack.c.bf16 %v1249, %v1249
    %s1251 = scalar_lea.vmem [#allocation2], 16
    %1252 = vst [vmem:[%s1251] sm:$0xf] %v1250
    %s1253 = scalar_lea.vmem [#allocation3], 160
    %v1254 = vld [vmem:[%s1253] sm:$0xff]
    %v1255 = vld [vmem:[%s1253 + $0x8] sm:$0xff]
    %v1256 = vld [vmem:[%s1253 + $0x10] sm:$0xff]
    %v1257 = vld [vmem:[%s1253 + $0x18] sm:$0xff]
    %1258 = vmatprep.subr.bf16.mxu0 %v606
    %1259 = vmatpush1.bf16.msra.mxu0 %v605
    %1260 = vmatprep.subr.bf16.mxu0 %v610
    %1261 = vmatpush1.bf16.msra.mxu0 %v609
    %1262 = vmatprep.subr.bf16.mxu0 %v614
    %1263 = vmatpush1.bf16.msra.mxu0 %v613
    %1264 = vmatprep.subr.bf16.mxu0 %v618
    %1265 = vmatpush1.bf16.msra.mxu0 %v617
    %1266 = vmatprep.subr.bf16.mxu0 %v622
    %1267 = vmatpush1.bf16.msra.mxu0 %v621
    %1268 = vmatprep.subr.bf16.mxu0 %v626
    %1269 = vmatpush1.bf16.msra.mxu0 %v625
    %1270 = vmatprep.subr.bf16.mxu0 %v630
    %1271 = vmatpush1.bf16.msra.mxu0 %v629
    %1272 = vmatprep.subr.bf16.mxu0 %v634
    %1273 = vmatpush1.bf16.msra.mxu0 %v633
    %1274 = vmatprep.subr.bf16.mxu0 0
    %1275 = vmatpush1.bf16.msra.mxu0 0
    %1276 = vmatprep.subr.bf16.mxu0 0
    %1277 = vmatpush1.bf16.msra.mxu0 0
    %1278 = vmatprep.subr.bf16.mxu0 0
    %1279 = vmatpush1.bf16.msra.mxu0 0
    %1280 = vmatprep.subr.bf16.mxu0 0
    %1281 = vmatpush1.bf16.msra.mxu0 0
    %1282 = vmatprep.subr.bf16.mxu0 0
    %1283 = vmatpush1.bf16.msra.mxu0 0
    %1284 = vmatprep.subr.bf16.mxu0 0
    %1285 = vmatpush1.bf16.msra.mxu0 0
    %1286 = vmatprep.subr.bf16.mxu0 0
    %1287 = vmatpush1.bf16.msra.mxu0 0
    %1288 = vmatprep.subr.bf16.mxu0 0
    %1289 = vmatpush1.bf16.msra.mxu0 0
    %1290 = vmatprep.mubr.bf16.mxu0 0
    %1291 = vmatmul.mubr.bf16.gmra.mrb[0].mxu0 %v1250
    %v1292 = vpop.f32.mrb[0].mxu0
    %v1293 = vadd.f32 0.0, %v1292
    %v1294 = vpop.f32.mrb[0].mxu0
    %v1295 = vadd.f32 0.0, %v1294
    %v1296 = vpop.f32.mrb[0].mxu0
    %v1297 = vpop.f32.mrb[0].mxu0
    %1298 = vdwg.mxu0
    %1299 = vmatprep.subr.bf16.mxu0 %v608
    %1300 = vmatpush1.bf16.msra.mxu0 %v607
    %1301 = vmatprep.subr.bf16.mxu0 %v612
    %1302 = vmatpush1.bf16.msra.mxu0 %v611
    %1303 = vmatprep.subr.bf16.mxu0 %v616
    %1304 = vmatpush1.bf16.msra.mxu0 %v615
    %1305 = vmatprep.subr.bf16.mxu0 %v620
    %1306 = vmatpush1.bf16.msra.mxu0 %v619
    %1307 = vmatprep.subr.bf16.mxu0 %v624
    %1308 = vmatpush1.bf16.msra.mxu0 %v623
    %1309 = vmatprep.subr.bf16.mxu0 %v628
    %1310 = vmatpush1.bf16.msra.mxu0 %v627
    %1311 = vmatprep.subr.bf16.mxu0 %v632
    %1312 = vmatpush1.bf16.msra.mxu0 %v631
    %1313 = vmatprep.subr.bf16.mxu0 %v636
    %1314 = vmatpush1.bf16.msra.mxu0 %v635
    %1315 = vmatprep.subr.bf16.mxu0 0
    %1316 = vmatpush1.bf16.msra.mxu0 0
    %1317 = vmatprep.subr.bf16.mxu0 0
    %1318 = vmatpush1.bf16.msra.mxu0 0
    %1319 = vmatprep.subr.bf16.mxu0 0
    %1320 = vmatpush1.bf16.msra.mxu0 0
    %1321 = vmatprep.subr.bf16.mxu0 0
    %1322 = vmatpush1.bf16.msra.mxu0 0
    %1323 = vmatprep.subr.bf16.mxu0 0
    %1324 = vmatpush1.bf16.msra.mxu0 0
    %1325 = vmatprep.subr.bf16.mxu0 0
    %1326 = vmatpush1.bf16.msra.mxu0 0
    %1327 = vmatprep.subr.bf16.mxu0 0
    %1328 = vmatpush1.bf16.msra.mxu0 0
    %1329 = vmatprep.subr.bf16.mxu0 0
    %1330 = vmatpush1.bf16.msra.mxu0 0
    %1331 = vmatprep.mubr.bf16.mxu0 0
    %1332 = vmatmul.mubr.bf16.gmra.mrb[0].mxu0 %v1250
    %v1333 = vpop.f32.mrb[0].mxu0
    %v1334 = vadd.f32 0.0, %v1333
    %v1335 = vpop.f32.mrb[0].mxu0
    %v1336 = vadd.f32 0.0, %v1335
    %v1337 = vpop.f32.mrb[0].mxu0
    %v1338 = vpop.f32.mrb[0].mxu0
    %1339 = vdwg.mxu0
    %v1340 = vadd.f32 %v1254, %v1293
    %v1341 = vadd.f32 %v1255, %v1295
    %v1342 = vadd.f32 %v1256, %v1334
    %v1343 = vadd.f32 %v1257, %v1336
    %v1344 = vxor.u32 %v1340, 2147483648
    %v1345 = vmul.f32 %v1344, 1.442695
    %v1346 = vpow.pop %v1345
    %v1347 = vadd.f32 %v1346, 1.0
    %v1348 = vrcp.pop %v1347
    %v1349 = vmul.f32 1.0, %v1348
    %v1350 = vxor.u32 %v1341, 2147483648
    %v1351 = vmul.f32 %v1350, 1.442695
    %v1352 = vpow.pop %v1351
    %v1353 = vadd.f32 %v1352, 1.0
    %v1354 = vrcp.pop %v1353
    %v1355 = vmul.f32 1.0, %v1354
    %v1356 = vtanh.pop %v1342
    %v1357 = vxor.u32 %v1343, 2147483648
    %v1358 = vmul.f32 %v1357, 1.442695
    %v1359 = vpow.pop %v1358
    %v1360 = vadd.f32 %v1359, 1.0
    %v1361 = vrcp.pop %v1360
    %v1362 = vmul.f32 1.0, %v1361
    %v1363 = vmul.f32 %v1355, %v1247
    %v1364 = vmul.f32 %v1349, %v1356
    %v1365 = vadd.f32 %v1363, %v1364
    %v1366 = vtanh.pop %v1365
    %v1367 = vmul.f32 %v1362, %v1366
    %v1368 = vpack.c.bf16 %v1367, %v1367
    %s1369 = scalar_lea.vmem [#allocation2], 20
    %1370 = vst [vmem:[%s1369] sm:$0xf] %v1368
    %s1371 = scalar_lea.vmem [#allocation3], 192
    %v1372 = vld [vmem:[%s1371] sm:$0xff]
    %v1373 = vld [vmem:[%s1371 + $0x8] sm:$0xff]
    %v1374 = vld [vmem:[%s1371 + $0x10] sm:$0xff]
    %v1375 = vld [vmem:[%s1371 + $0x18] sm:$0xff]
    %1376 = vmatprep.subr.bf16.mxu0 %v606
    %1377 = vmatpush1.bf16.msra.mxu0 %v605
    %1378 = vmatprep.subr.bf16.mxu0 %v610
    %1379 = vmatpush1.bf16.msra.mxu0 %v609
    %1380 = vmatprep.subr.bf16.mxu0 %v614
    %1381 = vmatpush1.bf16.msra.mxu0 %v613
    %1382 = vmatprep.subr.bf16.mxu0 %v618
    %1383 = vmatpush1.bf16.msra.mxu0 %v617
    %1384 = vmatprep.subr.bf16.mxu0 %v622
    %1385 = vmatpush1.bf16.msra.mxu0 %v621
    %1386 = vmatprep.subr.bf16.mxu0 %v626
    %1387 = vmatpush1.bf16.msra.mxu0 %v625
    %1388 = vmatprep.subr.bf16.mxu0 %v630
    %1389 = vmatpush1.bf16.msra.mxu0 %v629
    %1390 = vmatprep.subr.bf16.mxu0 %v634
    %1391 = vmatpush1.bf16.msra.mxu0 %v633
    %1392 = vmatprep.subr.bf16.mxu0 0
    %1393 = vmatpush1.bf16.msra.mxu0 0
    %1394 = vmatprep.subr.bf16.mxu0 0
    %1395 = vmatpush1.bf16.msra.mxu0 0
    %1396 = vmatprep.subr.bf16.mxu0 0
    %1397 = vmatpush1.bf16.msra.mxu0 0
    %1398 = vmatprep.subr.bf16.mxu0 0
    %1399 = vmatpush1.bf16.msra.mxu0 0
    %1400 = vmatprep.subr.bf16.mxu0 0
    %1401 = vmatpush1.bf16.msra.mxu0 0
    %1402 = vmatprep.subr.bf16.mxu0 0
    %1403 = vmatpush1.bf16.msra.mxu0 0
    %1404 = vmatprep.subr.bf16.mxu0 0
    %1405 = vmatpush1.bf16.msra.mxu0 0
    %1406 = vmatprep.subr.bf16.mxu0 0
    %1407 = vmatpush1.bf16.msra.mxu0 0
    %1408 = vmatprep.mubr.bf16.mxu0 0
    %1409 = vmatmul.mubr.bf16.gmra.mrb[0].mxu0 %v1368
    %v1410 = vpop.f32.mrb[0].mxu0
    %v1411 = vadd.f32 0.0, %v1410
    %v1412 = vpop.f32.mrb[0].mxu0
    %v1413 = vadd.f32 0.0, %v1412
    %v1414 = vpop.f32.mrb[0].mxu0
    %v1415 = vpop.f32.mrb[0].mxu0
    %1416 = vdwg.mxu0
    %1417 = vmatprep.subr.bf16.mxu0 %v608
    %1418 = vmatpush1.bf16.msra.mxu0 %v607
    %1419 = vmatprep.subr.bf16.mxu0 %v612
    %1420 = vmatpush1.bf16.msra.mxu0 %v611
    %1421 = vmatprep.subr.bf16.mxu0 %v616
    %1422 = vmatpush1.bf16.msra.mxu0 %v615
    %1423 = vmatprep.subr.bf16.mxu0 %v620
    %1424 = vmatpush1.bf16.msra.mxu0 %v619
    %1425 = vmatprep.subr.bf16.mxu0 %v624
    %1426 = vmatpush1.bf16.msra.mxu0 %v623
    %1427 = vmatprep.subr.bf16.mxu0 %v628
    %1428 = vmatpush1.bf16.msra.mxu0 %v627
    %1429 = vmatprep.subr.bf16.mxu0 %v632
    %1430 = vmatpush1.bf16.msra.mxu0 %v631
    %1431 = vmatprep.subr.bf16.mxu0 %v636
    %1432 = vmatpush1.bf16.msra.mxu0 %v635
    %1433 = vmatprep.subr.bf16.mxu0 0
    %1434 = vmatpush1.bf16.msra.mxu0 0
    %1435 = vmatprep.subr.bf16.mxu0 0
    %1436 = vmatpush1.bf16.msra.mxu0 0
    %1437 = vmatprep.subr.bf16.mxu0 0
    %1438 = vmatpush1.bf16.msra.mxu0 0
    %1439 = vmatprep.subr.bf16.mxu0 0
    %1440 = vmatpush1.bf16.msra.mxu0 0
    %1441 = vmatprep.subr.bf16.mxu0 0
    %1442 = vmatpush1.bf16.msra.mxu0 0
    %1443 = vmatprep.subr.bf16.mxu0 0
    %1444 = vmatpush1.bf16.msra.mxu0 0
    %1445 = vmatprep.subr.bf16.mxu0 0
    %1446 = vmatpush1.bf16.msra.mxu0 0
    %1447 = vmatprep.subr.bf16.mxu0 0
    %1448 = vmatpush1.bf16.msra.mxu0 0
    %1449 = vmatprep.mubr.bf16.mxu0 0
    %1450 = vmatmul.mubr.bf16.gmra.mrb[0].mxu0 %v1368
    %v1451 = vpop.f32.mrb[0].mxu0
    %v1452 = vadd.f32 0.0, %v1451
    %v1453 = vpop.f32.mrb[0].mxu0
    %v1454 = vadd.f32 0.0, %v1453
    %v1455 = vpop.f32.mrb[0].mxu0
    %v1456 = vpop.f32.mrb[0].mxu0
    %1457 = vdwg.mxu0
    %v1458 = vadd.f32 %v1372, %v1411
    %v1459 = vadd.f32 %v1373, %v1413
    %v1460 = vadd.f32 %v1374, %v1452
    %v1461 = vadd.f32 %v1375, %v1454
    %v1462 = vxor.u32 %v1458, 2147483648
    %v1463 = vmul.f32 %v1462, 1.442695
    %v1464 = vpow.pop %v1463
    %v1465 = vadd.f32 %v1464, 1.0
    %v1466 = vrcp.pop %v1465
    %v1467 = vmul.f32 1.0, %v1466
    %v1468 = vxor.u32 %v1459, 2147483648
    %v1469 = vmul.f32 %v1468, 1.442695
    %v1470 = vpow.pop %v1469
    %v1471 = vadd.f32 %v1470, 1.0
    %v1472 = vrcp.pop %v1471
    %v1473 = vmul.f32 1.0, %v1472
    %v1474 = vtanh.pop %v1460
    %v1475 = vxor.u32 %v1461, 2147483648
    %v1476 = vmul.f32 %v1475, 1.442695
    %v1477 = vpow.pop %v1476
    %v1478 = vadd.f32 %v1477, 1.0
    %v1479 = vrcp.pop %v1478
    %v1480 = vmul.f32 1.0, %v1479
    %v1481 = vmul.f32 %v1473, %v1365
    %v1482 = vmul.f32 %v1467, %v1474
    %v1483 = vadd.f32 %v1481, %v1482
    %v1484 = vtanh.pop %v1483
    %v1485 = vmul.f32 %v1480, %v1484
    %v1486 = vpack.c.bf16 %v1485, %v1485
    %s1487 = scalar_lea.vmem [#allocation2], 24
    %1488 = vst [vmem:[%s1487] sm:$0xf] %v1486
    %s1489 = scalar_lea.vmem [#allocation3], 224
    %v1490 = vld [vmem:[%s1489] sm:$0xff]
    %v1491 = vld [vmem:[%s1489 + $0x8] sm:$0xff]
    %v1492 = vld [vmem:[%s1489 + $0x10] sm:$0xff]
    %v1493 = vld [vmem:[%s1489 + $0x18] sm:$0xff]
    %1494 = vmatprep.subr.bf16.mxu0 %v606
    %1495 = vmatpush1.bf16.msra.mxu0 %v605
    %1496 = vmatprep.subr.bf16.mxu0 %v610
    %1497 = vmatpush1.bf16.msra.mxu0 %v609
    %1498 = vmatprep.subr.bf16.mxu0 %v614
    %1499 = vmatpush1.bf16.msra.mxu0 %v613
    %1500 = vmatprep.subr.bf16.mxu0 %v618
    %1501 = vmatpush1.bf16.msra.mxu0 %v617
    %1502 = vmatprep.subr.bf16.mxu0 %v622
    %1503 = vmatpush1.bf16.msra.mxu0 %v621
    %1504 = vmatprep.subr.bf16.mxu0 %v626
    %1505 = vmatpush1.bf16.msra.mxu0 %v625
    %1506 = vmatprep.subr.bf16.mxu0 %v630
    %1507 = vmatpush1.bf16.msra.mxu0 %v629
    %1508 = vmatprep.subr.bf16.mxu0 %v634
    %1509 = vmatpush1.bf16.msra.mxu0 %v633
    %1510 = vmatprep.subr.bf16.mxu0 0
    %1511 = vmatpush1.bf16.msra.mxu0 0
    %1512 = vmatprep.subr.bf16.mxu0 0
    %1513 = vmatpush1.bf16.msra.mxu0 0
    %1514 = vmatprep.subr.bf16.mxu0 0
    %1515 = vmatpush1.bf16.msra.mxu0 0
    %1516 = vmatprep.subr.bf16.mxu0 0
    %1517 = vmatpush1.bf16.msra.mxu0 0
    %1518 = vmatprep.subr.bf16.mxu0 0
    %1519 = vmatpush1.bf16.msra.mxu0 0
    %1520 = vmatprep.subr.bf16.mxu0 0
    %1521 = vmatpush1.bf16.msra.mxu0 0
    %1522 = vmatprep.subr.bf16.mxu0 0
    %1523 = vmatpush1.bf16.msra.mxu0 0
    %1524 = vmatprep.subr.bf16.mxu0 0
    %1525 = vmatpush1.bf16.msra.mxu0 0
    %1526 = vmatprep.mubr.bf16.mxu0 0
    %1527 = vmatmul.mubr.bf16.gmra.mrb[0].mxu0 %v1486
    %v1528 = vpop.f32.mrb[0].mxu0
    %v1529 = vadd.f32 0.0, %v1528
    %v1530 = vpop.f32.mrb[0].mxu0
    %v1531 = vadd.f32 0.0, %v1530
    %v1532 = vpop.f32.mrb[0].mxu0
    %v1533 = vpop.f32.mrb[0].mxu0
    %1534 = vdwg.mxu0
    %1535 = vmatprep.subr.bf16.mxu0 %v608
    %1536 = vmatpush1.bf16.msra.mxu0 %v607
    %1537 = vmatprep.subr.bf16.mxu0 %v612
    %1538 = vmatpush1.bf16.msra.mxu0 %v611
    %1539 = vmatprep.subr.bf16.mxu0 %v616
    %1540 = vmatpush1.bf16.msra.mxu0 %v615
    %1541 = vmatprep.subr.bf16.mxu0 %v620
    %1542 = vmatpush1.bf16.msra.mxu0 %v619
    %1543 = vmatprep.subr.bf16.mxu0 %v624
    %1544 = vmatpush1.bf16.msra.mxu0 %v623
    %1545 = vmatprep.subr.bf16.mxu0 %v628
    %1546 = vmatpush1.bf16.msra.mxu0 %v627
    %1547 = vmatprep.subr.bf16.mxu0 %v632
    %1548 = vmatpush1.bf16.msra.mxu0 %v631
    %1549 = vmatprep.subr.bf16.mxu0 %v636
    %1550 = vmatpush1.bf16.msra.mxu0 %v635
    %1551 = vmatprep.subr.bf16.mxu0 0
    %1552 = vmatpush1.bf16.msra.mxu0 0
    %1553 = vmatprep.subr.bf16.mxu0 0
    %1554 = vmatpush1.bf16.msra.mxu0 0
    %1555 = vmatprep.subr.bf16.mxu0 0
    %1556 = vmatpush1.bf16.msra.mxu0 0
    %1557 = vmatprep.subr.bf16.mxu0 0
    %1558 = vmatpush1.bf16.msra.mxu0 0
    %1559 = vmatprep.subr.bf16.mxu0 0
    %1560 = vmatpush1.bf16.msra.mxu0 0
    %1561 = vmatprep.subr.bf16.mxu0 0
    %1562 = vmatpush1.bf16.msra.mxu0 0
    %1563 = vmatprep.subr.bf16.mxu0 0
    %1564 = vmatpush1.bf16.msra.mxu0 0
    %1565 = vmatprep.subr.bf16.mxu0 0
    %1566 = vmatpush1.bf16.msra.mxu0 0
    %1567 = vmatprep.mubr.bf16.mxu0 0
    %1568 = vmatmul.mubr.bf16.gmra.mrb[0].mxu0 %v1486
    %v1569 = vpop.f32.mrb[0].mxu0
    %v1570 = vadd.f32 0.0, %v1569
    %v1571 = vpop.f32.mrb[0].mxu0
    %v1572 = vadd.f32 0.0, %v1571
    %v1573 = vpop.f32.mrb[0].mxu0
    %v1574 = vpop.f32.mrb[0].mxu0
    %1575 = vdwg.mxu0
    %v1576 = vadd.f32 %v1490, %v1529
    %v1577 = vadd.f32 %v1491, %v1531
    %v1578 = vadd.f32 %v1492, %v1570
    %v1579 = vadd.f32 %v1493, %v1572
    %v1580 = vxor.u32 %v1576, 2147483648
    %v1581 = vmul.f32 %v1580, 1.442695
    %v1582 = vpow.pop %v1581
    %v1583 = vadd.f32 %v1582, 1.0
    %v1584 = vrcp.pop %v1583
    %v1585 = vmul.f32 1.0, %v1584
    %v1586 = vxor.u32 %v1577, 2147483648
    %v1587 = vmul.f32 %v1586, 1.442695
    %v1588 = vpow.pop %v1587
    %v1589 = vadd.f32 %v1588, 1.0
    %v1590 = vrcp.pop %v1589
    %v1591 = vmul.f32 1.0, %v1590
    %v1592 = vtanh.pop %v1578
    %v1593 = vxor.u32 %v1579, 2147483648
    %v1594 = vmul.f32 %v1593, 1.442695
    %v1595 = vpow.pop %v1594
    %v1596 = vadd.f32 %v1595, 1.0
    %v1597 = vrcp.pop %v1596
    %v1598 = vmul.f32 1.0, %v1597
    %v1599 = vmul.f32 %v1591, %v1483
    %v1600 = vmul.f32 %v1585, %v1592
    %v1601 = vadd.f32 %v1599, %v1600
    %v1602 = vtanh.pop %v1601
    %v1603 = vmul.f32 %v1598, %v1602
    %v1604 = vpack.c.bf16 %v1603, %v1603
    %s1605 = scalar_lea.vmem [#allocation2], 28
    %1606 = vst [vmem:[%s1605] sm:$0xf] %v1604
    %1607 = vst [vmem:[%s5] sm:$0xff] %v1603
    %1608 = vst [vmem:[%s6] sm:$0xff] %v1601
    %s1609 = scalar_lea.vmem [#allocation4], 256
    %v1610 = vld [vmem:[%s1609] sm:$0xff]
    %v1611 = vld [vmem:[%s1609 + $0x8] sm:$0xff]
    %v1612 = vld [vmem:[%s1609 + $0x10] sm:$0xff]
    %v1613 = vld [vmem:[%s1609 + $0x18] sm:$0xff]
    %v1614 = vld [vmem:[%s1609 + $0x20] sm:$0xff]
    %v1615 = vld [vmem:[%s1609 + $0x28] sm:$0xff]
    %v1616 = vld [vmem:[%s1609 + $0x30] sm:$0xff]
    %v1617 = vld [vmem:[%s1609 + $0x38] sm:$0xff]
    %v1618 = vld [vmem:[%s1609 + $0x40] sm:$0xff]
    %v1619 = vld [vmem:[%s1609 + $0x48] sm:$0xff]
    %v1620 = vld [vmem:[%s1609 + $0x50] sm:$0xff]
    %v1621 = vld [vmem:[%s1609 + $0x58] sm:$0xff]
    %v1622 = vld [vmem:[%s1609 + $0x60] sm:$0xff]
    %v1623 = vld [vmem:[%s1609 + $0x68] sm:$0xff]
    %v1624 = vld [vmem:[%s1609 + $0x70] sm:$0xff]
    %v1625 = vld [vmem:[%s1609 + $0x78] sm:$0xff]
    %v1626 = vld [vmem:[%s1609 + $0x80] sm:$0xff]
    %v1627 = vld [vmem:[%s1609 + $0x88] sm:$0xff]
    %v1628 = vld [vmem:[%s1609 + $0x90] sm:$0xff]
    %v1629 = vld [vmem:[%s1609 + $0x98] sm:$0xff]
    %v1630 = vld [vmem:[%s1609 + $0xa0] sm:$0xff]
    %v1631 = vld [vmem:[%s1609 + $0xa8] sm:$0xff]
    %v1632 = vld [vmem:[%s1609 + $0xb0] sm:$0xff]
    %v1633 = vld [vmem:[%s1609 + $0xb8] sm:$0xff]
    %v1634 = vld [vmem:[%s1609 + $0xc0] sm:$0xff]
    %v1635 = vld [vmem:[%s1609 + $0xc8] sm:$0xff]
    %v1636 = vld [vmem:[%s1609 + $0xd0] sm:$0xff]
    %v1637 = vld [vmem:[%s1609 + $0xd8] sm:$0xff]
    %v1638 = vld [vmem:[%s1609 + $0xe0] sm:$0xff]
    %v1639 = vld [vmem:[%s1609 + $0xe8] sm:$0xff]
    %v1640 = vld [vmem:[%s1609 + $0xf0] sm:$0xff]
    %v1641 = vld [vmem:[%s1609 + $0xf8] sm:$0xff]
    %s1642 = scalar_lea.vmem [#allocation6], 256
    %v1643 = vld [vmem:[%s1642] sm:$0xff]
    %v1644 = vld [vmem:[%s1642 + $0x8] sm:$0xff]
    %v1645 = vld [vmem:[%s1642 + $0x10] sm:$0xff]
    %v1646 = vld [vmem:[%s1642 + $0x18] sm:$0xff]
    %v1647 = vld [vmem:[%s1642 + $0x20] sm:$0xff]
    %v1648 = vld [vmem:[%s1642 + $0x28] sm:$0xff]
    %v1649 = vld [vmem:[%s1642 + $0x30] sm:$0xff]
    %v1650 = vld [vmem:[%s1642 + $0x38] sm:$0xff]
    %v1651 = vld [vmem:[%s1642 + $0x40] sm:$0xff]
    %v1652 = vld [vmem:[%s1642 + $0x48] sm:$0xff]
    %v1653 = vld [vmem:[%s1642 + $0x50] sm:$0xff]
    %v1654 = vld [vmem:[%s1642 + $0x58] sm:$0xff]
    %v1655 = vld [vmem:[%s1642 + $0x60] sm:$0xff]
    %v1656 = vld [vmem:[%s1642 + $0x68] sm:$0xff]
    %v1657 = vld [vmem:[%s1642 + $0x70] sm:$0xff]
    %v1658 = vld [vmem:[%s1642 + $0x78] sm:$0xff]
    %v1659 = vld [vmem:[%s1642 + $0x80] sm:$0xff]
    %v1660 = vld [vmem:[%s1642 + $0x88] sm:$0xff]
    %v1661 = vld [vmem:[%s1642 + $0x90] sm:$0xff]
    %v1662 = vld [vmem:[%s1642 + $0x98] sm:$0xff]
    %v1663 = vld [vmem:[%s1642 + $0xa0] sm:$0xff]
    %v1664 = vld [vmem:[%s1642 + $0xa8] sm:$0xff]
    %v1665 = vld [vmem:[%s1642 + $0xb0] sm:$0xff]
    %v1666 = vld [vmem:[%s1642 + $0xb8] sm:$0xff]
    %v1667 = vld [vmem:[%s1642 + $0xc0] sm:$0xff]
    %v1668 = vld [vmem:[%s1642 + $0xc8] sm:$0xff]
    %v1669 = vld [vmem:[%s1642 + $0xd0] sm:$0xff]
    %v1670 = vld [vmem:[%s1642 + $0xd8] sm:$0xff]
    %v1671 = vld [vmem:[%s1642 + $0xe0] sm:$0xff]
    %v1672 = vld [vmem:[%s1642 + $0xe8] sm:$0xff]
    %v1673 = vld [vmem:[%s1642 + $0xf0] sm:$0xff]
    %v1674 = vld [vmem:[%s1642 + $0xf8] sm:$0xff]
    %s1675 = scalar_lea.vmem %s3, 4
    %v1676 = vld [vmem:[%s1675] sm:$0xf]
    %v1677 = vld [vmem:[#allocation2] sm:$0xf]
    %v1678 = vld [vmem:[#allocation2 + $0x4] sm:$0xf]
    %v1679 = vld [vmem:[#allocation2 + $0x8] sm:$0xf]
    %v1680 = vld [vmem:[#allocation2 + $0xc] sm:$0xf]
    %v1681 = vld [vmem:[#allocation2 + $0x10] sm:$0xf]
    %v1682 = vld [vmem:[#allocation2 + $0x14] sm:$0xf]
    %v1683 = vld [vmem:[#allocation2 + $0x18] sm:$0xf]
    %v1684 = vld [vmem:[#allocation2 + $0x1c] sm:$0xf]
    %v1686 = vlaneseq
    %v1687 = vshrl.u32 %v1686, 7
    %v1688 = vsub.s32 0, %v1687
    %v1689 = vrot.slane %v1676, %v1688
    %v1690 = vlaneseq
    %v1691 = vshrl.u32 %v1690, 7
    %v1692 = vsub.s32 1, %v1691
    %v1693 = vrot.slane %v1676, %v1692
    %v1694 = vlaneseq
    %v1695 = vshrl.u32 %v1694, 7
    %v1696 = vsub.s32 2, %v1695
    %v1697 = vrot.slane %v1676, %v1696
    %v1698 = vlaneseq
    %v1699 = vshrl.u32 %v1698, 7
    %v1700 = vsub.s32 3, %v1699
    %v1701 = vrot.slane %v1676, %v1700
    %v1714 = vunpack.c.l.b16 %v1677
    %v1715 = vunpack.c.l.b16 %v1678
    %v1716 = vunpack.c.l.b16 %v1679
    %v1717 = vunpack.c.l.b16 %v1680
    %v1718 = vunpack.c.l.b16 %v1681
    %v1719 = vunpack.c.l.b16 %v1682
    %v1720 = vunpack.c.l.b16 %v1683
    %v1721 = vunpack.c.l.b16 %v1684
    %v1722 = vpack.c.b16 %v1715, %v1714
    %v1723 = vpack.c.b16 %v1717, %v1716
    %v1724 = vpack.c.b16 %v1719, %v1718
    %v1725 = vpack.c.b16 %v1721, %v1720
    %v1762 = vunpack.c.l.b16 %v1610
    %v1763 = vunpack.c.h.b16 %v1610
    %v1764 = vunpack.c.l.b16 %v1611
    %v1765 = vunpack.c.h.b16 %v1611
    %v1766 = vunpack.c.l.b16 %v1612
    %v1767 = vunpack.c.h.b16 %v1612
    %v1768 = vunpack.c.l.b16 %v1613
    %v1769 = vunpack.c.h.b16 %v1613
    %v1770 = vunpack.c.l.b16 %v1614
    %v1771 = vunpack.c.h.b16 %v1614
    %v1772 = vunpack.c.l.b16 %v1615
    %v1773 = vunpack.c.h.b16 %v1615
    %v1774 = vunpack.c.l.b16 %v1616
    %v1775 = vunpack.c.h.b16 %v1616
    %v1776 = vunpack.c.l.b16 %v1617
    %v1777 = vunpack.c.h.b16 %v1617
    %v1778 = vunpack.c.l.b16 %v1618
    %v1779 = vunpack.c.h.b16 %v1618
    %v1780 = vunpack.c.l.b16 %v1619
    %v1781 = vunpack.c.h.b16 %v1619
    %v1782 = vunpack.c.l.b16 %v1620
    %v1783 = vunpack.c.h.b16 %v1620
    %v1784 = vunpack.c.l.b16 %v1621
    %v1785 = vunpack.c.h.b16 %v1621
    %v1786 = vunpack.c.l.b16 %v1622
    %v1787 = vunpack.c.h.b16 %v1622
    %v1788 = vunpack.c.l.b16 %v1623
    %v1789 = vunpack.c.h.b16 %v1623
    %v1790 = vunpack.c.l.b16 %v1624
    %v1791 = vunpack.c.h.b16 %v1624
    %v1792 = vunpack.c.l.b16 %v1625
    %v1793 = vunpack.c.h.b16 %v1625
    %v1794 = vunpack.c.l.b16 %v1626
    %v1795 = vunpack.c.h.b16 %v1626
    %v1796 = vunpack.c.l.b16 %v1627
    %v1797 = vunpack.c.h.b16 %v1627
    %v1798 = vunpack.c.l.b16 %v1628
    %v1799 = vunpack.c.h.b16 %v1628
    %v1800 = vunpack.c.l.b16 %v1629
    %v1801 = vunpack.c.h.b16 %v1629
    %v1802 = vunpack.c.l.b16 %v1630
    %v1803 = vunpack.c.h.b16 %v1630
    %v1804 = vunpack.c.l.b16 %v1631
    %v1805 = vunpack.c.h.b16 %v1631
    %v1806 = vunpack.c.l.b16 %v1632
    %v1807 = vunpack.c.h.b16 %v1632
    %v1808 = vunpack.c.l.b16 %v1633
    %v1809 = vunpack.c.h.b16 %v1633
    %v1810 = vunpack.c.l.b16 %v1634
    %v1811 = vunpack.c.h.b16 %v1634
    %v1812 = vunpack.c.l.b16 %v1635
    %v1813 = vunpack.c.h.b16 %v1635
    %v1814 = vunpack.c.l.b16 %v1636
    %v1815 = vunpack.c.h.b16 %v1636
    %v1816 = vunpack.c.l.b16 %v1637
    %v1817 = vunpack.c.h.b16 %v1637
    %v1818 = vunpack.c.l.b16 %v1638
    %v1819 = vunpack.c.h.b16 %v1638
    %v1820 = vunpack.c.l.b16 %v1639
    %v1821 = vunpack.c.h.b16 %v1639
    %v1822 = vunpack.c.l.b16 %v1640
    %v1823 = vunpack.c.h.b16 %v1640
    %v1824 = vunpack.c.l.b16 %v1641
    %v1825 = vunpack.c.h.b16 %v1641
    %v1826 = vpack.c.b16 %v1766, %v1762
    %v1827 = vpack.c.b16 %v1767, %v1763
    %v1828 = vpack.c.b16 %v1768, %v1764
    %v1829 = vpack.c.b16 %v1769, %v1765
    %v1830 = vpack.c.b16 %v1774, %v1770
    %v1831 = vpack.c.b16 %v1775, %v1771
    %v1832 = vpack.c.b16 %v1776, %v1772
    %v1833 = vpack.c.b16 %v1777, %v1773
    %v1834 = vpack.c.b16 %v1782, %v1778
    %v1835 = vpack.c.b16 %v1783, %v1779
    %v1836 = vpack.c.b16 %v1784, %v1780
    %v1837 = vpack.c.b16 %v1785, %v1781
    %v1838 = vpack.c.b16 %v1790, %v1786
    %v1839 = vpack.c.b16 %v1791, %v1787
    %v1840 = vpack.c.b16 %v1792, %v1788
    %v1841 = vpack.c.b16 %v1793, %v1789
    %v1842 = vpack.c.b16 %v1798, %v1794
    %v1843 = vpack.c.b16 %v1799, %v1795
    %v1844 = vpack.c.b16 %v1800, %v1796
    %v1845 = vpack.c.b16 %v1801, %v1797
    %v1846 = vpack.c.b16 %v1806, %v1802
    %v1847 = vpack.c.b16 %v1807, %v1803
    %v1848 = vpack.c.b16 %v1808, %v1804
    %v1849 = vpack.c.b16 %v1809, %v1805
    %v1850 = vpack.c.b16 %v1814, %v1810
    %v1851 = vpack.c.b16 %v1815, %v1811
    %v1852 = vpack.c.b16 %v1816, %v1812
    %v1853 = vpack.c.b16 %v1817, %v1813
    %v1854 = vpack.c.b16 %v1822, %v1818
    %v1855 = vpack.c.b16 %v1823, %v1819
    %v1856 = vpack.c.b16 %v1824, %v1820
    %v1857 = vpack.c.b16 %v1825, %v1821
    %1890 = vmatprep.subr.bf16.mxu0 %v1827
    %1891 = vmatpush1.bf16.msra.mxu0 %v1826
    %1892 = vmatprep.subr.bf16.mxu0 %v1831
    %1893 = vmatpush1.bf16.msra.mxu0 %v1830
    %1894 = vmatprep.subr.bf16.mxu0 %v1835
    %1895 = vmatpush1.bf16.msra.mxu0 %v1834
    %1896 = vmatprep.subr.bf16.mxu0 %v1839
    %1897 = vmatpush1.bf16.msra.mxu0 %v1838
    %1898 = vmatprep.subr.bf16.mxu0 %v1843
    %1899 = vmatpush1.bf16.msra.mxu0 %v1842
    %1900 = vmatprep.subr.bf16.mxu0 %v1847
    %1901 = vmatpush1.bf16.msra.mxu0 %v1846
    %1902 = vmatprep.subr.bf16.mxu0 %v1851
    %1903 = vmatpush1.bf16.msra.mxu0 %v1850
    %1904 = vmatprep.subr.bf16.mxu0 %v1855
    %1905 = vmatpush1.bf16.msra.mxu0 %v1854
    %1906 = vmatprep.subr.bf16.mxu0 0
    %1907 = vmatpush1.bf16.msra.mxu0 0
    %1908 = vmatprep.subr.bf16.mxu0 0
    %1909 = vmatpush1.bf16.msra.mxu0 0
    %1910 = vmatprep.subr.bf16.mxu0 0
    %1911 = vmatpush1.bf16.msra.mxu0 0
    %1912 = vmatprep.subr.bf16.mxu0 0
    %1913 = vmatpush1.bf16.msra.mxu0 0
    %1914 = vmatprep.subr.bf16.mxu0 0
    %1915 = vmatpush1.bf16.msra.mxu0 0
    %1916 = vmatprep.subr.bf16.mxu0 0
    %1917 = vmatpush1.bf16.msra.mxu0 0
    %1918 = vmatprep.subr.bf16.mxu0 0
    %1919 = vmatpush1.bf16.msra.mxu0 0
    %1920 = vmatprep.subr.bf16.mxu0 0
    %1921 = vmatpush1.bf16.msra.mxu0 0
    %1922 = vmatprep.mubr.bf16.mxu0 0
    %1923 = vmatmul.mubr.bf16.gmra.mrb[0].mxu0 %v1722
    %v1924 = vpop.f32.mrb[0].mxu0
    %v1925 = vadd.f32 %v1689, %v1924
    %v1926 = vpop.f32.mrb[0].mxu0
    %v1927 = vadd.f32 %v1693, %v1926
    %v1928 = vpop.f32.mrb[0].mxu0
    %v1929 = vadd.f32 %v1689, %v1928
    %v1930 = vpop.f32.mrb[0].mxu0
    %v1931 = vadd.f32 %v1693, %v1930
    %1932 = vmatprep.mubr.bf16.mxu0 0
    %1933 = vmatmul.mubr.bf16.gmra.mrb[0].mxu0 %v1723
    %v1934 = vpop.f32.mrb[0].mxu0
    %v1935 = vadd.f32 %v1689, %v1934
    %v1936 = vpop.f32.mrb[0].mxu0
    %v1937 = vadd.f32 %v1693, %v1936
    %v1938 = vpop.f32.mrb[0].mxu0
    %v1939 = vadd.f32 %v1689, %v1938
    %v1940 = vpop.f32.mrb[0].mxu0
    %v1941 = vadd.f32 %v1693, %v1940
    %1942 = vmatprep.mubr.bf16.mxu0 0
    %1943 = vmatmul.mubr.bf16.gmra.mrb[0].mxu0 %v1724
    %v1944 = vpop.f32.mrb[0].mxu0
    %v1945 = vadd.f32 %v1689, %v1944
    %v1946 = vpop.f32.mrb[0].mxu0
    %v1947 = vadd.f32 %v1693, %v1946
    %v1948 = vpop.f32.mrb[0].mxu0
    %v1949 = vadd.f32 %v1689, %v1948
    %v1950 = vpop.f32.mrb[0].mxu0
    %v1951 = vadd.f32 %v1693, %v1950
    %1952 = vmatprep.mubr.bf16.mxu0 0
    %1953 = vmatmul.mubr.bf16.gmra.mrb[0].mxu0 %v1725
    %v1954 = vpop.f32.mrb[0].mxu0
    %v1955 = vadd.f32 %v1689, %v1954
    %v1956 = vpop.f32.mrb[0].mxu0
    %v1957 = vadd.f32 %v1693, %v1956
    %v1958 = vpop.f32.mrb[0].mxu0
    %v1959 = vadd.f32 %v1689, %v1958
    %v1960 = vpop.f32.mrb[0].mxu0
    %v1961 = vadd.f32 %v1693, %v1960
    %1962 = vdwg.mxu0
    %1963 = vmatprep.subr.bf16.mxu0 %v1829
    %1964 = vmatpush1.bf16.msra.mxu0 %v1828
    %1965 = vmatprep.subr.bf16.mxu0 %v1833
    %1966 = vmatpush1.bf16.msra.mxu0 %v1832
    %1967 = vmatprep.subr.bf16.mxu0 %v1837
    %1968 = vmatpush1.bf16.msra.mxu0 %v1836
    %1969 = vmatprep.subr.bf16.mxu0 %v1841
    %1970 = vmatpush1.bf16.msra.mxu0 %v1840
    %1971 = vmatprep.subr.bf16.mxu0 %v1845
    %1972 = vmatpush1.bf16.msra.mxu0 %v1844
    %1973 = vmatprep.subr.bf16.mxu0 %v1849
    %1974 = vmatpush1.bf16.msra.mxu0 %v1848
    %1975 = vmatprep.subr.bf16.mxu0 %v1853
    %1976 = vmatpush1.bf16.msra.mxu0 %v1852
    %1977 = vmatprep.subr.bf16.mxu0 %v1857
    %1978 = vmatpush1.bf16.msra.mxu0 %v1856
    %1979 = vmatprep.subr.bf16.mxu0 0
    %1980 = vmatpush1.bf16.msra.mxu0 0
    %1981 = vmatprep.subr.bf16.mxu0 0
    %1982 = vmatpush1.bf16.msra.mxu0 0
    %1983 = vmatprep.subr.bf16.mxu0 0
    %1984 = vmatpush1.bf16.msra.mxu0 0
    %1985 = vmatprep.subr.bf16.mxu0 0
    %1986 = vmatpush1.bf16.msra.mxu0 0
    %1987 = vmatprep.subr.bf16.mxu0 0
    %1988 = vmatpush1.bf16.msra.mxu0 0
    %1989 = vmatprep.subr.bf16.mxu0 0
    %1990 = vmatpush1.bf16.msra.mxu0 0
    %1991 = vmatprep.subr.bf16.mxu0 0
    %1992 = vmatpush1.bf16.msra.mxu0 0
    %1993 = vmatprep.subr.bf16.mxu0 0
    %1994 = vmatpush1.bf16.msra.mxu0 0
    %1995 = vmatprep.mubr.bf16.mxu0 0
    %1996 = vmatmul.mubr.bf16.gmra.mrb[0].mxu0 %v1722
    %v1997 = vpop.f32.mrb[0].mxu0
    %v1998 = vadd.f32 %v1697, %v1997
    %v1999 = vpop.f32.mrb[0].mxu0
    %v2000 = vadd.f32 %v1701, %v1999
    %v2001 = vpop.f32.mrb[0].mxu0
    %v2002 = vadd.f32 %v1697, %v2001
    %v2003 = vpop.f32.mrb[0].mxu0
    %v2004 = vadd.f32 %v1701, %v2003
    %2005 = vmatprep.mubr.bf16.mxu0 0
    %2006 = vmatmul.mubr.bf16.gmra.mrb[0].mxu0 %v1723
    %v2007 = vpop.f32.mrb[0].mxu0
    %v2008 = vadd.f32 %v1697, %v2007
    %v2009 = vpop.f32.mrb[0].mxu0
    %v2010 = vadd.f32 %v1701, %v2009
    %v2011 = vpop.f32.mrb[0].mxu0
    %v2012 = vadd.f32 %v1697, %v2011
    %v2013 = vpop.f32.mrb[0].mxu0
    %v2014 = vadd.f32 %v1701, %v2013
    %2015 = vmatprep.mubr.bf16.mxu0 0
    %2016 = vmatmul.mubr.bf16.gmra.mrb[0].mxu0 %v1724
    %v2017 = vpop.f32.mrb[0].mxu0
    %v2018 = vadd.f32 %v1697, %v2017
    %v2019 = vpop.f32.mrb[0].mxu0
    %v2020 = vadd.f32 %v1701, %v2019
    %v2021 = vpop.f32.mrb[0].mxu0
    %v2022 = vadd.f32 %v1697, %v2021
    %v2023 = vpop.f32.mrb[0].mxu0
    %v2024 = vadd.f32 %v1701, %v2023
    %2025 = vmatprep.mubr.bf16.mxu0 0
    %2026 = vmatmul.mubr.bf16.gmra.mrb[0].mxu0 %v1725
    %v2027 = vpop.f32.mrb[0].mxu0
    %v2028 = vadd.f32 %v1697, %v2027
    %v2029 = vpop.f32.mrb[0].mxu0
    %v2030 = vadd.f32 %v1701, %v2029
    %v2031 = vpop.f32.mrb[0].mxu0
    %v2032 = vadd.f32 %v1697, %v2031
    %v2033 = vpop.f32.mrb[0].mxu0
    %v2034 = vadd.f32 %v1701, %v2033
    %2035 = vdwg.mxu0
    %2036 = vst [vmem:[#allocation3] sm:$0xff] %v1925
    %2037 = vst [vmem:[#allocation3 + $0x8] sm:$0xff] %v1927
    %2038 = vst [vmem:[#allocation3 + $0x10] sm:$0xff] %v1998
    %2039 = vst [vmem:[#allocation3 + $0x18] sm:$0xff] %v2000
    %2040 = vst [vmem:[#allocation3 + $0x20] sm:$0xff] %v1929
    %2041 = vst [vmem:[#allocation3 + $0x28] sm:$0xff] %v1931
    %2042 = vst [vmem:[#allocation3 + $0x30] sm:$0xff] %v2002
    %2043 = vst [vmem:[#allocation3 + $0x38] sm:$0xff] %v2004
    %2044 = vst [vmem:[#allocation3 + $0x40] sm:$0xff] %v1935
    %2045 = vst [vmem:[#allocation3 + $0x48] sm:$0xff] %v1937
    %2046 = vst [vmem:[#allocation3 + $0x50] sm:$0xff] %v2008
    %2047 = vst [vmem:[#allocation3 + $0x58] sm:$0xff] %v2010
    %2048 = vst [vmem:[#allocation3 + $0x60] sm:$0xff] %v1939
    %2049 = vst [vmem:[#allocation3 + $0x68] sm:$0xff] %v1941
    %2050 = vst [vmem:[#allocation3 + $0x70] sm:$0xff] %v2012
    %2051 = vst [vmem:[#allocation3 + $0x78] sm:$0xff] %v2014
    %2052 = vst [vmem:[#allocation3 + $0x80] sm:$0xff] %v1945
    %2053 = vst [vmem:[#allocation3 + $0x88] sm:$0xff] %v1947
    %2054 = vst [vmem:[#allocation3 + $0x90] sm:$0xff] %v2018
    %2055 = vst [vmem:[#allocation3 + $0x98] sm:$0xff] %v2020
    %2056 = vst [vmem:[#allocation3 + $0xa0] sm:$0xff] %v1949
    %2057 = vst [vmem:[#allocation3 + $0xa8] sm:$0xff] %v1951
    %2058 = vst [vmem:[#allocation3 + $0xb0] sm:$0xff] %v2022
    %2059 = vst [vmem:[#allocation3 + $0xb8] sm:$0xff] %v2024
    %2060 = vst [vmem:[#allocation3 + $0xc0] sm:$0xff] %v1955
    %2061 = vst [vmem:[#allocation3 + $0xc8] sm:$0xff] %v1957
    %2062 = vst [vmem:[#allocation3 + $0xd0] sm:$0xff] %v2028
    %2063 = vst [vmem:[#allocation3 + $0xd8] sm:$0xff] %v2030
    %2064 = vst [vmem:[#allocation3 + $0xe0] sm:$0xff] %v1959
    %2065 = vst [vmem:[#allocation3 + $0xe8] sm:$0xff] %v1961
    %2066 = vst [vmem:[#allocation3 + $0xf0] sm:$0xff] %v2032
    %2067 = vst [vmem:[#allocation3 + $0xf8] sm:$0xff] %v2034
    %v2068 = vld [vmem:[#allocation3] sm:$0xff]
    %v2069 = vld [vmem:[#allocation3 + $0x8] sm:$0xff]
    %v2070 = vld [vmem:[#allocation3 + $0x10] sm:$0xff]
    %v2071 = vld [vmem:[#allocation3 + $0x18] sm:$0xff]
    %v2104 = vunpack.c.l.b16 %v1643
    %v2105 = vunpack.c.h.b16 %v1643
    %v2106 = vunpack.c.l.b16 %v1644
    %v2107 = vunpack.c.h.b16 %v1644
    %v2108 = vunpack.c.l.b16 %v1645
    %v2109 = vunpack.c.h.b16 %v1645
    %v2110 = vunpack.c.l.b16 %v1646
    %v2111 = vunpack.c.h.b16 %v1646
    %v2112 = vunpack.c.l.b16 %v1647
    %v2113 = vunpack.c.h.b16 %v1647
    %v2114 = vunpack.c.l.b16 %v1648
    %v2115 = vunpack.c.h.b16 %v1648
    %v2116 = vunpack.c.l.b16 %v1649
    %v2117 = vunpack.c.h.b16 %v1649
    %v2118 = vunpack.c.l.b16 %v1650
    %v2119 = vunpack.c.h.b16 %v1650
    %v2120 = vunpack.c.l.b16 %v1651
    %v2121 = vunpack.c.h.b16 %v1651
    %v2122 = vunpack.c.l.b16 %v1652
    %v2123 = vunpack.c.h.b16 %v1652
    %v2124 = vunpack.c.l.b16 %v1653
    %v2125 = vunpack.c.h.b16 %v1653
    %v2126 = vunpack.c.l.b16 %v1654
    %v2127 = vunpack.c.h.b16 %v1654
    %v2128 = vunpack.c.l.b16 %v1655
    %v2129 = vunpack.c.h.b16 %v1655
    %v2130 = vunpack.c.l.b16 %v1656
    %v2131 = vunpack.c.h.b16 %v1656
    %v2132 = vunpack.c.l.b16 %v1657
    %v2133 = vunpack.c.h.b16 %v1657
    %v2134 = vunpack.c.l.b16 %v1658
    %v2135 = vunpack.c.h.b16 %v1658
    %v2136 = vunpack.c.l.b16 %v1659
    %v2137 = vunpack.c.h.b16 %v1659
    %v2138 = vunpack.c.l.b16 %v1660
    %v2139 = vunpack.c.h.b16 %v1660
    %v2140 = vunpack.c.l.b16 %v1661
    %v2141 = vunpack.c.h.b16 %v1661
    %v2142 = vunpack.c.l.b16 %v1662
    %v2143 = vunpack.c.h.b16 %v1662
    %v2144 = vunpack.c.l.b16 %v1663
    %v2145 = vunpack.c.h.b16 %v1663
    %v2146 = vunpack.c.l.b16 %v1664
    %v2147 = vunpack.c.h.b16 %v1664
    %v2148 = vunpack.c.l.b16 %v1665
    %v2149 = vunpack.c.h.b16 %v1665
    %v2150 = vunpack.c.l.b16 %v1666
    %v2151 = vunpack.c.h.b16 %v1666
    %v2152 = vunpack.c.l.b16 %v1667
    %v2153 = vunpack.c.h.b16 %v1667
    %v2154 = vunpack.c.l.b16 %v1668
    %v2155 = vunpack.c.h.b16 %v1668
    %v2156 = vunpack.c.l.b16 %v1669
    %v2157 = vunpack.c.h.b16 %v1669
    %v2158 = vunpack.c.l.b16 %v1670
    %v2159 = vunpack.c.h.b16 %v1670
    %v2160 = vunpack.c.l.b16 %v1671
    %v2161 = vunpack.c.h.b16 %v1671
    %v2162 = vunpack.c.l.b16 %v1672
    %v2163 = vunpack.c.h.b16 %v1672
    %v2164 = vunpack.c.l.b16 %v1673
    %v2165 = vunpack.c.h.b16 %v1673
    %v2166 = vunpack.c.l.b16 %v1674
    %v2167 = vunpack.c.h.b16 %v1674
    %v2168 = vpack.c.b16 %v2108, %v2104
    %v2169 = vpack.c.b16 %v2109, %v2105
    %v2170 = vpack.c.b16 %v2110, %v2106
    %v2171 = vpack.c.b16 %v2111, %v2107
    %v2172 = vpack.c.b16 %v2116, %v2112
    %v2173 = vpack.c.b16 %v2117, %v2113
    %v2174 = vpack.c.b16 %v2118, %v2114
    %v2175 = vpack.c.b16 %v2119, %v2115
    %v2176 = vpack.c.b16 %v2124, %v2120
    %v2177 = vpack.c.b16 %v2125, %v2121
    %v2178 = vpack.c.b16 %v2126, %v2122
    %v2179 = vpack.c.b16 %v2127, %v2123
    %v2180 = vpack.c.b16 %v2132, %v2128
    %v2181 = vpack.c.b16 %v2133, %v2129
    %v2182 = vpack.c.b16 %v2134, %v2130
    %v2183 = vpack.c.b16 %v2135, %v2131
    %v2184 = vpack.c.b16 %v2140, %v2136
    %v2185 = vpack.c.b16 %v2141, %v2137
    %v2186 = vpack.c.b16 %v2142, %v2138
    %v2187 = vpack.c.b16 %v2143, %v2139
    %v2188 = vpack.c.b16 %v2148, %v2144
    %v2189 = vpack.c.b16 %v2149, %v2145
    %v2190 = vpack.c.b16 %v2150, %v2146
    %v2191 = vpack.c.b16 %v2151, %v2147
    %v2192 = vpack.c.b16 %v2156, %v2152
    %v2193 = vpack.c.b16 %v2157, %v2153
    %v2194 = vpack.c.b16 %v2158, %v2154
    %v2195 = vpack.c.b16 %v2159, %v2155
    %v2196 = vpack.c.b16 %v2164, %v2160
    %v2197 = vpack.c.b16 %v2165, %v2161
    %v2198 = vpack.c.b16 %v2166, %v2162
    %v2199 = vpack.c.b16 %v2167, %v2163
    %2232 = vmatprep.subr.bf16.mxu0 %v2169
    %2233 = vmatpush1.bf16.msra.mxu0 %v2168
    %2234 = vmatprep.subr.bf16.mxu0 %v2173
    %2235 = vmatpush1.bf16.msra.mxu0 %v2172
    %2236 = vmatprep.subr.bf16.mxu0 %v2177
    %2237 = vmatpush1.bf16.msra.mxu0 %v2176
    %2238 = vmatprep.subr.bf16.mxu0 %v2181
    %2239 = vmatpush1.bf16.msra.mxu0 %v2180
    %2240 = vmatprep.subr.bf16.mxu0 %v2185
    %2241 = vmatpush1.bf16.msra.mxu0 %v2184
    %2242 = vmatprep.subr.bf16.mxu0 %v2189
    %2243 = vmatpush1.bf16.msra.mxu0 %v2188
    %2244 = vmatprep.subr.bf16.mxu0 %v2193
    %2245 = vmatpush1.bf16.msra.mxu0 %v2192
    %2246 = vmatprep.subr.bf16.mxu0 %v2197
    %2247 = vmatpush1.bf16.msra.mxu0 %v2196
    %2248 = vmatprep.subr.bf16.mxu0 0
    %2249 = vmatpush1.bf16.msra.mxu0 0
    %2250 = vmatprep.subr.bf16.mxu0 0
    %2251 = vmatpush1.bf16.msra.mxu0 0
    %2252 = vmatprep.subr.bf16.mxu0 0
    %2253 = vmatpush1.bf16.msra.mxu0 0
    %2254 = vmatprep.subr.bf16.mxu0 0
    %2255 = vmatpush1.bf16.msra.mxu0 0
    %2256 = vmatprep.subr.bf16.mxu0 0
    %2257 = vmatpush1.bf16.msra.mxu0 0
    %2258 = vmatprep.subr.bf16.mxu0 0
    %2259 = vmatpush1.bf16.msra.mxu0 0
    %2260 = vmatprep.subr.bf16.mxu0 0
    %2261 = vmatpush1.bf16.msra.mxu0 0
    %2262 = vmatprep.subr.bf16.mxu0 0
    %2263 = vmatpush1.bf16.msra.mxu0 0
    %2264 = vmatprep.mubr.bf16.mxu0 0
    %2265 = vmatmul.mubr.bf16.gmra.mrb[0].mxu0 0
    %v2266 = vpop.f32.mrb[0].mxu0
    %v2267 = vadd.f32 0.0, %v2266
    %v2268 = vpop.f32.mrb[0].mxu0
    %v2269 = vadd.f32 0.0, %v2268
    %v2270 = vpop.f32.mrb[0].mxu0
    %v2271 = vpop.f32.mrb[0].mxu0
    %2272 = vdwg.mxu0
    %2273 = vmatprep.subr.bf16.mxu0 %v2171
    %2274 = vmatpush1.bf16.msra.mxu0 %v2170
    %2275 = vmatprep.subr.bf16.mxu0 %v2175
    %2276 = vmatpush1.bf16.msra.mxu0 %v2174
    %2277 = vmatprep.subr.bf16.mxu0 %v2179
    %2278 = vmatpush1.bf16.msra.mxu0 %v2178
    %2279 = vmatprep.subr.bf16.mxu0 %v2183
    %2280 = vmatpush1.bf16.msra.mxu0 %v2182
    %2281 = vmatprep.subr.bf16.mxu0 %v2187
    %2282 = vmatpush1.bf16.msra.mxu0 %v2186
    %2283 = vmatprep.subr.bf16.mxu0 %v2191
    %2284 = vmatpush1.bf16.msra.mxu0 %v2190
    %2285 = vmatprep.subr.bf16.mxu0 %v2195
    %2286 = vmatpush1.bf16.msra.mxu0 %v2194
    %2287 = vmatprep.subr.bf16.mxu0 %v2199
    %2288 = vmatpush1.bf16.msra.mxu0 %v2198
    %2289 = vmatprep.subr.bf16.mxu0 0
    %2290 = vmatpush1.bf16.msra.mxu0 0
    %2291 = vmatprep.subr.bf16.mxu0 0
    %2292 = vmatpush1.bf16.msra.mxu0 0
    %2293 = vmatprep.subr.bf16.mxu0 0
    %2294 = vmatpush1.bf16.msra.mxu0 0
    %2295 = vmatprep.subr.bf16.mxu0 0
    %2296 = vmatpush1.bf16.msra.mxu0 0
    %2297 = vmatprep.subr.bf16.mxu0 0
    %2298 = vmatpush1.bf16.msra.mxu0 0
    %2299 = vmatprep.subr.bf16.mxu0 0
    %2300 = vmatpush1.bf16.msra.mxu0 0
    %2301 = vmatprep.subr.bf16.mxu0 0
    %2302 = vmatpush1.bf16.msra.mxu0 0
    %2303 = vmatprep.subr.bf16.mxu0 0
    %2304 = vmatpush1.bf16.msra.mxu0 0
    %2305 = vmatprep.mubr.bf16.mxu0 0
    %2306 = vmatmul.mubr.bf16.gmra.mrb[0].mxu0 0
    %v2307 = vpop.f32.mrb[0].mxu0
    %v2308 = vadd.f32 0.0, %v2307
    %v2309 = vpop.f32.mrb[0].mxu0
    %v2310 = vadd.f32 0.0, %v2309
    %v2311 = vpop.f32.mrb[0].mxu0
    %v2312 = vpop.f32.mrb[0].mxu0
    %2313 = vdwg.mxu0
    %v2314 = vadd.f32 %v2068, %v2267
    %v2315 = vadd.f32 %v2069, %v2269
    %v2316 = vadd.f32 %v2070, %v2308
    %v2317 = vadd.f32 %v2071, %v2310
    %v2318 = vxor.u32 %v2314, 2147483648
    %v2319 = vmul.f32 %v2318, 1.442695
    %v2320 = vpow.pop %v2319
    %v2321 = vadd.f32 %v2320, 1.0
    %v2322 = vrcp.pop %v2321
    %v2323 = vmul.f32 1.0, %v2322
    %v2324 = vxor.u32 %v2315, 2147483648
    %v2325 = vmul.f32 %v2324, 1.442695
    %v2326 = vpow.pop %v2325
    %v2327 = vadd.f32 %v2326, 1.0
    %v2328 = vrcp.pop %v2327
    %v2329 = vmul.f32 1.0, %v2328
    %v2330 = vtanh.pop %v2316
    %v2331 = vxor.u32 %v2317, 2147483648
    %v2332 = vmul.f32 %v2331, 1.442695
    %v2333 = vpow.pop %v2332
    %v2334 = vadd.f32 %v2333, 1.0
    %v2335 = vrcp.pop %v2334
    %v2336 = vmul.f32 1.0, %v2335
    %v2337 = vmul.f32 %v2329, 0.0
    %v2338 = vmul.f32 %v2323, %v2330
    %v2339 = vadd.f32 %v2337, %v2338
    %v2340 = vtanh.pop %v2339
    %v2341 = vmul.f32 %v2336, %v2340
    %v2342 = vadd.f32 %v2341, 0.0
    %v2343 = vld [vmem:[%s781] sm:$0xff]
    %v2344 = vld [vmem:[%s781 + $0x8] sm:$0xff]
    %v2345 = vld [vmem:[%s781 + $0x10] sm:$0xff]
    %v2346 = vld [vmem:[%s781 + $0x18] sm:$0xff]
    %v2347 = vpack.c.bf16 %v2341, %v2341
    %2348 = vmatprep.subr.bf16.mxu0 %v2169
    %2349 = vmatpush1.bf16.msra.mxu0 %v2168
    %2350 = vmatprep.subr.bf16.mxu0 %v2173
    %2351 = vmatpush1.bf16.msra.mxu0 %v2172
    %2352 = vmatprep.subr.bf16.mxu0 %v2177
    %2353 = vmatpush1.bf16.msra.mxu0 %v2176
    %2354 = vmatprep.subr.bf16.mxu0 %v2181
    %2355 = vmatpush1.bf16.msra.mxu0 %v2180
    %2356 = vmatprep.subr.bf16.mxu0 %v2185
    %2357 = vmatpush1.bf16.msra.mxu0 %v2184
    %2358 = vmatprep.subr.bf16.mxu0 %v2189
    %2359 = vmatpush1.bf16.msra.mxu0 %v2188
    %2360 = vmatprep.subr.bf16.mxu0 %v2193
    %2361 = vmatpush1.bf16.msra.mxu0 %v2192
    %2362 = vmatprep.subr.bf16.mxu0 %v2197
    %2363 = vmatpush1.bf16.msra.mxu0 %v2196
    %2364 = vmatprep.subr.bf16.mxu0 0
    %2365 = vmatpush1.bf16.msra.mxu0 0
    %2366 = vmatprep.subr.bf16.mxu0 0
    %2367 = vmatpush1.bf16.msra.mxu0 0
    %2368 = vmatprep.subr.bf16.mxu0 0
    %2369 = vmatpush1.bf16.msra.mxu0 0
    %2370 = vmatprep.subr.bf16.mxu0 0
    %2371 = vmatpush1.bf16.msra.mxu0 0
    %2372 = vmatprep.subr.bf16.mxu0 0
    %2373 = vmatpush1.bf16.msra.mxu0 0
    %2374 = vmatprep.subr.bf16.mxu0 0
    %2375 = vmatpush1.bf16.msra.mxu0 0
    %2376 = vmatprep.subr.bf16.mxu0 0
    %2377 = vmatpush1.bf16.msra.mxu0 0
    %2378 = vmatprep.subr.bf16.mxu0 0
    %2379 = vmatpush1.bf16.msra.mxu0 0
    %2380 = vmatprep.mubr.bf16.mxu0 0
    %2381 = vmatmul.mubr.bf16.gmra.mrb[0].mxu0 %v2347
    %v2382 = vpop.f32.mrb[0].mxu0
    %v2383 = vadd.f32 0.0, %v2382
    %v2384 = vpop.f32.mrb[0].mxu0
    %v2385 = vadd.f32 0.0, %v2384
    %v2386 = vpop.f32.mrb[0].mxu0
    %v2387 = vpop.f32.mrb[0].mxu0
    %2388 = vdwg.mxu0
    %2389 = vmatprep.subr.bf16.mxu0 %v2171
    %2390 = vmatpush1.bf16.msra.mxu0 %v2170
    %2391 = vmatprep.subr.bf16.mxu0 %v2175
    %2392 = vmatpush1.bf16.msra.mxu0 %v2174
    %2393 = vmatprep.subr.bf16.mxu0 %v2179
    %2394 = vmatpush1.bf16.msra.mxu0 %v2178
    %2395 = vmatprep.subr.bf16.mxu0 %v2183
    %2396 = vmatpush1.bf16.msra.mxu0 %v2182
    %2397 = vmatprep.subr.bf16.mxu0 %v2187
    %2398 = vmatpush1.bf16.msra.mxu0 %v2186
    %2399 = vmatprep.subr.bf16.mxu0 %v2191
    %2400 = vmatpush1.bf16.msra.mxu0 %v2190
    %2401 = vmatprep.subr.bf16.mxu0 %v2195
    %2402 = vmatpush1.bf16.msra.mxu0 %v2194
    %2403 = vmatprep.subr.bf16.mxu0 %v2199
    %2404 = vmatpush1.bf16.msra.mxu0 %v2198
    %2405 = vmatprep.subr.bf16.mxu0 0
    %2406 = vmatpush1.bf16.msra.mxu0 0
    %2407 = vmatprep.subr.bf16.mxu0 0
    %2408 = vmatpush1.bf16.msra.mxu0 0
    %2409 = vmatprep.subr.bf16.mxu0 0
    %2410 = vmatpush1.bf16.msra.mxu0 0
    %2411 = vmatprep.subr.bf16.mxu0 0
    %2412 = vmatpush1.bf16.msra.mxu0 0
    %2413 = vmatprep.subr.bf16.mxu0 0
    %2414 = vmatpush1.bf16.msra.mxu0 0
    %2415 = vmatprep.subr.bf16.mxu0 0
    %2416 = vmatpush1.bf16.msra.mxu0 0
    %2417 = vmatprep.subr.bf16.mxu0 0
    %2418 = vmatpush1.bf16.msra.mxu0 0
    %2419 = vmatprep.subr.bf16.mxu0 0
    %2420 = vmatpush1.bf16.msra.mxu0 0
    %2421 = vmatprep.mubr.bf16.mxu0 0
    %2422 = vmatmul.mubr.bf16.gmra.mrb[0].mxu0 %v2347
    %v2423 = vpop.f32.mrb[0].mxu0
    %v2424 = vadd.f32 0.0, %v2423
    %v2425 = vpop.f32.mrb[0].mxu0
    %v2426 = vadd.f32 0.0, %v2425
    %v2427 = vpop.f32.mrb[0].mxu0
    %v2428 = vpop.f32.mrb[0].mxu0
    %2429 = vdwg.mxu0
    %v2430 = vadd.f32 %v2343, %v2383
    %v2431 = vadd.f32 %v2344, %v2385
    %v2432 = vadd.f32 %v2345, %v2424
    %v2433 = vadd.f32 %v2346, %v2426
    %v2434 = vxor.u32 %v2430, 2147483648
    %v2435 = vmul.f32 %v2434, 1.442695
    %v2436 = vpow.pop %v2435
    %v2437 = vadd.f32 %v2436, 1.0
    %v2438 = vrcp.pop %v2437
    %v2439 = vmul.f32 1.0, %v2438
    %v2440 = vxor.u32 %v2431, 2147483648
    %v2441 = vmul.f32 %v2440, 1.442695
    %v2442 = vpow.pop %v2441
    %v2443 = vadd.f32 %v2442, 1.0
    %v2444 = vrcp.pop %v2443
    %v2445 = vmul.f32 1.0, %v2444
    %v2446 = vtanh.pop %v2432
    %v2447 = vxor.u32 %v2433, 2147483648
    %v2448 = vmul.f32 %v2447, 1.442695
    %v2449 = vpow.pop %v2448
    %v2450 = vadd.f32 %v2449, 1.0
    %v2451 = vrcp.pop %v2450
    %v2452 = vmul.f32 1.0, %v2451
    %v2453 = vmul.f32 %v2445, %v2339
    %v2454 = vmul.f32 %v2439, %v2446
    %v2455 = vadd.f32 %v2453, %v2454
    %v2456 = vtanh.pop %v2455
    %v2457 = vmul.f32 %v2452, %v2456
    %v2458 = vadd.f32 %v2342, %v2457
    %v2459 = vld [vmem:[%s899] sm:$0xff]
    %v2460 = vld [vmem:[%s899 + $0x8] sm:$0xff]
    %v2461 = vld [vmem:[%s899 + $0x10] sm:$0xff]
    %v2462 = vld [vmem:[%s899 + $0x18] sm:$0xff]
    %v2463 = vpack.c.bf16 %v2457, %v2457
    %2464 = vmatprep.subr.bf16.mxu0 %v2169
    %2465 = vmatpush1.bf16.msra.mxu0 %v2168
    %2466 = vmatprep.subr.bf16.mxu0 %v2173
    %2467 = vmatpush1.bf16.msra.mxu0 %v2172
    %2468 = vmatprep.subr.bf16.mxu0 %v2177
    %2469 = vmatpush1.bf16.msra.mxu0 %v2176
    %2470 = vmatprep.subr.bf16.mxu0 %v2181
    %2471 = vmatpush1.bf16.msra.mxu0 %v2180
    %2472 = vmatprep.subr.bf16.mxu0 %v2185
    %2473 = vmatpush1.bf16.msra.mxu0 %v2184
    %2474 = vmatprep.subr.bf16.mxu0 %v2189
    %2475 = vmatpush1.bf16.msra.mxu0 %v2188
    %2476 = vmatprep.subr.bf16.mxu0 %v2193
    %2477 = vmatpush1.bf16.msra.mxu0 %v2192
    %2478 = vmatprep.subr.bf16.mxu0 %v2197
    %2479 = vmatpush1.bf16.msra.mxu0 %v2196
    %2480 = vmatprep.subr.bf16.mxu0 0
    %2481 = vmatpush1.bf16.msra.mxu0 0
    %2482 = vmatprep.subr.bf16.mxu0 0
    %2483 = vmatpush1.bf16.msra.mxu0 0
    %2484 = vmatprep.subr.bf16.mxu0 0
    %2485 = vmatpush1.bf16.msra.mxu0 0
    %2486 = vmatprep.subr.bf16.mxu0 0
    %2487 = vmatpush1.bf16.msra.mxu0 0
    %2488 = vmatprep.subr.bf16.mxu0 0
    %2489 = vmatpush1.bf16.msra.mxu0 0
    %2490 = vmatprep.subr.bf16.mxu0 0
    %2491 = vmatpush1.bf16.msra.mxu0 0
    %2492 = vmatprep.subr.bf16.mxu0 0
    %2493 = vmatpush1.bf16.msra.mxu0 0
    %2494 = vmatprep.subr.bf16.mxu0 0
    %2495 = vmatpush1.bf16.msra.mxu0 0
    %2496 = vmatprep.mubr.bf16.mxu0 0
    %2497 = vmatmul.mubr.bf16.gmra.mrb[0].mxu0 %v2463
    %v2498 = vpop.f32.mrb[0].mxu0
    %v2499 = vadd.f32 0.0, %v2498
    %v2500 = vpop.f32.mrb[0].mxu0
    %v2501 = vadd.f32 0.0, %v2500
    %v2502 = vpop.f32.mrb[0].mxu0
    %v2503 = vpop.f32.mrb[0].mxu0
    %2504 = vdwg.mxu0
    %2505 = vmatprep.subr.bf16.mxu0 %v2171
    %2506 = vmatpush1.bf16.msra.mxu0 %v2170
    %2507 = vmatprep.subr.bf16.mxu0 %v2175
    %2508 = vmatpush1.bf16.msra.mxu0 %v2174
    %2509 = vmatprep.subr.bf16.mxu0 %v2179
    %2510 = vmatpush1.bf16.msra.mxu0 %v2178
    %2511 = vmatprep.subr.bf16.mxu0 %v2183
    %2512 = vmatpush1.bf16.msra.mxu0 %v2182
    %2513 = vmatprep.subr.bf16.mxu0 %v2187
    %2514 = vmatpush1.bf16.msra.mxu0 %v2186
    %2515 = vmatprep.subr.bf16.mxu0 %v2191
    %2516 = vmatpush1.bf16.msra.mxu0 %v2190
    %2517 = vmatprep.subr.bf16.mxu0 %v2195
    %2518 = vmatpush1.bf16.msra.mxu0 %v2194
    %2519 = vmatprep.subr.bf16.mxu0 %v2199
    %2520 = vmatpush1.bf16.msra.mxu0 %v2198
    %2521 = vmatprep.subr.bf16.mxu0 0
    %2522 = vmatpush1.bf16.msra.mxu0 0
    %2523 = vmatprep.subr.bf16.mxu0 0
    %2524 = vmatpush1.bf16.msra.mxu0 0
    %2525 = vmatprep.subr.bf16.mxu0 0
    %2526 = vmatpush1.bf16.msra.mxu0 0
    %2527 = vmatprep.subr.bf16.mxu0 0
    %2528 = vmatpush1.bf16.msra.mxu0 0
    %2529 = vmatprep.subr.bf16.mxu0 0
    %2530 = vmatpush1.bf16.msra.mxu0 0
    %2531 = vmatprep.subr.bf16.mxu0 0
    %2532 = vmatpush1.bf16.msra.mxu0 0
    %2533 = vmatprep.subr.bf16.mxu0 0
    %2534 = vmatpush1.bf16.msra.mxu0 0
    %2535 = vmatprep.subr.bf16.mxu0 0
    %2536 = vmatpush1.bf16.msra.mxu0 0
    %2537 = vmatprep.mubr.bf16.mxu0 0
    %2538 = vmatmul.mubr.bf16.gmra.mrb[0].mxu0 %v2463
    %v2539 = vpop.f32.mrb[0].mxu0
    %v2540 = vadd.f32 0.0, %v2539
    %v2541 = vpop.f32.mrb[0].mxu0
    %v2542 = vadd.f32 0.0, %v2541
    %v2543 = vpop.f32.mrb[0].mxu0
    %v2544 = vpop.f32.mrb[0].mxu0
    %2545 = vdwg.mxu0
    %v2546 = vadd.f32 %v2459, %v2499
    %v2547 = vadd.f32 %v2460, %v2501
    %v2548 = vadd.f32 %v2461, %v2540
    %v2549 = vadd.f32 %v2462, %v2542
    %v2550 = vxor.u32 %v2546, 2147483648
    %v2551 = vmul.f32 %v2550, 1.442695
    %v2552 = vpow.pop %v2551
    %v2553 = vadd.f32 %v2552, 1.0
    %v2554 = vrcp.pop %v2553
    %v2555 = vmul.f32 1.0, %v2554
    %v2556 = vxor.u32 %v2547, 2147483648
    %v2557 = vmul.f32 %v2556, 1.442695
    %v2558 = vpow.pop %v2557
    %v2559 = vadd.f32 %v2558, 1.0
    %v2560 = vrcp.pop %v2559
    %v2561 = vmul.f32 1.0, %v2560
    %v2562 = vtanh.pop %v2548
    %v2563 = vxor.u32 %v2549, 2147483648
    %v2564 = vmul.f32 %v2563, 1.442695
    %v2565 = vpow.pop %v2564
    %v2566 = vadd.f32 %v2565, 1.0
    %v2567 = vrcp.pop %v2566
    %v2568 = vmul.f32 1.0, %v2567
    %v2569 = vmul.f32 %v2561, %v2455
    %v2570 = vmul.f32 %v2555, %v2562
    %v2571 = vadd.f32 %v2569, %v2570
    %v2572 = vtanh.pop %v2571
    %v2573 = vmul.f32 %v2568, %v2572
    %v2574 = vadd.f32 %v2458, %v2573
    %v2575 = vld [vmem:[%s1017] sm:$0xff]
    %v2576 = vld [vmem:[%s1017 + $0x8] sm:$0xff]
    %v2577 = vld [vmem:[%s1017 + $0x10] sm:$0xff]
    %v2578 = vld [vmem:[%s1017 + $0x18] sm:$0xff]
    %v2579 = vpack.c.bf16 %v2573, %v2573
    %2580 = vmatprep.subr.bf16.mxu0 %v2169
    %2581 = vmatpush1.bf16.msra.mxu0 %v2168
    %2582 = vmatprep.subr.bf16.mxu0 %v2173
    %2583 = vmatpush1.bf16.msra.mxu0 %v2172
    %2584 = vmatprep.subr.bf16.mxu0 %v2177
    %2585 = vmatpush1.bf16.msra.mxu0 %v2176
    %2586 = vmatprep.subr.bf16.mxu0 %v2181
    %2587 = vmatpush1.bf16.msra.mxu0 %v2180
    %2588 = vmatprep.subr.bf16.mxu0 %v2185
    %2589 = vmatpush1.bf16.msra.mxu0 %v2184
    %2590 = vmatprep.subr.bf16.mxu0 %v2189
    %2591 = vmatpush1.bf16.msra.mxu0 %v2188
    %2592 = vmatprep.subr.bf16.mxu0 %v2193
    %2593 = vmatpush1.bf16.msra.mxu0 %v2192
    %2594 = vmatprep.subr.bf16.mxu0 %v2197
    %2595 = vmatpush1.bf16.msra.mxu0 %v2196
    %2596 = vmatprep.subr.bf16.mxu0 0
    %2597 = vmatpush1.bf16.msra.mxu0 0
    %2598 = vmatprep.subr.bf16.mxu0 0
    %2599 = vmatpush1.bf16.msra.mxu0 0
    %2600 = vmatprep.subr.bf16.mxu0 0
    %2601 = vmatpush1.bf16.msra.mxu0 0
    %2602 = vmatprep.subr.bf16.mxu0 0
    %2603 = vmatpush1.bf16.msra.mxu0 0
    %2604 = vmatprep.subr.bf16.mxu0 0
    %2605 = vmatpush1.bf16.msra.mxu0 0
    %2606 = vmatprep.subr.bf16.mxu0 0
    %2607 = vmatpush1.bf16.msra.mxu0 0
    %2608 = vmatprep.subr.bf16.mxu0 0
    %2609 = vmatpush1.bf16.msra.mxu0 0
    %2610 = vmatprep.subr.bf16.mxu0 0
    %2611 = vmatpush1.bf16.msra.mxu0 0
    %2612 = vmatprep.mubr.bf16.mxu0 0
    %2613 = vmatmul.mubr.bf16.gmra.mrb[0].mxu0 %v2579
    %v2614 = vpop.f32.mrb[0].mxu0
    %v2615 = vadd.f32 0.0, %v2614
    %v2616 = vpop.f32.mrb[0].mxu0
    %v2617 = vadd.f32 0.0, %v2616
    %v2618 = vpop.f32.mrb[0].mxu0
    %v2619 = vpop.f32.mrb[0].mxu0
    %2620 = vdwg.mxu0
    %2621 = vmatprep.subr.bf16.mxu0 %v2171
    %2622 = vmatpush1.bf16.msra.mxu0 %v2170
    %2623 = vmatprep.subr.bf16.mxu0 %v2175
    %2624 = vmatpush1.bf16.msra.mxu0 %v2174
    %2625 = vmatprep.subr.bf16.mxu0 %v2179
    %2626 = vmatpush1.bf16.msra.mxu0 %v2178
    %2627 = vmatprep.subr.bf16.mxu0 %v2183
    %2628 = vmatpush1.bf16.msra.mxu0 %v2182
    %2629 = vmatprep.subr.bf16.mxu0 %v2187
    %2630 = vmatpush1.bf16.msra.mxu0 %v2186
    %2631 = vmatprep.subr.bf16.mxu0 %v2191
    %2632 = vmatpush1.bf16.msra.mxu0 %v2190
    %2633 = vmatprep.subr.bf16.mxu0 %v2195
    %2634 = vmatpush1.bf16.msra.mxu0 %v2194
    %2635 = vmatprep.subr.bf16.mxu0 %v2199
    %2636 = vmatpush1.bf16.msra.mxu0 %v2198
    %2637 = vmatprep.subr.bf16.mxu0 0
    %2638 = vmatpush1.bf16.msra.mxu0 0
    %2639 = vmatprep.subr.bf16.mxu0 0
    %2640 = vmatpush1.bf16.msra.mxu0 0
    %2641 = vmatprep.subr.bf16.mxu0 0
    %2642 = vmatpush1.bf16.msra.mxu0 0
    %2643 = vmatprep.subr.bf16.mxu0 0
    %2644 = vmatpush1.bf16.msra.mxu0 0
    %2645 = vmatprep.subr.bf16.mxu0 0
    %2646 = vmatpush1.bf16.msra.mxu0 0
    %2647 = vmatprep.subr.bf16.mxu0 0
    %2648 = vmatpush1.bf16.msra.mxu0 0
    %2649 = vmatprep.subr.bf16.mxu0 0
    %2650 = vmatpush1.bf16.msra.mxu0 0
    %2651 = vmatprep.subr.bf16.mxu0 0
    %2652 = vmatpush1.bf16.msra.mxu0 0
    %2653 = vmatprep.mubr.bf16.mxu0 0
    %2654 = vmatmul.mubr.bf16.gmra.mrb[0].mxu0 %v2579
    %v2655 = vpop.f32.mrb[0].mxu0
    %v2656 = vadd.f32 0.0, %v2655
    %v2657 = vpop.f32.mrb[0].mxu0
    %v2658 = vadd.f32 0.0, %v2657
    %v2659 = vpop.f32.mrb[0].mxu0
    %v2660 = vpop.f32.mrb[0].mxu0
    %2661 = vdwg.mxu0
    %v2662 = vadd.f32 %v2575, %v2615
    %v2663 = vadd.f32 %v2576, %v2617
    %v2664 = vadd.f32 %v2577, %v2656
    %v2665 = vadd.f32 %v2578, %v2658
    %v2666 = vxor.u32 %v2662, 2147483648
    %v2667 = vmul.f32 %v2666, 1.442695
    %v2668 = vpow.pop %v2667
    %v2669 = vadd.f32 %v2668, 1.0
    %v2670 = vrcp.pop %v2669
    %v2671 = vmul.f32 1.0, %v2670
    %v2672 = vxor.u32 %v2663, 2147483648
    %v2673 = vmul.f32 %v2672, 1.442695
    %v2674 = vpow.pop %v2673
    %v2675 = vadd.f32 %v2674, 1.0
    %v2676 = vrcp.pop %v2675
    %v2677 = vmul.f32 1.0, %v2676
    %v2678 = vtanh.pop %v2664
    %v2679 = vxor.u32 %v2665, 2147483648
    %v2680 = vmul.f32 %v2679, 1.442695
    %v2681 = vpow.pop %v2680
    %v2682 = vadd.f32 %v2681, 1.0
    %v2683 = vrcp.pop %v2682
    %v2684 = vmul.f32 1.0, %v2683
    %v2685 = vmul.f32 %v2677, %v2571
    %v2686 = vmul.f32 %v2671, %v2678
    %v2687 = vadd.f32 %v2685, %v2686
    %v2688 = vtanh.pop %v2687
    %v2689 = vmul.f32 %v2684, %v2688
    %v2690 = vadd.f32 %v2574, %v2689
    %v2691 = vld [vmem:[%s1135] sm:$0xff]
    %v2692 = vld [vmem:[%s1135 + $0x8] sm:$0xff]
    %v2693 = vld [vmem:[%s1135 + $0x10] sm:$0xff]
    %v2694 = vld [vmem:[%s1135 + $0x18] sm:$0xff]
    %v2695 = vpack.c.bf16 %v2689, %v2689
    %2696 = vmatprep.subr.bf16.mxu0 %v2169
    %2697 = vmatpush1.bf16.msra.mxu0 %v2168
    %2698 = vmatprep.subr.bf16.mxu0 %v2173
    %2699 = vmatpush1.bf16.msra.mxu0 %v2172
    %2700 = vmatprep.subr.bf16.mxu0 %v2177
    %2701 = vmatpush1.bf16.msra.mxu0 %v2176
    %2702 = vmatprep.subr.bf16.mxu0 %v2181
    %2703 = vmatpush1.bf16.msra.mxu0 %v2180
    %2704 = vmatprep.subr.bf16.mxu0 %v2185
    %2705 = vmatpush1.bf16.msra.mxu0 %v2184
    %2706 = vmatprep.subr.bf16.mxu0 %v2189
    %2707 = vmatpush1.bf16.msra.mxu0 %v2188
    %2708 = vmatprep.subr.bf16.mxu0 %v2193
    %2709 = vmatpush1.bf16.msra.mxu0 %v2192
    %2710 = vmatprep.subr.bf16.mxu0 %v2197
    %2711 = vmatpush1.bf16.msra.mxu0 %v2196
    %2712 = vmatprep.subr.bf16.mxu0 0
    %2713 = vmatpush1.bf16.msra.mxu0 0
    %2714 = vmatprep.subr.bf16.mxu0 0
    %2715 = vmatpush1.bf16.msra.mxu0 0
    %2716 = vmatprep.subr.bf16.mxu0 0
    %2717 = vmatpush1.bf16.msra.mxu0 0
    %2718 = vmatprep.subr.bf16.mxu0 0
    %2719 = vmatpush1.bf16.msra.mxu0 0
    %2720 = vmatprep.subr.bf16.mxu0 0
    %2721 = vmatpush1.bf16.msra.mxu0 0
    %2722 = vmatprep.subr.bf16.mxu0 0
    %2723 = vmatpush1.bf16.msra.mxu0 0
    %2724 = vmatprep.subr.bf16.mxu0 0
    %2725 = vmatpush1.bf16.msra.mxu0 0
    %2726 = vmatprep.subr.bf16.mxu0 0
    %2727 = vmatpush1.bf16.msra.mxu0 0
    %2728 = vmatprep.mubr.bf16.mxu0 0
    %2729 = vmatmul.mubr.bf16.gmra.mrb[0].mxu0 %v2695
    %v2730 = vpop.f32.mrb[0].mxu0
    %v2731 = vadd.f32 0.0, %v2730
    %v2732 = vpop.f32.mrb[0].mxu0
    %v2733 = vadd.f32 0.0, %v2732
    %v2734 = vpop.f32.mrb[0].mxu0
    %v2735 = vpop.f32.mrb[0].mxu0
    %2736 = vdwg.mxu0
    %2737 = vmatprep.subr.bf16.mxu0 %v2171
    %2738 = vmatpush1.bf16.msra.mxu0 %v2170
    %2739 = vmatprep.subr.bf16.mxu0 %v2175
    %2740 = vmatpush1.bf16.msra.mxu0 %v2174
    %2741 = vmatprep.subr.bf16.mxu0 %v2179
    %2742 = vmatpush1.bf16.msra.mxu0 %v2178
    %2743 = vmatprep.subr.bf16.mxu0 %v2183
    %2744 = vmatpush1.bf16.msra.mxu0 %v2182
    %2745 = vmatprep.subr.bf16.mxu0 %v2187
    %2746 = vmatpush1.bf16.msra.mxu0 %v2186
    %2747 = vmatprep.subr.bf16.mxu0 %v2191
    %2748 = vmatpush1.bf16.msra.mxu0 %v2190
    %2749 = vmatprep.subr.bf16.mxu0 %v2195
    %2750 = vmatpush1.bf16.msra.mxu0 %v2194
    %2751 = vmatprep.subr.bf16.mxu0 %v2199
    %2752 = vmatpush1.bf16.msra.mxu0 %v2198
    %2753 = vmatprep.subr.bf16.mxu0 0
    %2754 = vmatpush1.bf16.msra.mxu0 0
    %2755 = vmatprep.subr.bf16.mxu0 0
    %2756 = vmatpush1.bf16.msra.mxu0 0
    %2757 = vmatprep.subr.bf16.mxu0 0
    %2758 = vmatpush1.bf16.msra.mxu0 0
    %2759 = vmatprep.subr.bf16.mxu0 0
    %2760 = vmatpush1.bf16.msra.mxu0 0
    %2761 = vmatprep.subr.bf16.mxu0 0
    %2762 = vmatpush1.bf16.msra.mxu0 0
    %2763 = vmatprep.subr.bf16.mxu0 0
    %2764 = vmatpush1.bf16.msra.mxu0 0
    %2765 = vmatprep.subr.bf16.mxu0 0
    %2766 = vmatpush1.bf16.msra.mxu0 0
    %2767 = vmatprep.subr.bf16.mxu0 0
    %2768 = vmatpush1.bf16.msra.mxu0 0
    %2769 = vmatprep.mubr.bf16.mxu0 0
    %2770 = vmatmul.mubr.bf16.gmra.mrb[0].mxu0 %v2695
    %v2771 = vpop.f32.mrb[0].mxu0
    %v2772 = vadd.f32 0.0, %v2771
    %v2773 = vpop.f32.mrb[0].mxu0
    %v2774 = vadd.f32 0.0, %v2773
    %v2775 = vpop.f32.mrb[0].mxu0
    %v2776 = vpop.f32.mrb[0].mxu0
    %2777 = vdwg.mxu0
    %v2778 = vadd.f32 %v2691, %v2731
    %v2779 = vadd.f32 %v2692, %v2733
    %v2780 = vadd.f32 %v2693, %v2772
    %v2781 = vadd.f32 %v2694, %v2774
    %v2782 = vxor.u32 %v2778, 2147483648
    %v2783 = vmul.f32 %v2782, 1.442695
    %v2784 = vpow.pop %v2783
    %v2785 = vadd.f32 %v2784, 1.0
    %v2786 = vrcp.pop %v2785
    %v2787 = vmul.f32 1.0, %v2786
    %v2788 = vxor.u32 %v2779, 2147483648
    %v2789 = vmul.f32 %v2788, 1.442695
    %v2790 = vpow.pop %v2789
    %v2791 = vadd.f32 %v2790, 1.0
    %v2792 = vrcp.pop %v2791
    %v2793 = vmul.f32 1.0, %v2792
    %v2794 = vtanh.pop %v2780
    %v2795 = vxor.u32 %v2781, 2147483648
    %v2796 = vmul.f32 %v2795, 1.442695
    %v2797 = vpow.pop %v2796
    %v2798 = vadd.f32 %v2797, 1.0
    %v2799 = vrcp.pop %v2798
    %v2800 = vmul.f32 1.0, %v2799
    %v2801 = vmul.f32 %v2793, %v2687
    %v2802 = vmul.f32 %v2787, %v2794
    %v2803 = vadd.f32 %v2801, %v2802
    %v2804 = vtanh.pop %v2803
    %v2805 = vmul.f32 %v2800, %v2804
    %v2806 = vadd.f32 %v2690, %v2805
    %v2807 = vld [vmem:[%s1253] sm:$0xff]
    %v2808 = vld [vmem:[%s1253 + $0x8] sm:$0xff]
    %v2809 = vld [vmem:[%s1253 + $0x10] sm:$0xff]
    %v2810 = vld [vmem:[%s1253 + $0x18] sm:$0xff]
    %v2811 = vpack.c.bf16 %v2805, %v2805
    %2812 = vmatprep.subr.bf16.mxu0 %v2169
    %2813 = vmatpush1.bf16.msra.mxu0 %v2168
    %2814 = vmatprep.subr.bf16.mxu0 %v2173
    %2815 = vmatpush1.bf16.msra.mxu0 %v2172
    %2816 = vmatprep.subr.bf16.mxu0 %v2177
    %2817 = vmatpush1.bf16.msra.mxu0 %v2176
    %2818 = vmatprep.subr.bf16.mxu0 %v2181
    %2819 = vmatpush1.bf16.msra.mxu0 %v2180
    %2820 = vmatprep.subr.bf16.mxu0 %v2185
    %2821 = vmatpush1.bf16.msra.mxu0 %v2184
    %2822 = vmatprep.subr.bf16.mxu0 %v2189
    %2823 = vmatpush1.bf16.msra.mxu0 %v2188
    %2824 = vmatprep.subr.bf16.mxu0 %v2193
    %2825 = vmatpush1.bf16.msra.mxu0 %v2192
    %2826 = vmatprep.subr.bf16.mxu0 %v2197
    %2827 = vmatpush1.bf16.msra.mxu0 %v2196
    %2828 = vmatprep.subr.bf16.mxu0 0
    %2829 = vmatpush1.bf16.msra.mxu0 0
    %2830 = vmatprep.subr.bf16.mxu0 0
    %2831 = vmatpush1.bf16.msra.mxu0 0
    %2832 = vmatprep.subr.bf16.mxu0 0
    %2833 = vmatpush1.bf16.msra.mxu0 0
    %2834 = vmatprep.subr.bf16.mxu0 0
    %2835 = vmatpush1.bf16.msra.mxu0 0
    %2836 = vmatprep.subr.bf16.mxu0 0
    %2837 = vmatpush1.bf16.msra.mxu0 0
    %2838 = vmatprep.subr.bf16.mxu0 0
    %2839 = vmatpush1.bf16.msra.mxu0 0
    %2840 = vmatprep.subr.bf16.mxu0 0
    %2841 = vmatpush1.bf16.msra.mxu0 0
    %2842 = vmatprep.subr.bf16.mxu0 0
    %2843 = vmatpush1.bf16.msra.mxu0 0
    %2844 = vmatprep.mubr.bf16.mxu0 0
    %2845 = vmatmul.mubr.bf16.gmra.mrb[0].mxu0 %v2811
    %v2846 = vpop.f32.mrb[0].mxu0
    %v2847 = vadd.f32 0.0, %v2846
    %v2848 = vpop.f32.mrb[0].mxu0
    %v2849 = vadd.f32 0.0, %v2848
    %v2850 = vpop.f32.mrb[0].mxu0
    %v2851 = vpop.f32.mrb[0].mxu0
    %2852 = vdwg.mxu0
    %2853 = vmatprep.subr.bf16.mxu0 %v2171
    %2854 = vmatpush1.bf16.msra.mxu0 %v2170
    %2855 = vmatprep.subr.bf16.mxu0 %v2175
    %2856 = vmatpush1.bf16.msra.mxu0 %v2174
    %2857 = vmatprep.subr.bf16.mxu0 %v2179
    %2858 = vmatpush1.bf16.msra.mxu0 %v2178
    %2859 = vmatprep.subr.bf16.mxu0 %v2183
    %2860 = vmatpush1.bf16.msra.mxu0 %v2182
    %2861 = vmatprep.subr.bf16.mxu0 %v2187
    %2862 = vmatpush1.bf16.msra.mxu0 %v2186
    %2863 = vmatprep.subr.bf16.mxu0 %v2191
    %2864 = vmatpush1.bf16.msra.mxu0 %v2190
    %2865 = vmatprep.subr.bf16.mxu0 %v2195
    %2866 = vmatpush1.bf16.msra.mxu0 %v2194
    %2867 = vmatprep.subr.bf16.mxu0 %v2199
    %2868 = vmatpush1.bf16.msra.mxu0 %v2198
    %2869 = vmatprep.subr.bf16.mxu0 0
    %2870 = vmatpush1.bf16.msra.mxu0 0
    %2871 = vmatprep.subr.bf16.mxu0 0
    %2872 = vmatpush1.bf16.msra.mxu0 0
    %2873 = vmatprep.subr.bf16.mxu0 0
    %2874 = vmatpush1.bf16.msra.mxu0 0
    %2875 = vmatprep.subr.bf16.mxu0 0
    %2876 = vmatpush1.bf16.msra.mxu0 0
    %2877 = vmatprep.subr.bf16.mxu0 0
    %2878 = vmatpush1.bf16.msra.mxu0 0
    %2879 = vmatprep.subr.bf16.mxu0 0
    %2880 = vmatpush1.bf16.msra.mxu0 0
    %2881 = vmatprep.subr.bf16.mxu0 0
    %2882 = vmatpush1.bf16.msra.mxu0 0
    %2883 = vmatprep.subr.bf16.mxu0 0
    %2884 = vmatpush1.bf16.msra.mxu0 0
    %2885 = vmatprep.mubr.bf16.mxu0 0
    %2886 = vmatmul.mubr.bf16.gmra.mrb[0].mxu0 %v2811
    %v2887 = vpop.f32.mrb[0].mxu0
    %v2888 = vadd.f32 0.0, %v2887
    %v2889 = vpop.f32.mrb[0].mxu0
    %v2890 = vadd.f32 0.0, %v2889
    %v2891 = vpop.f32.mrb[0].mxu0
    %v2892 = vpop.f32.mrb[0].mxu0
    %2893 = vdwg.mxu0
    %v2894 = vadd.f32 %v2807, %v2847
    %v2895 = vadd.f32 %v2808, %v2849
    %v2896 = vadd.f32 %v2809, %v2888
    %v2897 = vadd.f32 %v2810, %v2890
    %v2898 = vxor.u32 %v2894, 2147483648
    %v2899 = vmul.f32 %v2898, 1.442695
    %v2900 = vpow.pop %v2899
    %v2901 = vadd.f32 %v2900, 1.0
    %v2902 = vrcp.pop %v2901
    %v2903 = vmul.f32 1.0, %v2902
    %v2904 = vxor.u32 %v2895, 2147483648
    %v2905 = vmul.f32 %v2904, 1.442695
    %v2906 = vpow.pop %v2905
    %v2907 = vadd.f32 %v2906, 1.0
    %v2908 = vrcp.pop %v2907
    %v2909 = vmul.f32 1.0, %v2908
    %v2910 = vtanh.pop %v2896
    %v2911 = vxor.u32 %v2897, 2147483648
    %v2912 = vmul.f32 %v2911, 1.442695
    %v2913 = vpow.pop %v2912
    %v2914 = vadd.f32 %v2913, 1.0
    %v2915 = vrcp.pop %v2914
    %v2916 = vmul.f32 1.0, %v2915
    %v2917 = vmul.f32 %v2909, %v2803
    %v2918 = vmul.f32 %v2903, %v2910
    %v2919 = vadd.f32 %v2917, %v2918
    %v2920 = vtanh.pop %v2919
    %v2921 = vmul.f32 %v2916, %v2920
    %v2922 = vadd.f32 %v2806, %v2921
    %v2923 = vld [vmem:[%s1371] sm:$0xff]
    %v2924 = vld [vmem:[%s1371 + $0x8] sm:$0xff]
    %v2925 = vld [vmem:[%s1371 + $0x10] sm:$0xff]
    %v2926 = vld [vmem:[%s1371 + $0x18] sm:$0xff]
    %v2927 = vpack.c.bf16 %v2921, %v2921
    %2928 = vmatprep.subr.bf16.mxu0 %v2169
    %2929 = vmatpush1.bf16.msra.mxu0 %v2168
    %2930 = vmatprep.subr.bf16.mxu0 %v2173
    %2931 = vmatpush1.bf16.msra.mxu0 %v2172
    %2932 = vmatprep.subr.bf16.mxu0 %v2177
    %2933 = vmatpush1.bf16.msra.mxu0 %v2176
    %2934 = vmatprep.subr.bf16.mxu0 %v2181
    %2935 = vmatpush1.bf16.msra.mxu0 %v2180
    %2936 = vmatprep.subr.bf16.mxu0 %v2185
    %2937 = vmatpush1.bf16.msra.mxu0 %v2184
    %2938 = vmatprep.subr.bf16.mxu0 %v2189
    %2939 = vmatpush1.bf16.msra.mxu0 %v2188
    %2940 = vmatprep.subr.bf16.mxu0 %v2193
    %2941 = vmatpush1.bf16.msra.mxu0 %v2192
    %2942 = vmatprep.subr.bf16.mxu0 %v2197
    %2943 = vmatpush1.bf16.msra.mxu0 %v2196
    %2944 = vmatprep.subr.bf16.mxu0 0
    %2945 = vmatpush1.bf16.msra.mxu0 0
    %2946 = vmatprep.subr.bf16.mxu0 0
    %2947 = vmatpush1.bf16.msra.mxu0 0
    %2948 = vmatprep.subr.bf16.mxu0 0
    %2949 = vmatpush1.bf16.msra.mxu0 0
    %2950 = vmatprep.subr.bf16.mxu0 0
    %2951 = vmatpush1.bf16.msra.mxu0 0
    %2952 = vmatprep.subr.bf16.mxu0 0
    %2953 = vmatpush1.bf16.msra.mxu0 0
    %2954 = vmatprep.subr.bf16.mxu0 0
    %2955 = vmatpush1.bf16.msra.mxu0 0
    %2956 = vmatprep.subr.bf16.mxu0 0
    %2957 = vmatpush1.bf16.msra.mxu0 0
    %2958 = vmatprep.subr.bf16.mxu0 0
    %2959 = vmatpush1.bf16.msra.mxu0 0
    %2960 = vmatprep.mubr.bf16.mxu0 0
    %2961 = vmatmul.mubr.bf16.gmra.mrb[0].mxu0 %v2927
    %v2962 = vpop.f32.mrb[0].mxu0
    %v2963 = vadd.f32 0.0, %v2962
    %v2964 = vpop.f32.mrb[0].mxu0
    %v2965 = vadd.f32 0.0, %v2964
    %v2966 = vpop.f32.mrb[0].mxu0
    %v2967 = vpop.f32.mrb[0].mxu0
    %2968 = vdwg.mxu0
    %2969 = vmatprep.subr.bf16.mxu0 %v2171
    %2970 = vmatpush1.bf16.msra.mxu0 %v2170
    %2971 = vmatprep.subr.bf16.mxu0 %v2175
    %2972 = vmatpush1.bf16.msra.mxu0 %v2174
    %2973 = vmatprep.subr.bf16.mxu0 %v2179
    %2974 = vmatpush1.bf16.msra.mxu0 %v2178
    %2975 = vmatprep.subr.bf16.mxu0 %v2183
    %2976 = vmatpush1.bf16.msra.mxu0 %v2182
    %2977 = vmatprep.subr.bf16.mxu0 %v2187
    %2978 = vmatpush1.bf16.msra.mxu0 %v2186
    %2979 = vmatprep.subr.bf16.mxu0 %v2191
    %2980 = vmatpush1.bf16.msra.mxu0 %v2190
    %2981 = vmatprep.subr.bf16.mxu0 %v2195
    %2982 = vmatpush1.bf16.msra.mxu0 %v2194
    %2983 = vmatprep.subr.bf16.mxu0 %v2199
    %2984 = vmatpush1.bf16.msra.mxu0 %v2198
    %2985 = vmatprep.subr.bf16.mxu0 0
    %2986 = vmatpush1.bf16.msra.mxu0 0
    %2987 = vmatprep.subr.bf16.mxu0 0
    %2988 = vmatpush1.bf16.msra.mxu0 0
    %2989 = vmatprep.subr.bf16.mxu0 0
    %2990 = vmatpush1.bf16.msra.mxu0 0
    %2991 = vmatprep.subr.bf16.mxu0 0
    %2992 = vmatpush1.bf16.msra.mxu0 0
    %2993 = vmatprep.subr.bf16.mxu0 0
    %2994 = vmatpush1.bf16.msra.mxu0 0
    %2995 = vmatprep.subr.bf16.mxu0 0
    %2996 = vmatpush1.bf16.msra.mxu0 0
    %2997 = vmatprep.subr.bf16.mxu0 0
    %2998 = vmatpush1.bf16.msra.mxu0 0
    %2999 = vmatprep.subr.bf16.mxu0 0
    %3000 = vmatpush1.bf16.msra.mxu0 0
    %3001 = vmatprep.mubr.bf16.mxu0 0
    %3002 = vmatmul.mubr.bf16.gmra.mrb[0].mxu0 %v2927
    %v3003 = vpop.f32.mrb[0].mxu0
    %v3004 = vadd.f32 0.0, %v3003
    %v3005 = vpop.f32.mrb[0].mxu0
    %v3006 = vadd.f32 0.0, %v3005
    %v3007 = vpop.f32.mrb[0].mxu0
    %v3008 = vpop.f32.mrb[0].mxu0
    %3009 = vdwg.mxu0
    %v3010 = vadd.f32 %v2923, %v2963
    %v3011 = vadd.f32 %v2924, %v2965
    %v3012 = vadd.f32 %v2925, %v3004
    %v3013 = vadd.f32 %v2926, %v3006
    %v3014 = vxor.u32 %v3010, 2147483648
    %v3015 = vmul.f32 %v3014, 1.442695
    %v3016 = vpow.pop %v3015
    %v3017 = vadd.f32 %v3016, 1.0
    %v3018 = vrcp.pop %v3017
    %v3019 = vmul.f32 1.0, %v3018
    %v3020 = vxor.u32 %v3011, 2147483648
    %v3021 = vmul.f32 %v3020, 1.442695
    %v3022 = vpow.pop %v3021
    %v3023 = vadd.f32 %v3022, 1.0
    %v3024 = vrcp.pop %v3023
    %v3025 = vmul.f32 1.0, %v3024
    %v3026 = vtanh.pop %v3012
    %v3027 = vxor.u32 %v3013, 2147483648
    %v3028 = vmul.f32 %v3027, 1.442695
    %v3029 = vpow.pop %v3028
    %v3030 = vadd.f32 %v3029, 1.0
    %v3031 = vrcp.pop %v3030
    %v3032 = vmul.f32 1.0, %v3031
    %v3033 = vmul.f32 %v3025, %v2919
    %v3034 = vmul.f32 %v3019, %v3026
    %v3035 = vadd.f32 %v3033, %v3034
    %v3036 = vtanh.pop %v3035
    %v3037 = vmul.f32 %v3032, %v3036
    %v3038 = vadd.f32 %v2922, %v3037
    %v3039 = vld [vmem:[%s1489] sm:$0xff]
    %v3040 = vld [vmem:[%s1489 + $0x8] sm:$0xff]
    %v3041 = vld [vmem:[%s1489 + $0x10] sm:$0xff]
    %v3042 = vld [vmem:[%s1489 + $0x18] sm:$0xff]
    %v3043 = vpack.c.bf16 %v3037, %v3037
    %3044 = vmatprep.subr.bf16.mxu0 %v2169
    %3045 = vmatpush1.bf16.msra.mxu0 %v2168
    %3046 = vmatprep.subr.bf16.mxu0 %v2173
    %3047 = vmatpush1.bf16.msra.mxu0 %v2172
    %3048 = vmatprep.subr.bf16.mxu0 %v2177
    %3049 = vmatpush1.bf16.msra.mxu0 %v2176
    %3050 = vmatprep.subr.bf16.mxu0 %v2181
    %3051 = vmatpush1.bf16.msra.mxu0 %v2180
    %3052 = vmatprep.subr.bf16.mxu0 %v2185
    %3053 = vmatpush1.bf16.msra.mxu0 %v2184
    %3054 = vmatprep.subr.bf16.mxu0 %v2189
    %3055 = vmatpush1.bf16.msra.mxu0 %v2188
    %3056 = vmatprep.subr.bf16.mxu0 %v2193
    %3057 = vmatpush1.bf16.msra.mxu0 %v2192
    %3058 = vmatprep.subr.bf16.mxu0 %v2197
    %3059 = vmatpush1.bf16.msra.mxu0 %v2196
    %3060 = vmatprep.subr.bf16.mxu0 0
    %3061 = vmatpush1.bf16.msra.mxu0 0
    %3062 = vmatprep.subr.bf16.mxu0 0
    %3063 = vmatpush1.bf16.msra.mxu0 0
    %3064 = vmatprep.subr.bf16.mxu0 0
    %3065 = vmatpush1.bf16.msra.mxu0 0
    %3066 = vmatprep.subr.bf16.mxu0 0
    %3067 = vmatpush1.bf16.msra.mxu0 0
    %3068 = vmatprep.subr.bf16.mxu0 0
    %3069 = vmatpush1.bf16.msra.mxu0 0
    %3070 = vmatprep.subr.bf16.mxu0 0
    %3071 = vmatpush1.bf16.msra.mxu0 0
    %3072 = vmatprep.subr.bf16.mxu0 0
    %3073 = vmatpush1.bf16.msra.mxu0 0
    %3074 = vmatprep.subr.bf16.mxu0 0
    %3075 = vmatpush1.bf16.msra.mxu0 0
    %3076 = vmatprep.mubr.bf16.mxu0 0
    %3077 = vmatmul.mubr.bf16.gmra.mrb[0].mxu0 %v3043
    %v3078 = vpop.f32.mrb[0].mxu0
    %v3079 = vadd.f32 0.0, %v3078
    %v3080 = vpop.f32.mrb[0].mxu0
    %v3081 = vadd.f32 0.0, %v3080
    %v3082 = vpop.f32.mrb[0].mxu0
    %v3083 = vpop.f32.mrb[0].mxu0
    %3084 = vdwg.mxu0
    %3085 = vmatprep.subr.bf16.mxu0 %v2171
    %3086 = vmatpush1.bf16.msra.mxu0 %v2170
    %3087 = vmatprep.subr.bf16.mxu0 %v2175
    %3088 = vmatpush1.bf16.msra.mxu0 %v2174
    %3089 = vmatprep.subr.bf16.mxu0 %v2179
    %3090 = vmatpush1.bf16.msra.mxu0 %v2178
    %3091 = vmatprep.subr.bf16.mxu0 %v2183
    %3092 = vmatpush1.bf16.msra.mxu0 %v2182
    %3093 = vmatprep.subr.bf16.mxu0 %v2187
    %3094 = vmatpush1.bf16.msra.mxu0 %v2186
    %3095 = vmatprep.subr.bf16.mxu0 %v2191
    %3096 = vmatpush1.bf16.msra.mxu0 %v2190
    %3097 = vmatprep.subr.bf16.mxu0 %v2195
    %3098 = vmatpush1.bf16.msra.mxu0 %v2194
    %3099 = vmatprep.subr.bf16.mxu0 %v2199
    %3100 = vmatpush1.bf16.msra.mxu0 %v2198
    %3101 = vmatprep.subr.bf16.mxu0 0
    %3102 = vmatpush1.bf16.msra.mxu0 0
    %3103 = vmatprep.subr.bf16.mxu0 0
    %3104 = vmatpush1.bf16.msra.mxu0 0
    %3105 = vmatprep.subr.bf16.mxu0 0
    %3106 = vmatpush1.bf16.msra.mxu0 0
    %3107 = vmatprep.subr.bf16.mxu0 0
    %3108 = vmatpush1.bf16.msra.mxu0 0
    %3109 = vmatprep.subr.bf16.mxu0 0
    %3110 = vmatpush1.bf16.msra.mxu0 0
    %3111 = vmatprep.subr.bf16.mxu0 0
    %3112 = vmatpush1.bf16.msra.mxu0 0
    %3113 = vmatprep.subr.bf16.mxu0 0
    %3114 = vmatpush1.bf16.msra.mxu0 0
    %3115 = vmatprep.subr.bf16.mxu0 0
    %3116 = vmatpush1.bf16.msra.mxu0 0
    %3117 = vmatprep.mubr.bf16.mxu0 0
    %3118 = vmatmul.mubr.bf16.gmra.mrb[0].mxu0 %v3043
    %v3119 = vpop.f32.mrb[0].mxu0
    %v3120 = vadd.f32 0.0, %v3119
    %v3121 = vpop.f32.mrb[0].mxu0
    %v3122 = vadd.f32 0.0, %v3121
    %v3123 = vpop.f32.mrb[0].mxu0
    %v3124 = vpop.f32.mrb[0].mxu0
    %3125 = vdwg.mxu0
    %v3126 = vadd.f32 %v3039, %v3079
    %v3127 = vadd.f32 %v3040, %v3081
    %v3128 = vadd.f32 %v3041, %v3120
    %v3129 = vadd.f32 %v3042, %v3122
    %v3130 = vxor.u32 %v3126, 2147483648
    %v3131 = vmul.f32 %v3130, 1.442695
    %v3132 = vpow.pop %v3131
    %v3133 = vadd.f32 %v3132, 1.0
    %v3134 = vrcp.pop %v3133
    %v3135 = vmul.f32 1.0, %v3134
    %v3136 = vxor.u32 %v3127, 2147483648
    %v3137 = vmul.f32 %v3136, 1.442695
    %v3138 = vpow.pop %v3137
    %v3139 = vadd.f32 %v3138, 1.0
    %v3140 = vrcp.pop %v3139
    %v3141 = vmul.f32 1.0, %v3140
    %v3142 = vtanh.pop %v3128
    %v3143 = vxor.u32 %v3129, 2147483648
    %v3144 = vmul.f32 %v3143, 1.442695
    %v3145 = vpow.pop %v3144
    %v3146 = vadd.f32 %v3145, 1.0
    %v3147 = vrcp.pop %v3146
    %v3148 = vmul.f32 1.0, %v3147
    %v3149 = vmul.f32 %v3141, %v3035
    %v3150 = vmul.f32 %v3135, %v3142
    %v3151 = vadd.f32 %v3149, %v3150
    %v3152 = vtanh.pop %v3151
    %v3153 = vmul.f32 %v3148, %v3152
    %v3154 = vadd.f32 %v3038, %v3153
    %s3155 = scalar_lea.vmem %s5, 8
    %3156 = vst [vmem:[%s3155] sm:$0xff] %v3153
    %s3157 = scalar_lea.vmem %s6, 8
    %3158 = vst [vmem:[%s3157] sm:$0xff] %v3151
    %v3159 = vmul.f32 %v3154, 0.125
    %3160 = vst [vmem:[%s4] sm:$0xff] %v3159
    // Predicated region
    $region26: #{lstm_model_forward.1} parent=1 // pred_check
      _
    $region27: #{lstm_model_forward.1} parent=1 // pred_check_branch
      %3162 = sbr.rel (0) target = $region29
    $region28: #{lstm_model_forward.1} parent=1 // pred_region
      _
    $region29: #{lstm_model_forward.1} parent=1 // pred_fallthru
      _
    // Predicated region
    $region30: #{lstm_model_forward.1} parent=1 // pred_check
      _
    $region31: #{lstm_model_forward.1} parent=1 // pred_check_branch
      %3164 = sbr.rel (0) target = $region33
    $region32: #{lstm_model_forward.1} parent=1 // pred_region
      _
    $region33: #{lstm_model_forward.1} parent=1 // pred_fallthru
      _
    // Predicated region
    $region34: #{lstm_model_forward.1} parent=1 // pred_check
      _
    $region35: #{lstm_model_forward.1} parent=1 // pred_check_branch
      %3166 = sbr.rel (0) target = $region37
    $region36: #{lstm_model_forward.1} parent=1 // pred_region
      _
    $region37: #{lstm_model_forward.1} parent=1 // pred_fallthru
      _
    // Predicated region
    $region38: #{lstm_model_forward.1} parent=1 // pred_check
      _
    $region39: #{lstm_model_forward.1} parent=1 // pred_check_branch
      %3168 = sbr.rel (0) target = $region41
    $region40: #{lstm_model_forward.1} parent=1 // pred_region
      _
    $region41: #{lstm_model_forward.1} parent=1 // pred_fallthru
      _
    // Predicated region
    $region42: #{lstm_model_forward.1} parent=1 // pred_check
      _
    $region43: #{lstm_model_forward.1} parent=1 // pred_check_branch
      %3170 = sbr.rel (0) target = $region45
    $region44: #{lstm_model_forward.1} parent=1 // pred_region
      _
    $region45: #{lstm_model_forward.1} parent=1 // pred_fallthru
      _
    // Predicated region
    $region46: #{lstm_model_forward.1} parent=1 // pred_check
      _
    $region47: #{lstm_model_forward.1} parent=1 // pred_check_branch
      %3172 = sbr.rel (0) target = $region49
    $region48: #{lstm_model_forward.1} parent=1 // pred_region
      _
    $region49: #{lstm_model_forward.1} parent=1 // pred_fallthru
      _
    %3173 = vsyncpa [#allocation5], 1
    %3174 = vsyncpa [#allocation7], 1

</llo_original>
